<compile_context>
chip_gen: v7x
topology: tpu7x:2x2x1
jax: 0.10.0
libtpu: 0.0.40
codegen_flags: <defaults>
</compile_context>

<pallas_src>
import jax
import jax.numpy as jnp
from jax.experimental import pallas as pl
from jax.experimental.pallas import tpu as pltpu

_VMEM_LIMIT = 40 * 1024 * 1024   # headroom inside v7x's 64 MiB physical VMEM


def _cparams(dim_sem=None):
    if dim_sem is None:
        return pltpu.CompilerParams(vmem_limit_bytes=_VMEM_LIMIT)
    return pltpu.CompilerParams(dimension_semantics=dim_sem,
                                vmem_limit_bytes=_VMEM_LIMIT)


def _full_spec(shape):
    return pl.BlockSpec(shape, lambda: (0,) * len(shape))


def _batch_mask_bias(B, N):
    """(B*N, B*N) additive bias: 0 within a batch element, -1e30 across."""
    ids = jnp.repeat(jnp.arange(B), N)
    same = ids[:, None] == ids[None, :]
    return jnp.where(same, 0.0, -1e30).astype(jnp.float32)


def _quantize_int8(w):
    """Symmetric per-output-column int8 quantization: w ~= q * scale."""
    amax = jnp.max(jnp.abs(w), axis=0, keepdims=True)
    scale = jnp.maximum(amax, 1e-8) / 127.0
    q = jnp.clip(jnp.round(w / scale), -127, 127).astype(jnp.int8)
    return q, scale.astype(jnp.float32)


# ---------------------------------------------------------------------------
# Backbone stand-in: conv-as-matmul + ReLU + global spatial mean.
# Grid (image-group [parallel], spatial tile [arbitrary, accumulating]).
# ---------------------------------------------------------------------------
def _make_backbone_kernel(Ng, TP, num_tiles, P_total):
    def kernel(p_ref, w_ref, b_ref, out_ref, acc_ref):
        j = pl.program_id(1)

        @pl.when(j == 0)
        def _():
            acc_ref[...] = jnp.zeros_like(acc_ref)

        patches = p_ref[0]                                   # (Ng, TP, K) bf16
        K = patches.shape[-1]
        feat = jnp.dot(patches.reshape(Ng * TP, K), w_ref[...],
                       preferred_element_type=jnp.float32) + b_ref[...]
        feat = jnp.maximum(feat, 0.0)
        acc_ref[...] += jnp.sum(feat.reshape(Ng, TP, -1), axis=1)

        @pl.when(j == num_tiles - 1)
        def _():
            # TODO(synk): mean includes SAME-padded positions (trunk is a stand-in).
            out_ref[0] = acc_ref[...] * (1.0 / P_total)

    return kernel


def _spatial_tile(P):
    for c in (128, 112, 96, 64, 56, 48, 32, 16, 8):
        if P % c == 0:
            return c
    return P


def backbone_embed(patches, w, b):
    BN, P, K = patches.shape
    C = w.shape[1]
    G = 2 if BN % 2 == 0 else 1            # image-group axis (v7x megacore)
    Ng = BN // G
    TP = _spatial_tile(P)
    nt = P // TP
    patches_g = patches.reshape(G, Ng, P, K)
    cost = pl.CostEstimate(
        flops=int(2 * BN * P * K * C), transcendentals=0,
        bytes_accessed=int(patches.size * 2 + w.size * 2 + BN * C * 4))
    out = pl.pallas_call(
        _make_backbone_kernel(Ng, TP, nt, P),
        out_shape=jax.ShapeDtypeStruct((G, Ng, C), jnp.float32),
        grid_spec=pltpu.PrefetchScalarGridSpec(
            num_scalar_prefetch=0, grid=(G, nt),
            in_specs=[pl.BlockSpec((1, Ng, TP, K), lambda i, j: (i, 0, j, 0)),
                      pl.BlockSpec((K, C), lambda i, j: (0, 0)),
                      pl.BlockSpec((1, C), lambda i, j: (0, 0))],
            out_specs=pl.BlockSpec((1, Ng, C), lambda i, j: (i, 0, 0)),
            scratch_shapes=[pltpu.VMEM((Ng, C), jnp.float32)]),
        compiler_params=_cparams(("parallel", "arbitrary")),
        cost_estimate=cost,
    )(patches_g, w, b)
    return out.reshape(BN, C)


# ---------------------------------------------------------------------------
# Small self-attention (512 / 1024 features): single gridless kernel.
# Per-sample softmax expressed via a block-diagonal additive mask.
# ---------------------------------------------------------------------------
def _make_small_attn_kernel(D):
    def kernel(x_ref, mask_ref, wqk_ref, sqk_ref, bqk_ref, wv_ref, sv_ref,
               bv_ref, out_ref):
        x = x_ref[...]                                       # (BN, F) f32
        xb = x.astype(jnp.bfloat16)
        qk = (jnp.dot(xb, wqk_ref[...].astype(jnp.bfloat16),
                      preferred_element_type=jnp.float32)
              * sqk_ref[...] + bqk_ref[...])
        q = qk[:, :D]
        k = qk[:, D:]
        # NOTE: no 1/sqrt(d_k) scaling -- the reference modules do not scale.
        scores = jax.lax.dot_general(q, k, (((1,), (1,)), ((), ())),
                                     preferred_element_type=jnp.float32)
        scores = scores + mask_ref[...]
        m = jnp.max(scores, axis=-1, keepdims=True)
        e = jnp.exp(scores - m)
        attn = e * pl.reciprocal(jnp.sum(e, axis=-1, keepdims=True), approx=True)
        v = (jnp.dot(xb, wv_ref[...].astype(jnp.bfloat16),
                     preferred_element_type=jnp.float32)
             * sv_ref[...] + bv_ref[...])
        out_ref[...] = jnp.dot(attn, v, preferred_element_type=jnp.float32) + x
    return kernel


def attention_small(x, params):
    wqk, sqk, bqk, wv, sv, bv = params
    B, N, F = x.shape
    BN = B * N
    D = F // 8
    x2d = x.reshape(BN, F)
    mask = _batch_mask_bias(B, N)
    cost = pl.CostEstimate(
        flops=int(2 * (BN * F * 2 * D + BN * BN * D + BN * F * F + BN * BN * F)),
        transcendentals=int(BN * BN),
        bytes_accessed=int(wqk.size + wv.size + 2 * x2d.size * 4))
    out = pl.pallas_call(
        _make_small_attn_kernel(D),
        out_shape=jax.ShapeDtypeStruct((BN, F), jnp.float32),
        in_specs=[_full_spec((BN, F)), _full_spec((BN, BN)),
                  _full_spec((F, 2 * D)), _full_spec((1, 2 * D)),
                  _full_spec((1, 2 * D)),
                  _full_spec((F, F)), _full_spec((1, F)), _full_spec((1, F))],
        out_specs=_full_spec((BN, F)),
        compiler_params=_cparams(),
        cost_estimate=cost,
    )(x2d, mask, wqk, sqk, bqk, wv, sv, bv)
    return out.reshape(B, N, F)


# ---------------------------------------------------------------------------
# Fused 2048-dim attention chain: sa2048 -> cross(x, x) -> global.
# Grid (layer, feature-tile); activation stays resident in VMEM scratch,
# value weights are streamed per (layer, tile); global attention weights are
# the returned ones.
# ---------------------------------------------------------------------------
def _make_chain_kernel(D, L, TN):
    def kernel(x_ref, mask_ref, wqk_ref, sqk_ref, bqk_ref, wv_ref, sv_ref,
               bv_ref, out_ref, attn_ref, act_f, act_b, nxt_f, attn_scr):
        l = pl.program_id(0)
        j = pl.program_id(1)

        @pl.when(j == 0)
        def _():
            @pl.when(l == 0)
            def _():
                xf = x_ref[...]
                act_f[...] = xf
                act_b[...] = xf.astype(jnp.bfloat16)

            @pl.when(l > 0)
            def _():
                nf = nxt_f[...]
                act_f[...] = nf
                act_b[...] = nf.astype(jnp.bfloat16)

            xb = act_b[...]
            qk = (jnp.dot(xb, wqk_ref[0].astype(jnp.bfloat16),
                          preferred_element_type=jnp.float32)
                  * sqk_ref[0] + bqk_ref[0])
            q = qk[:, :D]
            k = qk[:, D:]
            # NOTE: no 1/sqrt(d_k) scaling -- the reference modules do not scale.
            scores = jax.lax.dot_general(q, k, (((1,), (1,)), ((), ())),
                                         preferred_element_type=jnp.float32)
            # per-sample mask for sa2048 / cross; no mask for the global layer
            gate = jnp.where(l == L - 1, 0.0, 1.0)
            scores = scores + gate * mask_ref[...]
            m = jnp.max(scores, axis=-1, keepdims=True)
            e = jnp.exp(scores - m)
            attn_scr[...] = e * pl.reciprocal(
                jnp.sum(e, axis=-1, keepdims=True), approx=True)

            @pl.when(l == L - 1)
            def _():
                attn_ref[...] = attn_scr[...]     # stored once (global layer)

        v = (jnp.dot(act_b[...], wv_ref[0].astype(jnp.bfloat16),
                     preferred_element_type=jnp.float32)
             * sv_ref[0] + bv_ref[0])                           # (BN, TN)
        attended = jnp.dot(attn_scr[...], v,
                           preferred_element_type=jnp.float32)
        start = pl.multiple_of(j * TN, TN)
        new_tile = attended + act_f[:, pl.ds(start, TN)]        # residual
        out_ref[...] = new_tile
        nxt_f[:, pl.ds(start, TN)] = new_tile                   # next layer input

    return kernel


def attention_chain_2048(x, chain_params):
    wqk, sqk, bqk, wv, sv, bv = chain_params        # stacked over L layers
    B, N, F = x.shape
    BN = B * N
    L = wqk.shape[0]
    D = F // 8
    TN = min(F, 1024)
    assert F % TN == 0 and TN % 128 == 0
    nt = F // TN

    x2d = x.reshape(BN, F)
    mask = _batch_mask_bias(B, N)
    cost = pl.CostEstimate(
        flops=int(2 * L * (BN * F * 2 * D + BN * BN * D + BN * F * F + BN * BN * F)),
        transcendentals=int(L * BN * BN),
        bytes_accessed=int(wqk.size + wv.size + 2 * x2d.size * 4 + BN * BN * 4))

    const = lambda l, j: (0, 0)
    per_layer = lambda l, j: (l, 0, 0)
    per_tile = lambda l, j: (l, 0, j)

    out, attn = pl.pallas_call(
        _make_chain_kernel(D, L, TN),
        out_shape=(jax.ShapeDtypeStruct((BN, F), jnp.float32),
                   jax.ShapeDtypeStruct((BN, BN), jnp.float32)),
        grid_spec=pltpu.PrefetchScalarGridSpec(
            num_scalar_prefetch=0, grid=(L, nt),
            in_specs=[pl.BlockSpec((BN, F), const),
                      pl.BlockSpec((BN, BN), const),
                      pl.BlockSpec((1, F, 2 * D), per_layer),
                      pl.BlockSpec((1, 1, 2 * D), per_layer),
                      pl.BlockSpec((1, 1, 2 * D), per_layer),
                      pl.BlockSpec((1, F, TN), per_tile),
                      pl.BlockSpec((1, 1, TN), per_tile),
                      pl.BlockSpec((1, 1, TN), per_tile)],
            out_specs=(pl.BlockSpec((BN, TN), lambda l, j: (0, j)),
                       pl.BlockSpec((BN, BN), const)),
            scratch_shapes=[pltpu.VMEM((BN, F), jnp.float32),     # act (f32)
                            pltpu.VMEM((BN, F), jnp.bfloat16),    # act (bf16)
                            pltpu.VMEM((BN, F), jnp.float32),     # next act
                            pltpu.VMEM((BN, BN), jnp.float32)]),  # attn weights
        compiler_params=_cparams(("arbitrary", "arbitrary")),
        cost_estimate=cost,
    )(x2d, mask, wqk, sqk, bqk, wv, sv, bv)
    return out.reshape(B, N, F), attn


# ---------------------------------------------------------------------------
# fc head: Linear(2048,1024) -> ReLU -> BatchNorm1d -> [Dropout] -> Linear(1024,128) -> Tanh
# Single gridless kernel; weights int8 + per-column scales.
# ---------------------------------------------------------------------------
def _fc_kernel(x_ref, w1_ref, s1_ref, b1_ref, g_ref, be_ref, mu_ref, var_ref,
               w2_ref, s2_ref, b2_ref, out_ref):
    xb = x_ref[...].astype(jnp.bfloat16)
    h = (jnp.dot(xb, w1_ref[...].astype(jnp.bfloat16),
                 preferred_element_type=jnp.float32)
         * s1_ref[...] + b1_ref[...])
    h = jnp.maximum(h, 0.0)
    inv = jax.lax.rsqrt(var_ref[...] + 1e-5)                 # BatchNorm1d (eval)
    h = (h - mu_ref[...]) * (inv * g_ref[...]) + be_ref[...]
    # TODO(synk): Dropout(0.5) is identity in eval mode; training-mode RNG drop not implemented.
    y = (jnp.dot(h.astype(jnp.bfloat16), w2_ref[...].astype(jnp.bfloat16),
                 preferred_element_type=jnp.float32)
         * s2_ref[...] + b2_ref[...])
    out_ref[...] = jnp.tanh(y)


def fc_head(x, fc_params):
    w1, s1, b1, gamma, beta, mean, var, w2, s2, b2 = fc_params
    M, F = x.shape
    H = w1.shape[1]
    O = w2.shape[1]
    cost = pl.CostEstimate(
        flops=int(2 * (M * F * H + M * H * O)),
        transcendentals=int(M * (H + O)),
        bytes_accessed=int(w1.size + w2.size + x.size * 4 + M * O * 4))
    return pl.pallas_call(
        _fc_kernel,
        out_shape=jax.ShapeDtypeStruct((M, O), jnp.float32),
        in_specs=[_full_spec((M, F)),
                  _full_spec((F, H)), _full_spec((1, H)), _full_spec((1, H)),
                  _full_spec((1, H)), _full_spec((1, H)), _full_spec((1, H)),
                  _full_spec((1, H)),
                  _full_spec((H, O)), _full_spec((1, O)), _full_spec((1, O))],
        out_specs=_full_spec((M, O)),
        compiler_params=_cparams(),
        cost_estimate=cost,
    )(x, w1, s1, b1, gamma, beta, mean, var, w2, s2, b2)


# ---------------------------------------------------------------------------
# Final classifier: Linear(128*7, 13)  (tiny -> gridless, f32)
# ---------------------------------------------------------------------------
def _linear_kernel(x_ref, w_ref, b_ref, out_ref):
    out_ref[...] = jnp.dot(x_ref[...], w_ref[...],
                           preferred_element_type=jnp.float32) + b_ref[...]


def linear(x, w, b):
    M, F = x.shape
    O = w.shape[1]
    return pl.pallas_call(
        _linear_kernel,
        out_shape=jax.ShapeDtypeStruct((M, O), jnp.float32),
        in_specs=[_full_spec((M, F)), _full_spec((F, O)), _full_spec((1, O))],
        out_specs=_full_spec((M, O)),
        compiler_params=_cparams(),
    )(x, w, b)


# ---------------------------------------------------------------------------
# Parameter construction (deterministic, PyTorch-style uniform init)
# ---------------------------------------------------------------------------
def _linear_init(key, fan_in, fan_out):
    kw, kb = jax.random.split(key)
    bound = 1.0 / (fan_in ** 0.5)
    w = jax.random.uniform(kw, (fan_in, fan_out), jnp.float32, -bound, bound)
    b = jax.random.uniform(kb, (1, fan_out), jnp.float32, -bound, bound)
    return w, b


def _attn_qparams(key, f):
    k1, k2, k3 = jax.random.split(key, 3)
    wq, bq = _linear_init(k1, f, f // 8)
    wk, bk = _linear_init(k2, f, f // 8)
    wv, bv = _linear_init(k3, f, f)
    wqk = jnp.concatenate([wq, wk], axis=1)          # fused QK
    bqk = jnp.concatenate([bq, bk], axis=1)
    wqk_q, sqk = _quantize_int8(wqk)
    wv_q, sv = _quantize_int8(wv)
    return (wqk_q, sqk, bqk, wv_q, sv, bv)


def _stack_layers(layers):
    return tuple(jnp.stack([lp[i] for lp in layers], axis=0) for i in range(6))


def init_params(key):
    keys = jax.random.split(key, 9)
    params = {}
    w, b = _linear_init(keys[0], 3 * 3 * 3, 2048)
    params["stem_w"] = jnp.pad(w, ((0, 5), (0, 0))).astype(jnp.bfloat16)  # K 27->32
    params["stem_b"] = b
    params["sa512"] = _attn_qparams(keys[1], 512)
    params["sa1024"] = _attn_qparams(keys[2], 1024)
    chain = [_attn_qparams(keys[3], 2048),    # sa2048
             _attn_qparams(keys[4], 2048),    # cross-attention (x, x)
             _attn_qparams(keys[5], 2048)]    # global attention
    params["chain2048"] = _stack_layers(chain)
    w1, b1 = _linear_init(keys[6], 2048, 1024)
    w2, b2 = _linear_init(keys[7], 1024, 128)
    w1q, s1 = _quantize_int8(w1)
    w2q, s2 = _quantize_int8(w2)
    params["fc"] = (w1q, s1, b1,
                    jnp.ones((1, 1024), jnp.float32),   # gamma
                    jnp.zeros((1, 1024), jnp.float32),  # beta
                    jnp.zeros((1, 1024), jnp.float32),  # running mean
                    jnp.ones((1, 1024), jnp.float32),   # running var
                    w2q, s2, b2)
    params["cls_w"], params["cls_b"] = _linear_init(keys[8], 128 * 7, 13)
    return params


# ---------------------------------------------------------------------------
# Full forward pass (mirrors SiameseNetwork.forward)
# ---------------------------------------------------------------------------
def siamese_forward(params, inputs):
    B = inputs[0].shape[0]
    imgs = jnp.stack(inputs, axis=1)                       # (B, 7, 3, H, W)
    num_images = imgs.shape[1]
    x = imgs.reshape((B * num_images,) + imgs.shape[2:])   # (B*7, 3, H, W)

    # im2col (glue) -> Pallas tiled conv-as-matmul + ReLU + spatial mean
    patches = jax.lax.conv_general_dilated_patches(
        x, filter_shape=(3, 3), window_strides=(2, 2), padding="SAME")
    BN_img, K, Hp, Wp = patches.shape
    P = Hp * Wp
    patches = patches.reshape(BN_img, K, P).transpose(0, 2, 1)    # (B*7, P, K)
    Kp = params["stem_w"].shape[0]
    patches = jnp.pad(patches, ((0, 0), (0, 0), (0, Kp - K)))     # pad K -> 32
    patches = patches.astype(jnp.bfloat16)
    emb = backbone_embed(patches, params["stem_w"], params["stem_b"])
    emb = emb.reshape(B, num_images, 2048)                 # torch.stack(..., dim=1)

    # self-attention on the first 512 features, concat the rest
    a2 = attention_small(emb[:, :, :512], params["sa512"])
    a2 = jnp.concatenate([a2, emb[:, :, 512:]], axis=2)
    # self-attention on the first 1024 features, concat the rest
    a3 = attention_small(a2[:, :, :1024], params["sa1024"])
    a3 = jnp.concatenate([a3, a2[:, :, 1024:]], axis=2)
    # fused: sa2048 -> cross(x, x) -> global (its attention weights returned)
    ga, attn_w = attention_chain_2048(a3, params["chain2048"])

    refined = fc_head(ga.reshape(B * num_images, 2048), params["fc"])   # (B*7, 128)
    refined = refined.reshape(B, num_images * 128)                      # (B, 896)
    logits = linear(refined, params["cls_w"], params["cls_b"])          # (B, 13)
    return logits, attn_w


if __name__ == "__main__":
    key = jax.random.PRNGKey(0)
    pkey, dkey = jax.random.split(key)
    params = init_params(pkey)

    B, C, H, W = 2, 3, 16, 16
    num_images = 7                      # architecture requires 7 inputs (128*7 classifier)
    dkeys = jax.random.split(dkey, num_images)
    inputs = [jax.random.normal(k, (B, C, H, W), jnp.float32) for k in dkeys]

    logits, attn_weights = siamese_forward(params, inputs)
    jax.block_until_ready((logits, attn_weights))

    assert logits.shape == (B, 13)
    assert attn_weights.shape == (B * num_images, B * num_images)
    assert bool(jnp.all(jnp.isfinite(logits)))
    assert bool(jnp.all(jnp.isfinite(attn_weights)))
    print("KERNEL_OK")
</pallas_src>

<mosaic_0001>
module attributes {stable_mosaic.version = 11 : i64} {
  func.func @kernel(%arg0: i32, %arg1: i32, %arg2: memref<1x7x64x32xbf16, #tpu.memory_space<vmem>>, %arg3: memref<32x2048xbf16, #tpu.memory_space<vmem>>, %arg4: memref<1x2048xf32, #tpu.memory_space<vmem>>, %arg5: memref<1x7x2048xf32, #tpu.memory_space<vmem>>, %arg6: memref<7x2048xf32, #tpu.memory_space<vmem>>) attributes {dimension_semantics = [#tpu.dimension_semantics<parallel>, #tpu.dimension_semantics<arbitrary>], iteration_bounds = array<i64: 2, 1>, scalar_prefetch = 0 : i64, scratch_operands = 1 : i64, tpu.core_type = #tpu.core_type<tc>, window_params = [{transform_indices = @transform_0, window_bounds = array<i64: 1, 7, 64, 32>}, {pipeline_mode = #tpu.pipeline_mode<synchronous>, transform_indices = @transform_1, window_bounds = array<i64: 32, 2048>}, {pipeline_mode = #tpu.pipeline_mode<synchronous>, transform_indices = @transform_2, window_bounds = array<i64: 1, 2048>}, {transform_indices = @transform_3, window_bounds = array<i64: 1, 7, 2048>}]} {
    %c0_i32 = arith.constant 0 : i32
    %0 = arith.cmpi eq, %arg1, %c0_i32 : i32
    %1 = arith.extui %0 : i1 to i32
    %c0_i32_0 = arith.constant 0 : i32
    %2 = arith.cmpi ne, %1, %c0_i32_0 : i32
    scf.if %2 {
      %cst_16 = arith.constant 0.000000e+00 : f32
      %21 = vector.broadcast %cst_16 : f32 to vector<7x2048xf32>
      %c0_17 = arith.constant 0 : index
      %c0_18 = arith.constant 0 : index
      %22 = vector.load %arg6[%c0_17, %c0_18] : memref<7x2048xf32, #tpu.memory_space<vmem>>, vector<7x2048xf32>
      tpu.vector_store %arg6[%c0_17, %c0_18], %21 {strides = array<i32>} : memref<7x2048xf32, #tpu.memory_space<vmem>>, vector<7x2048xf32>,
    } else {
    }
    %c0 = arith.constant 0 : index
    %c0_1 = arith.constant 0 : index
    %c0_2 = arith.constant 0 : index
    %c0_3 = arith.constant 0 : index
    %3 = vector.load %arg2[%c0, %c0_1, %c0_2, %c0_3] : memref<1x7x64x32xbf16, #tpu.memory_space<vmem>>, vector<1x7x64x32xbf16>
    %4 = vector.shape_cast %3 : vector<1x7x64x32xbf16> to vector<7x64x32xbf16>
    %5 = vector.shape_cast %4 : vector<7x64x32xbf16> to vector<448x32xbf16>
    %c0_4 = arith.constant 0 : index
    %c0_5 = arith.constant 0 : index
    %6 = vector.load %arg3[%c0_4, %c0_5] : memref<32x2048xbf16, #tpu.memory_space<vmem>>, vector<32x2048xbf16>
    %cst = arith.constant dense<0.000000e+00> : vector<448x2048xf32>
    %7 = tpu.matmul %5, %6, %cst {dimension_numbers = #tpu.dot_dimension_numbers<[1], [0], [0], [1], [0, 0, 1, 1], [], []>} : vector<448x32xbf16>, vector<32x2048xbf16>, vector<448x2048xf32> -> vector<448x2048xf32>
    %c0_6 = arith.constant 0 : index
    %c0_7 = arith.constant 0 : index
    %8 = vector.load %arg4[%c0_6, %c0_7] : memref<1x2048xf32, #tpu.memory_space<vmem>>, vector<1x2048xf32>
    %9 = vector.broadcast %8 : vector<1x2048xf32> to vector<448x2048xf32>
    %10 = arith.addf %7, %9 : vector<448x2048xf32>
    %cst_8 = arith.constant 0.000000e+00 : f32
    %11 = vector.broadcast %cst_8 : f32 to vector<448x2048xf32>
    %12 = arith.maximumf %10, %11 : vector<448x2048xf32>
    %c0_9 = arith.constant 0 : index
    %c0_10 = arith.constant 0 : index
    %13 = vector.load %arg6[%c0_9, %c0_10] : memref<7x2048xf32, #tpu.memory_space<vmem>>, vector<7x2048xf32>
    %14 = vector.shape_cast %12 : vector<448x2048xf32> to vector<7x64x2048xf32>
    %cst_11 = arith.constant dense<0.000000e+00> : vector<7x2048xf32>
    %15 = vector.multi_reduction <add>, %14, %cst_11 [1] : vector<7x64x2048xf32> to vector<7x2048xf32>
    %16 = arith.addf %13, %15 : vector<7x2048xf32>
    %c0_12 = arith.constant 0 : index
    %c0_13 = arith.constant 0 : index
    %17 = vector.load %arg6[%c0_12, %c0_13] : memref<7x2048xf32, #tpu.memory_space<vmem>>, vector<7x2048xf32>
    tpu.vector_store %arg6[%c0_12, %c0_13], %16 {strides = array<i32>} : memref<7x2048xf32, #tpu.memory_space<vmem>>, vector<7x2048xf32>,
    %c0_i32_14 = arith.constant 0 : i32
    %18 = arith.cmpi eq, %arg1, %c0_i32_14 : i32
    %19 = arith.extui %18 : i1 to i32
    %c0_i32_15 = arith.constant 0 : i32
    %20 = arith.cmpi ne, %19, %c0_i32_15 : i32
    scf.if %20 {
      %c0_16 = arith.constant 0 : index
      %c0_17 = arith.constant 0 : index
      %21 = vector.load %arg6[%c0_16, %c0_17] : memref<7x2048xf32, #tpu.memory_space<vmem>>, vector<7x2048xf32>
      %cst_18 = arith.constant 1.562500e-02 : f32
      %22 = vector.broadcast %cst_18 : f32 to vector<7x2048xf32>
      %23 = arith.mulf %21, %22 : vector<7x2048xf32>
      %c0_19 = arith.constant 0 : index
      %c0_20 = arith.constant 0 : index
      %c0_21 = arith.constant 0 : index
      %24 = vector.load %arg5[%c0_19, %c0_20, %c0_21] : memref<1x7x2048xf32, #tpu.memory_space<vmem>>, vector<1x7x2048xf32>
      %25 = vector.shape_cast %24 : vector<1x7x2048xf32> to vector<7x2048xf32>
      %26 = vector.shape_cast %23 : vector<7x2048xf32> to vector<1x7x2048xf32>
      tpu.vector_store %arg5[%c0_19, %c0_20, %c0_21], %26 {strides = array<i32>} : memref<1x7x2048xf32, #tpu.memory_space<vmem>>, vector<1x7x2048xf32>,
    } else {
    }
    return
  }
  func.func @transform_0(%arg0: i32, %arg1: i32) -> (i32, i32, i32, i32) {
    %c0_i32 = arith.constant 0 : i32
    %c0_i32_0 = arith.constant 0 : i32
    %c0_i32_1 = arith.constant 0 : i32
    return %arg0, %c0_i32, %arg1, %c0_i32_0 : i32, i32, i32, i32
  }
  func.func @transform_1(%arg0: i32, %arg1: i32) -> (i32, i32) {
    %c0_i32 = arith.constant 0 : i32
    %c0_i32_0 = arith.constant 0 : i32
    %c0_i32_1 = arith.constant 0 : i32
    return %c0_i32, %c0_i32_0 : i32, i32
  }
  func.func @transform_2(%arg0: i32, %arg1: i32) -> (i32, i32) {
    %c0_i32 = arith.constant 0 : i32
    %c0_i32_0 = arith.constant 0 : i32
    %c0_i32_1 = arith.constant 0 : i32
    return %c0_i32, %c0_i32_0 : i32, i32
  }
  func.func @transform_3(%arg0: i32, %arg1: i32) -> (i32, i32, i32) {
    %c0_i32 = arith.constant 0 : i32
    %c0_i32_0 = arith.constant 0 : i32
    %c0_i32_1 = arith.constant 0 : i32
    return %arg0, %c0_i32, %c0_i32_0 : i32, i32, i32
  }
}

</mosaic_0001>

<llo_original>
// kernel: tpu_custom_call.1
$region0: #{tpu_custom_call.1}
  #allocation0 [shape = 'u32[]', space=smem, size = 0x4, offset = 0x4, fixed_abs, tag = 'smem constant byte address 0x4 - core index']
  #allocation1 [shape = 'u32[144,128]{1,0:T(1,128)}', space=vmem, size = 0x12000, scoped, tag = 'internal scratch']
  #allocation2 [shape = 'f32[7,2048]{1,0:T(8,128)}', space=vmem, size = 0x10000, scoped, tag = 'scratch operand']
  %s0 = inlined_call_operand.vmem [shape: bf16[2,7,64,32], index: 0, kind: input, shape index: {}]
  %s1 = inlined_call_operand.vmem [shape: bf16[32,2048], index: 1, kind: input, shape index: {}]
  %s2 = inlined_call_operand.vmem [shape: f32[1,2048], index: 2, kind: input, shape index: {}]
  %s3 = inlined_call_operand.vmem [shape: f32[2,7,2048], index: 3, kind: output, shape index: {}]
  %s4 = sld [smem:[#allocation0]]
  $region53: #{tpu_custom_call.1} parent=0
    _
  %s6 = ssub.s32 1, %s4
  %s7 = scalar_select 0, %s6, %s4
  loop: start=0, step=1, limit=4
  $region2: #{tpu_custom_call.1} parent=0 // loop_pre_header
    _
  $region3: #{tpu_custom_call.1} parent=0 // loop_header
    %s9 = sphi 0, %s13
    %p10 = scmp.ge.s32.totalorder %s9, 4
    %s16 = sphi 0, %s28
    %s17 = sphi 0, %s24
    %s18 = sphi 0, %s16
    %s19 = sphi 0, %s17
    %s20 = sphi 0, %s18
    %s21 = sphi 0, %s19
    %s33 = sphi 0, %s35
    %s36 = sphi 0, %s33
    %s37 = sphi 0, %s36
    %s53 = sphi 0, %s37
    %s57 = sphi 0, %s57
    %s59 = sphi 0, %s57
    %s60 = sphi 0, %s59
    %s74 = sphi 0, %s60
    %s78 = sphi 0, %s78
    %s80 = sphi 0, %s78
    %s81 = sphi 0, %s80
    %s95 = sphi 0, %s81
    %s101 = sphi 0, %s103
    %s104 = sphi 0, %s101
    %s105 = sphi 0, %s104
    %s121 = sphi 0, %s105
  $region4: #{tpu_custom_call.1} parent=0 // loop_header_branch
    %12 = sbr.rel (%p10) target = $region8
  $region5: #{tpu_custom_call.1} parent=0 // loop_body
    %s14 = ssub.s32 %s9, 1
    %s15 = ssub.s32 %s9, 2
    %s22 = sadd.s32 1, %s17
    %p23 = scmp.ge.s32.totalorder %s22, 1
    %s24 = scalar_select %p23, 0, %s22
    %s25 = sadd.s32 1, %s16
    %s26 = scalar_select %p23, %s25, %s16
    %p27 = scmp.ge.s32.totalorder %s26, 2
    %s28 = scalar_select %p27, 0, %s26
    %s29 = ssub.s32 %s16, %s28
    %s30 = ssub.s32 %s17, %s24
    %s31 = sor.u32 %s29, %s30
    %p32 = scmp.eq.s32.totalorder %s31, 0
    %s34 = sadd.s32 %s33, 1
    %s35 = scalar_select %p32, %s33, %s34
    %p38 = pneg %p32
    %p39 = scmp.eq.s32.totalorder %s9, 1
    %p40 = por %p38, %p39
    %p41 = scmp.ne.s32.totalorder %s33, %s36
    %p42 = scmp.eq.s32.totalorder %s9, 0
    %p43 = por %p41, %p42
    %p44 = scmp.ne.s32.totalorder %s33, %s36
    %p45 = scmp.eq.s32.totalorder %s14, 1
    %p46 = por %p44, %p45
    %p47 = scmp.ne.s32.totalorder %s36, %s37
    %p48 = scmp.eq.s32.totalorder %s14, 0
    %p49 = por %p47, %p48
    %p50 = scmp.ne.s32.totalorder %s36, %s37
    %p51 = scmp.eq.s32.totalorder %s15, 1
    %p52 = por %p50, %p51
    %p54 = scmp.ne.s32.totalorder %s37, %s53
    %p55 = scmp.eq.s32.totalorder %s15, 0
    %p56 = por %p54, %p55
    %s58 = sadd.s32 %s57, 1
    %p61 = scmp.eq.s32.totalorder %s9, 1
    %p62 = scmp.ne.s32.totalorder %s57, %s59
    %p63 = scmp.eq.s32.totalorder %s9, 0
    %p64 = por %p62, %p63
    %p65 = scmp.ne.s32.totalorder %s57, %s59
    %p66 = scmp.eq.s32.totalorder %s14, 1
    %p67 = por %p65, %p66
    %p68 = scmp.ne.s32.totalorder %s59, %s60
    %p69 = scmp.eq.s32.totalorder %s14, 0
    %p70 = por %p68, %p69
    %p71 = scmp.ne.s32.totalorder %s59, %s60
    %p72 = scmp.eq.s32.totalorder %s15, 1
    %p73 = por %p71, %p72
    %p75 = scmp.ne.s32.totalorder %s60, %s74
    %p76 = scmp.eq.s32.totalorder %s15, 0
    %p77 = por %p75, %p76
    %s79 = sadd.s32 %s78, 1
    %p82 = scmp.eq.s32.totalorder %s9, 1
    %p83 = scmp.ne.s32.totalorder %s78, %s80
    %p84 = scmp.eq.s32.totalorder %s9, 0
    %p85 = por %p83, %p84
    %p86 = scmp.ne.s32.totalorder %s78, %s80
    %p87 = scmp.eq.s32.totalorder %s14, 1
    %p88 = por %p86, %p87
    %p89 = scmp.ne.s32.totalorder %s80, %s81
    %p90 = scmp.eq.s32.totalorder %s14, 0
    %p91 = por %p89, %p90
    %p92 = scmp.ne.s32.totalorder %s80, %s81
    %p93 = scmp.eq.s32.totalorder %s15, 1
    %p94 = por %p92, %p93
    %p96 = scmp.ne.s32.totalorder %s81, %s95
    %p97 = scmp.eq.s32.totalorder %s15, 0
    %p98 = por %p96, %p97
    %s99 = ssub.s32 %s16, %s28
    %p100 = scmp.eq.s32.totalorder %s99, 0
    %s102 = sadd.s32 %s101, 1
    %s103 = scalar_select %p100, %s101, %s102
    %p106 = pneg %p100
    %p107 = scmp.eq.s32.totalorder %s9, 1
    %p108 = por %p106, %p107
    %p109 = scmp.ne.s32.totalorder %s101, %s104
    %p110 = scmp.eq.s32.totalorder %s9, 0
    %p111 = por %p109, %p110
    %p112 = scmp.ne.s32.totalorder %s101, %s104
    %p113 = scmp.eq.s32.totalorder %s14, 1
    %p114 = por %p112, %p113
    %p115 = scmp.ne.s32.totalorder %s104, %s105
    %p116 = scmp.eq.s32.totalorder %s14, 0
    %p117 = por %p115, %p116
    %p118 = scmp.ne.s32.totalorder %s104, %s105
    %p119 = scmp.eq.s32.totalorder %s15, 1
    %p120 = por %p118, %p119
    %p122 = scmp.ne.s32.totalorder %s105, %s121
    %p123 = scmp.eq.s32.totalorder %s15, 0
    %p124 = por %p122, %p123
    %p125 = scmp.le.s32.totalorder 1, %s9
    %p126 = scmp.lt.s32.totalorder %s9, 3
    %p127 = pnand %p125, %p126
    %p128 = pneg %p127
    // Predicated region
    $region9: #{tpu_custom_call.1} parent=5 // pred_check
      _
    $region10: #{tpu_custom_call.1} parent=5 // pred_check_branch
      %130 = sbr.rel (%p127) target = $region12
    $region11: #{tpu_custom_call.1} parent=5 // pred_region
      %s131 = ssub.s32 %s9, 1
      // Predicated region
      $region13: #{tpu_custom_call.1} parent=11 // pred_check
        %p132 = pneg %p70
      $region14: #{tpu_custom_call.1} parent=11 // pred_check_branch
        %134 = sbr.rel (%p132) target = $region16
      $region15: #{tpu_custom_call.1} parent=11 // pred_region
        _
      $region16: #{tpu_custom_call.1} parent=11 // pred_fallthru
        _
      // Predicated region
      $region17: #{tpu_custom_call.1} parent=11 // pred_check
        %p135 = pneg %p91
      $region18: #{tpu_custom_call.1} parent=11 // pred_check_branch
        %137 = sbr.rel (%p135) target = $region20
      $region19: #{tpu_custom_call.1} parent=11 // pred_region
        _
      $region20: #{tpu_custom_call.1} parent=11 // pred_fallthru
        _
    $region12: #{tpu_custom_call.1} parent=5 // pred_fallthru
      _
    %p138 = scmp.lt.s32.totalorder %s9, 2
    // Predicated region
    $region21: #{tpu_custom_call.1} parent=5 // pred_check
      %p139 = pneg %p138
    $region22: #{tpu_custom_call.1} parent=5 // pred_check_branch
      %141 = sbr.rel (%p139) target = $region24
    $region23: #{tpu_custom_call.1} parent=5 // pred_region
      // Predicated region
      $region25: #{tpu_custom_call.1} parent=23 // pred_check
        %p142 = pneg %p43
      $region26: #{tpu_custom_call.1} parent=23 // pred_check_branch
        %144 = sbr.rel (%p142) target = $region28
      $region27: #{tpu_custom_call.1} parent=23 // pred_region
        %s145 = smul.u32 8, %s17
        %p146 = scmp.lt.s32.totalorder %s16, 1
        %s147 = scalar_select %p146, %s16, 1
        %p148 = scmp.lt.s32.totalorder %s145, 7
        %s149 = scalar_select %p148, %s145, 7
        %s150 = smul.addr %s147, 56
        %s151 = sadd.s32 %s149, %s150
        %s152 = smul.addr %s151, 4
        %s153 = scalar_lea.vmem %s0, %s152
        %s154 = smul.u32 8, %s17
      $region28: #{tpu_custom_call.1} parent=23 // pred_fallthru
        _
    $region24: #{tpu_custom_call.1} parent=5 // pred_fallthru
      _
    %p155 = scmp.le.s32.totalorder 1, %s9
    %p156 = scmp.lt.s32.totalorder %s9, 3
    %p157 = pnand %p155, %p156
    %p158 = pneg %p157
    // Predicated region
    $region29: #{tpu_custom_call.1} parent=5 // pred_check
      _
    $region30: #{tpu_custom_call.1} parent=5 // pred_check_branch
      %160 = sbr.rel (%p157) target = $region32
    $region31: #{tpu_custom_call.1} parent=5 // pred_region
      %s161 = ssub.s32 %s9, 1
      %s162 = smul.u32 8, %s19
      %p163 = scmp.lt.s32.totalorder %s18, 1
      %s164 = scalar_select %p163, %s18, 1
      %p165 = scmp.lt.s32.totalorder %s162, 7
      %s166 = scalar_select %p165, %s162, 7
      %s167 = smul.addr %s164, 56
      %s168 = sadd.s32 %s166, %s167
      %s169 = smul.addr %s168, 4
      %s170 = scalar_lea.vmem %s0, %s169
      %p171 = pneg %p49
      %p172 = pneg %p46
      %p173 = pneg %p70
      %p174 = pneg %p67
      %p175 = pneg %p91
      %p176 = pneg %p88
      %p177 = pneg %p117
      %p178 = pneg %p114
      %p179 = scmp.lt.s32.totalorder %s18, 1
      %s180 = scalar_select %p179, %s18, 1
      %s181 = smul.addr %s180, 16
      %s182 = smul.addr %s181, 8
      %s183 = scalar_lea.vmem %s3, %s182
      %s184 = smul.u32 8, %s19
      %p185 = scmp.lt.s32.totalorder %s18, 1
      %s186 = scalar_select %p185, %s18, 1
      %p187 = scmp.lt.s32.totalorder %s184, 7
      %s188 = scalar_select %p187, %s184, 7
      %s189 = smul.addr %s186, 56
      %s190 = sadd.s32 %s188, %s189
      %s191 = smul.addr %s190, 4
      %s192 = scalar_lea.vmem %s0, %s191
      %s193 = smul.u32 8, %s19
      %p194 = scmp.lt.s32.totalorder %s18, 1
      %s195 = scalar_select %p194, %s18, 1
      %s196 = smul.addr %s195, 16
      %s197 = smul.addr %s196, 8
      %s198 = scalar_lea.vmem %s3, %s197
      %p200 = scmp.eq.s32.totalorder %s19, 0
      // Predicated region
      $region33: #{tpu_custom_call.1} parent=31 // pred_check
        %p201 = pneg %p200
      $region34: #{tpu_custom_call.1} parent=31 // pred_check_branch
        %203 = sbr.rel (%p201) target = $region36
      $region35: #{tpu_custom_call.1} parent=31 // pred_region
        %204 = vst [vmem:[#allocation2] sm:$0x7f] 0.0
        %205 = vst [vmem:[#allocation2 + $0x8] sm:$0x7f] 0.0
        %206 = vst [vmem:[#allocation2 + $0x10] sm:$0x7f] 0.0
        %207 = vst [vmem:[#allocation2 + $0x18] sm:$0x7f] 0.0
        %208 = vst [vmem:[#allocation2 + $0x20] sm:$0x7f] 0.0
        %209 = vst [vmem:[#allocation2 + $0x28] sm:$0x7f] 0.0
        %210 = vst [vmem:[#allocation2 + $0x30] sm:$0x7f] 0.0
        %211 = vst [vmem:[#allocation2 + $0x38] sm:$0x7f] 0.0
        %212 = vst [vmem:[#allocation2 + $0x40] sm:$0x7f] 0.0
        %213 = vst [vmem:[#allocation2 + $0x48] sm:$0x7f] 0.0
        %214 = vst [vmem:[#allocation2 + $0x50] sm:$0x7f] 0.0
        %215 = vst [vmem:[#allocation2 + $0x58] sm:$0x7f] 0.0
        %216 = vst [vmem:[#allocation2 + $0x60] sm:$0x7f] 0.0
        %217 = vst [vmem:[#allocation2 + $0x68] sm:$0x7f] 0.0
        %218 = vst [vmem:[#allocation2 + $0x70] sm:$0x7f] 0.0
        %219 = vst [vmem:[#allocation2 + $0x78] sm:$0x7f] 0.0
      $region36: #{tpu_custom_call.1} parent=31 // pred_fallthru
        _
      %v220 = vld [vmem:[%s192] sm:$0xf]
      %v221 = vld [vmem:[%s192 + $0x4] sm:$0xf]
      %v222 = vld [vmem:[%s192 + $0x8] sm:$0xf]
      %v223 = vld [vmem:[%s192 + $0xc] sm:$0xf]
      %v224 = vld [vmem:[%s192 + $0x10] sm:$0xf]
      %v225 = vld [vmem:[%s192 + $0x14] sm:$0xf]
      %v226 = vld [vmem:[%s192 + $0x18] sm:$0xf]
      %v227 = vld [vmem:[%s192 + $0x1c] sm:$0xf]
      %v228 = vld [vmem:[%s192 + $0x20] sm:$0xf]
      %v229 = vld [vmem:[%s192 + $0x24] sm:$0xf]
      %v230 = vld [vmem:[%s192 + $0x28] sm:$0xf]
      %v231 = vld [vmem:[%s192 + $0x2c] sm:$0xf]
      %v232 = vld [vmem:[%s192 + $0x30] sm:$0xf]
      %v233 = vld [vmem:[%s192 + $0x34] sm:$0xf]
      %v234 = vld [vmem:[%s192 + $0x38] sm:$0xf]
      %v235 = vld [vmem:[%s192 + $0x3c] sm:$0xf]
      %v236 = vld [vmem:[%s192 + $0x40] sm:$0xf]
      %v237 = vld [vmem:[%s192 + $0x44] sm:$0xf]
      %v238 = vld [vmem:[%s192 + $0x48] sm:$0xf]
      %v239 = vld [vmem:[%s192 + $0x4c] sm:$0xf]
      %v240 = vld [vmem:[%s192 + $0x50] sm:$0xf]
      %v241 = vld [vmem:[%s192 + $0x54] sm:$0xf]
      %v242 = vld [vmem:[%s192 + $0x58] sm:$0xf]
      %v243 = vld [vmem:[%s192 + $0x5c] sm:$0xf]
      %v244 = vld [vmem:[%s192 + $0x60] sm:$0xf]
      %v245 = vld [vmem:[%s192 + $0x64] sm:$0xf]
      %v246 = vld [vmem:[%s192 + $0x68] sm:$0xf]
      %v247 = vld [vmem:[%s192 + $0x6c] sm:$0xf]
      %v248 = vld [vmem:[%s192 + $0x70] sm:$0xf]
      %v249 = vld [vmem:[%s192 + $0x74] sm:$0xf]
      %v250 = vld [vmem:[%s192 + $0x78] sm:$0xf]
      %v251 = vld [vmem:[%s192 + $0x7c] sm:$0xf]
      %v252 = vld [vmem:[%s192 + $0x80] sm:$0xf]
      %v253 = vld [vmem:[%s192 + $0x84] sm:$0xf]
      %v254 = vld [vmem:[%s192 + $0x88] sm:$0xf]
      %v255 = vld [vmem:[%s192 + $0x8c] sm:$0xf]
      %v256 = vld [vmem:[%s192 + $0x90] sm:$0xf]
      %v257 = vld [vmem:[%s192 + $0x94] sm:$0xf]
      %v258 = vld [vmem:[%s192 + $0x98] sm:$0xf]
      %v259 = vld [vmem:[%s192 + $0x9c] sm:$0xf]
      %v260 = vld [vmem:[%s192 + $0xa0] sm:$0xf]
      %v261 = vld [vmem:[%s192 + $0xa4] sm:$0xf]
      %v262 = vld [vmem:[%s192 + $0xa8] sm:$0xf]
      %v263 = vld [vmem:[%s192 + $0xac] sm:$0xf]
      %v264 = vld [vmem:[%s192 + $0xb0] sm:$0xf]
      %v265 = vld [vmem:[%s192 + $0xb4] sm:$0xf]
      %v266 = vld [vmem:[%s192 + $0xb8] sm:$0xf]
      %v267 = vld [vmem:[%s192 + $0xbc] sm:$0xf]
      %v268 = vld [vmem:[%s192 + $0xc0] sm:$0xf]
      %v269 = vld [vmem:[%s192 + $0xc4] sm:$0xf]
      %v270 = vld [vmem:[%s192 + $0xc8] sm:$0xf]
      %v271 = vld [vmem:[%s192 + $0xcc] sm:$0xf]
      %v272 = vld [vmem:[%s192 + $0xd0] sm:$0xf]
      %v273 = vld [vmem:[%s192 + $0xd4] sm:$0xf]
      %v274 = vld [vmem:[%s192 + $0xd8] sm:$0xf]
      %v275 = vld [vmem:[%s192 + $0xdc] sm:$0xf]
      %v276 = vld [vmem:[%s1] sm:$0xff]
      %v277 = vld [vmem:[%s1 + $0x8] sm:$0xff]
      %v278 = vld [vmem:[%s1 + $0x10] sm:$0xff]
      %v279 = vld [vmem:[%s1 + $0x18] sm:$0xff]
      %v280 = vld [vmem:[%s1 + $0x20] sm:$0xff]
      %v281 = vld [vmem:[%s1 + $0x28] sm:$0xff]
      %v282 = vld [vmem:[%s1 + $0x30] sm:$0xff]
      %v283 = vld [vmem:[%s1 + $0x38] sm:$0xff]
      %v284 = vld [vmem:[%s1 + $0x40] sm:$0xff]
      %v285 = vld [vmem:[%s1 + $0x48] sm:$0xff]
      %v286 = vld [vmem:[%s1 + $0x50] sm:$0xff]
      %v287 = vld [vmem:[%s1 + $0x58] sm:$0xff]
      %v288 = vld [vmem:[%s1 + $0x60] sm:$0xff]
      %v289 = vld [vmem:[%s1 + $0x68] sm:$0xff]
      %v290 = vld [vmem:[%s1 + $0x70] sm:$0xff]
      %v291 = vld [vmem:[%s1 + $0x78] sm:$0xff]
      %v292 = vld [vmem:[%s1 + $0x80] sm:$0xff]
      %v293 = vld [vmem:[%s1 + $0x88] sm:$0xff]
      %v294 = vld [vmem:[%s1 + $0x90] sm:$0xff]
      %v295 = vld [vmem:[%s1 + $0x98] sm:$0xff]
      %v296 = vld [vmem:[%s1 + $0xa0] sm:$0xff]
      %v297 = vld [vmem:[%s1 + $0xa8] sm:$0xff]
      %v298 = vld [vmem:[%s1 + $0xb0] sm:$0xff]
      %v299 = vld [vmem:[%s1 + $0xb8] sm:$0xff]
      %v300 = vld [vmem:[%s1 + $0xc0] sm:$0xff]
      %v301 = vld [vmem:[%s1 + $0xc8] sm:$0xff]
      %v302 = vld [vmem:[%s1 + $0xd0] sm:$0xff]
      %v303 = vld [vmem:[%s1 + $0xd8] sm:$0xff]
      %v304 = vld [vmem:[%s1 + $0xe0] sm:$0xff]
      %v305 = vld [vmem:[%s1 + $0xe8] sm:$0xff]
      %v306 = vld [vmem:[%s1 + $0xf0] sm:$0xff]
      %v307 = vld [vmem:[%s1 + $0xf8] sm:$0xff]
      %v308 = vld [vmem:[%s2] sm:$0xff]
      %v309 = vld [vmem:[%s2 + $0x8] sm:$0xff]
      %v312 = vlaneseq
      %v313 = vshrl.u32 %v312, 7
      %v314 = vsub.s32 0, %v313
      %v315 = vrot.slane %v308, %v314
      %v316 = vlaneseq
      %v317 = vshrl.u32 %v316, 7
      %v318 = vsub.s32 1, %v317
      %v319 = vrot.slane %v308, %v318
      %v320 = vlaneseq
      %v321 = vshrl.u32 %v320, 7
      %v322 = vsub.s32 2, %v321
      %v323 = vrot.slane %v308, %v322
      %v324 = vlaneseq
      %v325 = vshrl.u32 %v324, 7
      %v326 = vsub.s32 3, %v325
      %v327 = vrot.slane %v308, %v326
      %v328 = vlaneseq
      %v329 = vshrl.u32 %v328, 7
      %v330 = vsub.s32 4, %v329
      %v331 = vrot.slane %v308, %v330
      %v332 = vlaneseq
      %v333 = vshrl.u32 %v332, 7
      %v334 = vsub.s32 5, %v333
      %v335 = vrot.slane %v308, %v334
      %v336 = vlaneseq
      %v337 = vshrl.u32 %v336, 7
      %v338 = vsub.s32 6, %v337
      %v339 = vrot.slane %v308, %v338
      %v340 = vlaneseq
      %v341 = vshrl.u32 %v340, 7
      %v342 = vsub.s32 7, %v341
      %v343 = vrot.slane %v308, %v342
      %v344 = vlaneseq
      %v345 = vshrl.u32 %v344, 7
      %v346 = vsub.s32 0, %v345
      %v347 = vrot.slane %v309, %v346
      %v348 = vlaneseq
      %v349 = vshrl.u32 %v348, 7
      %v350 = vsub.s32 1, %v349
      %v351 = vrot.slane %v309, %v350
      %v352 = vlaneseq
      %v353 = vshrl.u32 %v352, 7
      %v354 = vsub.s32 2, %v353
      %v355 = vrot.slane %v309, %v354
      %v356 = vlaneseq
      %v357 = vshrl.u32 %v356, 7
      %v358 = vsub.s32 3, %v357
      %v359 = vrot.slane %v309, %v358
      %v360 = vlaneseq
      %v361 = vshrl.u32 %v360, 7
      %v362 = vsub.s32 4, %v361
      %v363 = vrot.slane %v309, %v362
      %v364 = vlaneseq
      %v365 = vshrl.u32 %v364, 7
      %v366 = vsub.s32 5, %v365
      %v367 = vrot.slane %v309, %v366
      %v368 = vlaneseq
      %v369 = vshrl.u32 %v368, 7
      %v370 = vsub.s32 6, %v369
      %v371 = vrot.slane %v309, %v370
      %v372 = vlaneseq
      %v373 = vshrl.u32 %v372, 7
      %v374 = vsub.s32 7, %v373
      %v375 = vrot.slane %v309, %v374
      %v448 = vunpack.c.l.b16 %v220
      %v449 = vunpack.c.l.b16 %v221
      %v450 = vunpack.c.l.b16 %v222
      %v451 = vunpack.c.l.b16 %v223
      %v452 = vunpack.c.l.b16 %v224
      %v453 = vunpack.c.l.b16 %v225
      %v454 = vunpack.c.l.b16 %v226
      %v455 = vunpack.c.l.b16 %v227
      %v456 = vunpack.c.l.b16 %v228
      %v457 = vunpack.c.l.b16 %v229
      %v458 = vunpack.c.l.b16 %v230
      %v459 = vunpack.c.l.b16 %v231
      %v460 = vunpack.c.l.b16 %v232
      %v461 = vunpack.c.l.b16 %v233
      %v462 = vunpack.c.l.b16 %v234
      %v463 = vunpack.c.l.b16 %v235
      %v464 = vunpack.c.l.b16 %v236
      %v465 = vunpack.c.l.b16 %v237
      %v466 = vunpack.c.l.b16 %v238
      %v467 = vunpack.c.l.b16 %v239
      %v468 = vunpack.c.l.b16 %v240
      %v469 = vunpack.c.l.b16 %v241
      %v470 = vunpack.c.l.b16 %v242
      %v471 = vunpack.c.l.b16 %v243
      %v472 = vunpack.c.l.b16 %v244
      %v473 = vunpack.c.l.b16 %v245
      %v474 = vunpack.c.l.b16 %v246
      %v475 = vunpack.c.l.b16 %v247
      %v476 = vunpack.c.l.b16 %v248
      %v477 = vunpack.c.l.b16 %v249
      %v478 = vunpack.c.l.b16 %v250
      %v479 = vunpack.c.l.b16 %v251
      %v480 = vunpack.c.l.b16 %v252
      %v481 = vunpack.c.l.b16 %v253
      %v482 = vunpack.c.l.b16 %v254
      %v483 = vunpack.c.l.b16 %v255
      %v484 = vunpack.c.l.b16 %v256
      %v485 = vunpack.c.l.b16 %v257
      %v486 = vunpack.c.l.b16 %v258
      %v487 = vunpack.c.l.b16 %v259
      %v488 = vunpack.c.l.b16 %v260
      %v489 = vunpack.c.l.b16 %v261
      %v490 = vunpack.c.l.b16 %v262
      %v491 = vunpack.c.l.b16 %v263
      %v492 = vunpack.c.l.b16 %v264
      %v493 = vunpack.c.l.b16 %v265
      %v494 = vunpack.c.l.b16 %v266
      %v495 = vunpack.c.l.b16 %v267
      %v496 = vunpack.c.l.b16 %v268
      %v497 = vunpack.c.l.b16 %v269
      %v498 = vunpack.c.l.b16 %v270
      %v499 = vunpack.c.l.b16 %v271
      %v500 = vunpack.c.l.b16 %v272
      %v501 = vunpack.c.l.b16 %v273
      %v502 = vunpack.c.l.b16 %v274
      %v503 = vunpack.c.l.b16 %v275
      %v504 = vpack.c.b16 %v449, %v448
      %v505 = vpack.c.b16 %v451, %v450
      %v506 = vpack.c.b16 %v453, %v452
      %v507 = vpack.c.b16 %v455, %v454
      %v508 = vpack.c.b16 %v457, %v456
      %v509 = vpack.c.b16 %v459, %v458
      %v510 = vpack.c.b16 %v461, %v460
      %v511 = vpack.c.b16 %v463, %v462
      %v512 = vpack.c.b16 %v465, %v464
      %v513 = vpack.c.b16 %v467, %v466
      %v514 = vpack.c.b16 %v469, %v468
      %v515 = vpack.c.b16 %v471, %v470
      %v516 = vpack.c.b16 %v473, %v472
      %v517 = vpack.c.b16 %v475, %v474
      %v518 = vpack.c.b16 %v477, %v476
      %v519 = vpack.c.b16 %v479, %v478
      %v520 = vpack.c.b16 %v481, %v480
      %v521 = vpack.c.b16 %v483, %v482
      %v522 = vpack.c.b16 %v485, %v484
      %v523 = vpack.c.b16 %v487, %v486
      %v524 = vpack.c.b16 %v489, %v488
      %v525 = vpack.c.b16 %v491, %v490
      %v526 = vpack.c.b16 %v493, %v492
      %v527 = vpack.c.b16 %v495, %v494
      %v528 = vpack.c.b16 %v497, %v496
      %v529 = vpack.c.b16 %v499, %v498
      %v530 = vpack.c.b16 %v501, %v500
      %v531 = vpack.c.b16 %v503, %v502
      %v564 = vunpack.c.l.b16 %v276
      %v565 = vunpack.c.h.b16 %v276
      %v566 = vunpack.c.l.b16 %v277
      %v567 = vunpack.c.h.b16 %v277
      %v568 = vunpack.c.l.b16 %v278
      %v569 = vunpack.c.h.b16 %v278
      %v570 = vunpack.c.l.b16 %v279
      %v571 = vunpack.c.h.b16 %v279
      %v572 = vunpack.c.l.b16 %v280
      %v573 = vunpack.c.h.b16 %v280
      %v574 = vunpack.c.l.b16 %v281
      %v575 = vunpack.c.h.b16 %v281
      %v576 = vunpack.c.l.b16 %v282
      %v577 = vunpack.c.h.b16 %v282
      %v578 = vunpack.c.l.b16 %v283
      %v579 = vunpack.c.h.b16 %v283
      %v580 = vunpack.c.l.b16 %v284
      %v581 = vunpack.c.h.b16 %v284
      %v582 = vunpack.c.l.b16 %v285
      %v583 = vunpack.c.h.b16 %v285
      %v584 = vunpack.c.l.b16 %v286
      %v585 = vunpack.c.h.b16 %v286
      %v586 = vunpack.c.l.b16 %v287
      %v587 = vunpack.c.h.b16 %v287
      %v588 = vunpack.c.l.b16 %v288
      %v589 = vunpack.c.h.b16 %v288
      %v590 = vunpack.c.l.b16 %v289
      %v591 = vunpack.c.h.b16 %v289
      %v592 = vunpack.c.l.b16 %v290
      %v593 = vunpack.c.h.b16 %v290
      %v594 = vunpack.c.l.b16 %v291
      %v595 = vunpack.c.h.b16 %v291
      %v596 = vunpack.c.l.b16 %v292
      %v597 = vunpack.c.h.b16 %v292
      %v598 = vunpack.c.l.b16 %v293
      %v599 = vunpack.c.h.b16 %v293
      %v600 = vunpack.c.l.b16 %v294
      %v601 = vunpack.c.h.b16 %v294
      %v602 = vunpack.c.l.b16 %v295
      %v603 = vunpack.c.h.b16 %v295
      %v604 = vunpack.c.l.b16 %v296
      %v605 = vunpack.c.h.b16 %v296
      %v606 = vunpack.c.l.b16 %v297
      %v607 = vunpack.c.h.b16 %v297
      %v608 = vunpack.c.l.b16 %v298
      %v609 = vunpack.c.h.b16 %v298
      %v610 = vunpack.c.l.b16 %v299
      %v611 = vunpack.c.h.b16 %v299
      %v612 = vunpack.c.l.b16 %v300
      %v613 = vunpack.c.h.b16 %v300
      %v614 = vunpack.c.l.b16 %v301
      %v615 = vunpack.c.h.b16 %v301
      %v616 = vunpack.c.l.b16 %v302
      %v617 = vunpack.c.h.b16 %v302
      %v618 = vunpack.c.l.b16 %v303
      %v619 = vunpack.c.h.b16 %v303
      %v620 = vunpack.c.l.b16 %v304
      %v621 = vunpack.c.h.b16 %v304
      %v622 = vunpack.c.l.b16 %v305
      %v623 = vunpack.c.h.b16 %v305
      %v624 = vunpack.c.l.b16 %v306
      %v625 = vunpack.c.h.b16 %v306
      %v626 = vunpack.c.l.b16 %v307
      %v627 = vunpack.c.h.b16 %v307
      %v628 = vpack.c.b16 %v580, %v564
      %v629 = vpack.c.b16 %v581, %v565
      %v630 = vpack.c.b16 %v582, %v566
      %v631 = vpack.c.b16 %v583, %v567
      %v632 = vpack.c.b16 %v584, %v568
      %v633 = vpack.c.b16 %v585, %v569
      %v634 = vpack.c.b16 %v586, %v570
      %v635 = vpack.c.b16 %v587, %v571
      %v636 = vpack.c.b16 %v588, %v572
      %v637 = vpack.c.b16 %v589, %v573
      %v638 = vpack.c.b16 %v590, %v574
      %v639 = vpack.c.b16 %v591, %v575
      %v640 = vpack.c.b16 %v592, %v576
      %v641 = vpack.c.b16 %v593, %v577
      %v642 = vpack.c.b16 %v594, %v578
      %v643 = vpack.c.b16 %v595, %v579
      %v644 = vpack.c.b16 %v612, %v596
      %v645 = vpack.c.b16 %v613, %v597
      %v646 = vpack.c.b16 %v614, %v598
      %v647 = vpack.c.b16 %v615, %v599
      %v648 = vpack.c.b16 %v616, %v600
      %v649 = vpack.c.b16 %v617, %v601
      %v650 = vpack.c.b16 %v618, %v602
      %v651 = vpack.c.b16 %v619, %v603
      %v652 = vpack.c.b16 %v620, %v604
      %v653 = vpack.c.b16 %v621, %v605
      %v654 = vpack.c.b16 %v622, %v606
      %v655 = vpack.c.b16 %v623, %v607
      %v656 = vpack.c.b16 %v624, %v608
      %v657 = vpack.c.b16 %v625, %v609
      %v658 = vpack.c.b16 %v626, %v610
      %v659 = vpack.c.b16 %v627, %v611
      %vm692 = vcmask 261120
      %v694 = vsel %vm692, %v504, 0
      %v697 = vsel %vm692, %v505, 0
      %v700 = vsel %vm692, %v506, 0
      %v703 = vsel %vm692, %v507, 0
      %v706 = vsel %vm692, %v508, 0
      %v709 = vsel %vm692, %v509, 0
      %v712 = vsel %vm692, %v510, 0
      %v715 = vsel %vm692, %v511, 0
      %v718 = vsel %vm692, %v512, 0
      %v721 = vsel %vm692, %v513, 0
      %v724 = vsel %vm692, %v514, 0
      %v727 = vsel %vm692, %v515, 0
      %v730 = vsel %vm692, %v516, 0
      %v733 = vsel %vm692, %v517, 0
      %v736 = vsel %vm692, %v518, 0
      %v739 = vsel %vm692, %v519, 0
      %v742 = vsel %vm692, %v520, 0
      %v745 = vsel %vm692, %v521, 0
      %v748 = vsel %vm692, %v522, 0
      %v751 = vsel %vm692, %v523, 0
      %v754 = vsel %vm692, %v524, 0
      %v757 = vsel %vm692, %v525, 0
      %v760 = vsel %vm692, %v526, 0
      %v763 = vsel %vm692, %v527, 0
      %v766 = vsel %vm692, %v528, 0
      %v769 = vsel %vm692, %v529, 0
      %v772 = vsel %vm692, %v530, 0
      %v775 = vsel %vm692, %v531, 0
      %777 = vmatprep.subr.bf16.mxu0 %v629
      %778 = vmatpush1.bf16.msra.mxu0 %v628
      %779 = vmatprep.subr.bf16.mxu0 %v645
      %780 = vmatpush1.bf16.msra.mxu0 %v644
      %781 = vmatprep.subr.bf16.mxu0 0
      %782 = vmatpush1.bf16.msra.mxu0 0
      %783 = vmatprep.subr.bf16.mxu0 0
      %784 = vmatpush1.bf16.msra.mxu0 0
      %785 = vmatprep.subr.bf16.mxu0 0
      %786 = vmatpush1.bf16.msra.mxu0 0
      %787 = vmatprep.subr.bf16.mxu0 0
      %788 = vmatpush1.bf16.msra.mxu0 0
      %789 = vmatprep.subr.bf16.mxu0 0
      %790 = vmatpush1.bf16.msra.mxu0 0
      %791 = vmatprep.subr.bf16.mxu0 0
      %792 = vmatpush1.bf16.msra.mxu0 0
      %793 = vmatprep.subr.bf16.mxu0 0
      %794 = vmatpush1.bf16.msra.mxu0 0
      %795 = vmatprep.subr.bf16.mxu0 0
      %796 = vmatpush1.bf16.msra.mxu0 0
      %797 = vmatprep.subr.bf16.mxu0 0
      %798 = vmatpush1.bf16.msra.mxu0 0
      %799 = vmatprep.subr.bf16.mxu0 0
      %800 = vmatpush1.bf16.msra.mxu0 0
      %801 = vmatprep.subr.bf16.mxu0 0
      %802 = vmatpush1.bf16.msra.mxu0 0
      %803 = vmatprep.subr.bf16.mxu0 0
      %804 = vmatpush1.bf16.msra.mxu0 0
      %805 = vmatprep.subr.bf16.mxu0 0
      %806 = vmatpush1.bf16.msra.mxu0 0
      %807 = vmatprep.subr.bf16.mxu0 0
      %808 = vmatpush1.bf16.msra.mxu0 0
      %809 = vmatprep.mubr.bf16.mxu0 0
      %810 = vmatmul.mubr.bf16.gmra.mrb[0].mxu0 %v694
      %v811 = vpop.f32.mrb[0].mxu0
      %v812 = vadd.f32 %v315, %v811
      %v813 = vpop.f32.mrb[0].mxu0
      %v814 = vadd.f32 %v319, %v813
      %v815 = vpop.f32.mrb[0].mxu0
      %v816 = vadd.f32 %v315, %v815
      %v817 = vpop.f32.mrb[0].mxu0
      %v818 = vadd.f32 %v319, %v817
      %819 = vmatprep.mubr.bf16.mxu0 0
      %820 = vmatmul.mubr.bf16.gmra.mrb[0].mxu0 %v697
      %v821 = vpop.f32.mrb[0].mxu0
      %v822 = vadd.f32 %v315, %v821
      %v823 = vpop.f32.mrb[0].mxu0
      %v824 = vadd.f32 %v319, %v823
      %v825 = vpop.f32.mrb[0].mxu0
      %v826 = vadd.f32 %v315, %v825
      %v827 = vpop.f32.mrb[0].mxu0
      %v828 = vadd.f32 %v319, %v827
      %829 = vmatprep.mubr.bf16.mxu0 0
      %830 = vmatmul.mubr.bf16.gmra.mrb[0].mxu0 %v700
      %v831 = vpop.f32.mrb[0].mxu0
      %v832 = vadd.f32 %v315, %v831
      %v833 = vpop.f32.mrb[0].mxu0
      %v834 = vadd.f32 %v319, %v833
      %v835 = vpop.f32.mrb[0].mxu0
      %v836 = vadd.f32 %v315, %v835
      %v837 = vpop.f32.mrb[0].mxu0
      %v838 = vadd.f32 %v319, %v837
      %839 = vmatprep.mubr.bf16.mxu0 0
      %840 = vmatmul.mubr.bf16.gmra.mrb[0].mxu0 %v703
      %v841 = vpop.f32.mrb[0].mxu0
      %v842 = vadd.f32 %v315, %v841
      %v843 = vpop.f32.mrb[0].mxu0
      %v844 = vadd.f32 %v319, %v843
      %v845 = vpop.f32.mrb[0].mxu0
      %v846 = vadd.f32 %v315, %v845
      %v847 = vpop.f32.mrb[0].mxu0
      %v848 = vadd.f32 %v319, %v847
      %849 = vmatprep.mubr.bf16.mxu0 0
      %850 = vmatmul.mubr.bf16.gmra.mrb[0].mxu0 %v706
      %v851 = vpop.f32.mrb[0].mxu0
      %v852 = vadd.f32 %v315, %v851
      %v853 = vpop.f32.mrb[0].mxu0
      %v854 = vadd.f32 %v319, %v853
      %v855 = vpop.f32.mrb[0].mxu0
      %v856 = vadd.f32 %v315, %v855
      %v857 = vpop.f32.mrb[0].mxu0
      %v858 = vadd.f32 %v319, %v857
      %859 = vmatprep.mubr.bf16.mxu0 0
      %860 = vmatmul.mubr.bf16.gmra.mrb[0].mxu0 %v709
      %v861 = vpop.f32.mrb[0].mxu0
      %v862 = vadd.f32 %v315, %v861
      %v863 = vpop.f32.mrb[0].mxu0
      %v864 = vadd.f32 %v319, %v863
      %v865 = vpop.f32.mrb[0].mxu0
      %v866 = vadd.f32 %v315, %v865
      %v867 = vpop.f32.mrb[0].mxu0
      %v868 = vadd.f32 %v319, %v867
      %869 = vmatprep.mubr.bf16.mxu0 0
      %870 = vmatmul.mubr.bf16.gmra.mrb[0].mxu0 %v712
      %v871 = vpop.f32.mrb[0].mxu0
      %v872 = vadd.f32 %v315, %v871
      %v873 = vpop.f32.mrb[0].mxu0
      %v874 = vadd.f32 %v319, %v873
      %v875 = vpop.f32.mrb[0].mxu0
      %v876 = vadd.f32 %v315, %v875
      %v877 = vpop.f32.mrb[0].mxu0
      %v878 = vadd.f32 %v319, %v877
      %879 = vmatprep.mubr.bf16.mxu0 0
      %880 = vmatmul.mubr.bf16.gmra.mrb[0].mxu0 %v715
      %v881 = vpop.f32.mrb[0].mxu0
      %v882 = vadd.f32 %v315, %v881
      %v883 = vpop.f32.mrb[0].mxu0
      %v884 = vadd.f32 %v319, %v883
      %v885 = vpop.f32.mrb[0].mxu0
      %v886 = vadd.f32 %v315, %v885
      %v887 = vpop.f32.mrb[0].mxu0
      %v888 = vadd.f32 %v319, %v887
      %889 = vmatprep.mubr.bf16.mxu0 0
      %890 = vmatmul.mubr.bf16.gmra.mrb[0].mxu0 %v718
      %v891 = vpop.f32.mrb[0].mxu0
      %v892 = vadd.f32 %v315, %v891
      %v893 = vpop.f32.mrb[0].mxu0
      %v894 = vadd.f32 %v319, %v893
      %v895 = vpop.f32.mrb[0].mxu0
      %v896 = vadd.f32 %v315, %v895
      %v897 = vpop.f32.mrb[0].mxu0
      %v898 = vadd.f32 %v319, %v897
      %899 = vmatprep.mubr.bf16.mxu0 0
      %900 = vmatmul.mubr.bf16.gmra.mrb[0].mxu0 %v721
      %v901 = vpop.f32.mrb[0].mxu0
      %v902 = vadd.f32 %v315, %v901
      %v903 = vpop.f32.mrb[0].mxu0
      %v904 = vadd.f32 %v319, %v903
      %v905 = vpop.f32.mrb[0].mxu0
      %v906 = vadd.f32 %v315, %v905
      %v907 = vpop.f32.mrb[0].mxu0
      %v908 = vadd.f32 %v319, %v907
      %909 = vmatprep.mubr.bf16.mxu0 0
      %910 = vmatmul.mubr.bf16.gmra.mrb[0].mxu0 %v724
      %v911 = vpop.f32.mrb[0].mxu0
      %v912 = vadd.f32 %v315, %v911
      %v913 = vpop.f32.mrb[0].mxu0
      %v914 = vadd.f32 %v319, %v913
      %v915 = vpop.f32.mrb[0].mxu0
      %v916 = vadd.f32 %v315, %v915
      %v917 = vpop.f32.mrb[0].mxu0
      %v918 = vadd.f32 %v319, %v917
      %919 = vmatprep.mubr.bf16.mxu0 0
      %920 = vmatmul.mubr.bf16.gmra.mrb[0].mxu0 %v727
      %v921 = vpop.f32.mrb[0].mxu0
      %v922 = vadd.f32 %v315, %v921
      %v923 = vpop.f32.mrb[0].mxu0
      %v924 = vadd.f32 %v319, %v923
      %v925 = vpop.f32.mrb[0].mxu0
      %v926 = vadd.f32 %v315, %v925
      %v927 = vpop.f32.mrb[0].mxu0
      %v928 = vadd.f32 %v319, %v927
      %929 = vmatprep.mubr.bf16.mxu0 0
      %930 = vmatmul.mubr.bf16.gmra.mrb[0].mxu0 %v730
      %v931 = vpop.f32.mrb[0].mxu0
      %v932 = vadd.f32 %v315, %v931
      %v933 = vpop.f32.mrb[0].mxu0
      %v934 = vadd.f32 %v319, %v933
      %v935 = vpop.f32.mrb[0].mxu0
      %v936 = vadd.f32 %v315, %v935
      %v937 = vpop.f32.mrb[0].mxu0
      %v938 = vadd.f32 %v319, %v937
      %939 = vmatprep.mubr.bf16.mxu0 0
      %940 = vmatmul.mubr.bf16.gmra.mrb[0].mxu0 %v733
      %v941 = vpop.f32.mrb[0].mxu0
      %v942 = vadd.f32 %v315, %v941
      %v943 = vpop.f32.mrb[0].mxu0
      %v944 = vadd.f32 %v319, %v943
      %v945 = vpop.f32.mrb[0].mxu0
      %v946 = vadd.f32 %v315, %v945
      %v947 = vpop.f32.mrb[0].mxu0
      %v948 = vadd.f32 %v319, %v947
      %949 = vmatprep.mubr.bf16.mxu0 0
      %950 = vmatmul.mubr.bf16.gmra.mrb[0].mxu0 %v736
      %v951 = vpop.f32.mrb[0].mxu0
      %v952 = vadd.f32 %v315, %v951
      %v953 = vpop.f32.mrb[0].mxu0
      %v954 = vadd.f32 %v319, %v953
      %v955 = vpop.f32.mrb[0].mxu0
      %v956 = vadd.f32 %v315, %v955
      %v957 = vpop.f32.mrb[0].mxu0
      %v958 = vadd.f32 %v319, %v957
      %959 = vmatprep.mubr.bf16.mxu0 0
      %960 = vmatmul.mubr.bf16.gmra.mrb[0].mxu0 %v739
      %v961 = vpop.f32.mrb[0].mxu0
      %v962 = vadd.f32 %v315, %v961
      %v963 = vpop.f32.mrb[0].mxu0
      %v964 = vadd.f32 %v319, %v963
      %v965 = vpop.f32.mrb[0].mxu0
      %v966 = vadd.f32 %v315, %v965
      %v967 = vpop.f32.mrb[0].mxu0
      %v968 = vadd.f32 %v319, %v967
      %969 = vmatprep.mubr.bf16.mxu0 0
      %970 = vmatmul.mubr.bf16.gmra.mrb[0].mxu0 %v742
      %v971 = vpop.f32.mrb[0].mxu0
      %v972 = vadd.f32 %v315, %v971
      %v973 = vpop.f32.mrb[0].mxu0
      %v974 = vadd.f32 %v319, %v973
      %v975 = vpop.f32.mrb[0].mxu0
      %v976 = vadd.f32 %v315, %v975
      %v977 = vpop.f32.mrb[0].mxu0
      %v978 = vadd.f32 %v319, %v977
      %979 = vmatprep.mubr.bf16.mxu0 0
      %980 = vmatmul.mubr.bf16.gmra.mrb[0].mxu0 %v745
      %v981 = vpop.f32.mrb[0].mxu0
      %v982 = vadd.f32 %v315, %v981
      %v983 = vpop.f32.mrb[0].mxu0
      %v984 = vadd.f32 %v319, %v983
      %v985 = vpop.f32.mrb[0].mxu0
      %v986 = vadd.f32 %v315, %v985
      %v987 = vpop.f32.mrb[0].mxu0
      %v988 = vadd.f32 %v319, %v987
      %989 = vmatprep.mubr.bf16.mxu0 0
      %990 = vmatmul.mubr.bf16.gmra.mrb[0].mxu0 %v748
      %v991 = vpop.f32.mrb[0].mxu0
      %v992 = vadd.f32 %v315, %v991
      %v993 = vpop.f32.mrb[0].mxu0
      %v994 = vadd.f32 %v319, %v993
      %v995 = vpop.f32.mrb[0].mxu0
      %v996 = vadd.f32 %v315, %v995
      %v997 = vpop.f32.mrb[0].mxu0
      %v998 = vadd.f32 %v319, %v997
      %999 = vmatprep.mubr.bf16.mxu0 0
      %1000 = vmatmul.mubr.bf16.gmra.mrb[0].mxu0 %v751
      %v1001 = vpop.f32.mrb[0].mxu0
      %v1002 = vadd.f32 %v315, %v1001
      %v1003 = vpop.f32.mrb[0].mxu0
      %v1004 = vadd.f32 %v319, %v1003
      %v1005 = vpop.f32.mrb[0].mxu0
      %v1006 = vadd.f32 %v315, %v1005
      %v1007 = vpop.f32.mrb[0].mxu0
      %v1008 = vadd.f32 %v319, %v1007
      %1009 = vmatprep.mubr.bf16.mxu0 0
      %1010 = vmatmul.mubr.bf16.gmra.mrb[0].mxu0 %v754
      %v1011 = vpop.f32.mrb[0].mxu0
      %v1012 = vadd.f32 %v315, %v1011
      %v1013 = vpop.f32.mrb[0].mxu0
      %v1014 = vadd.f32 %v319, %v1013
      %v1015 = vpop.f32.mrb[0].mxu0
      %v1016 = vadd.f32 %v315, %v1015
      %v1017 = vpop.f32.mrb[0].mxu0
      %v1018 = vadd.f32 %v319, %v1017
      %1019 = vmatprep.mubr.bf16.mxu0 0
      %1020 = vmatmul.mubr.bf16.gmra.mrb[0].mxu0 %v757
      %v1021 = vpop.f32.mrb[0].mxu0
      %v1022 = vadd.f32 %v315, %v1021
      %v1023 = vpop.f32.mrb[0].mxu0
      %v1024 = vadd.f32 %v319, %v1023
      %v1025 = vpop.f32.mrb[0].mxu0
      %v1026 = vadd.f32 %v315, %v1025
      %v1027 = vpop.f32.mrb[0].mxu0
      %v1028 = vadd.f32 %v319, %v1027
      %1029 = vmatprep.mubr.bf16.mxu0 0
      %1030 = vmatmul.mubr.bf16.gmra.mrb[0].mxu0 %v760
      %v1031 = vpop.f32.mrb[0].mxu0
      %v1032 = vadd.f32 %v315, %v1031
      %v1033 = vpop.f32.mrb[0].mxu0
      %v1034 = vadd.f32 %v319, %v1033
      %v1035 = vpop.f32.mrb[0].mxu0
      %v1036 = vadd.f32 %v315, %v1035
      %v1037 = vpop.f32.mrb[0].mxu0
      %v1038 = vadd.f32 %v319, %v1037
      %1039 = vmatprep.mubr.bf16.mxu0 0
      %1040 = vmatmul.mubr.bf16.gmra.mrb[0].mxu0 %v763
      %v1041 = vpop.f32.mrb[0].mxu0
      %v1042 = vadd.f32 %v315, %v1041
      %v1043 = vpop.f32.mrb[0].mxu0
      %v1044 = vadd.f32 %v319, %v1043
      %v1045 = vpop.f32.mrb[0].mxu0
      %v1046 = vadd.f32 %v315, %v1045
      %v1047 = vpop.f32.mrb[0].mxu0
      %v1048 = vadd.f32 %v319, %v1047
      %1049 = vmatprep.mubr.bf16.mxu0 0
      %1050 = vmatmul.mubr.bf16.gmra.mrb[0].mxu0 %v766
      %v1051 = vpop.f32.mrb[0].mxu0
      %v1052 = vadd.f32 %v315, %v1051
      %v1053 = vpop.f32.mrb[0].mxu0
      %v1054 = vadd.f32 %v319, %v1053
      %v1055 = vpop.f32.mrb[0].mxu0
      %v1056 = vadd.f32 %v315, %v1055
      %v1057 = vpop.f32.mrb[0].mxu0
      %v1058 = vadd.f32 %v319, %v1057
      %1059 = vmatprep.mubr.bf16.mxu0 0
      %1060 = vmatmul.mubr.bf16.gmra.mrb[0].mxu0 %v769
      %v1061 = vpop.f32.mrb[0].mxu0
      %v1062 = vadd.f32 %v315, %v1061
      %v1063 = vpop.f32.mrb[0].mxu0
      %v1064 = vadd.f32 %v319, %v1063
      %v1065 = vpop.f32.mrb[0].mxu0
      %v1066 = vadd.f32 %v315, %v1065
      %v1067 = vpop.f32.mrb[0].mxu0
      %v1068 = vadd.f32 %v319, %v1067
      %1069 = vmatprep.mubr.bf16.mxu0 0
      %1070 = vmatmul.mubr.bf16.gmra.mrb[0].mxu0 %v772
      %v1071 = vpop.f32.mrb[0].mxu0
      %v1072 = vadd.f32 %v315, %v1071
      %v1073 = vpop.f32.mrb[0].mxu0
      %v1074 = vadd.f32 %v319, %v1073
      %v1075 = vpop.f32.mrb[0].mxu0
      %v1076 = vadd.f32 %v315, %v1075
      %v1077 = vpop.f32.mrb[0].mxu0
      %v1078 = vadd.f32 %v319, %v1077
      %1079 = vmatprep.mubr.bf16.mxu0 0
      %1080 = vmatmul.mubr.bf16.gmra.mrb[0].mxu0 %v775
      %v1081 = vpop.f32.mrb[0].mxu0
      %v1082 = vadd.f32 %v315, %v1081
      %v1083 = vpop.f32.mrb[0].mxu0
      %v1084 = vadd.f32 %v319, %v1083
      %v1085 = vpop.f32.mrb[0].mxu0
      %v1086 = vadd.f32 %v315, %v1085
      %v1087 = vpop.f32.mrb[0].mxu0
      %v1088 = vadd.f32 %v319, %v1087
      %1089 = vdwg.mxu0
      %1090 = vmatprep.subr.bf16.mxu0 %v631
      %1091 = vmatpush1.bf16.msra.mxu0 %v630
      %1092 = vmatprep.subr.bf16.mxu0 %v647
      %1093 = vmatpush1.bf16.msra.mxu0 %v646
      %1094 = vmatprep.subr.bf16.mxu0 0
      %1095 = vmatpush1.bf16.msra.mxu0 0
      %1096 = vmatprep.subr.bf16.mxu0 0
      %1097 = vmatpush1.bf16.msra.mxu0 0
      %1098 = vmatprep.subr.bf16.mxu0 0
      %1099 = vmatpush1.bf16.msra.mxu0 0
      %1100 = vmatprep.subr.bf16.mxu0 0
      %1101 = vmatpush1.bf16.msra.mxu0 0
      %1102 = vmatprep.subr.bf16.mxu0 0
      %1103 = vmatpush1.bf16.msra.mxu0 0
      %1104 = vmatprep.subr.bf16.mxu0 0
      %1105 = vmatpush1.bf16.msra.mxu0 0
      %1106 = vmatprep.subr.bf16.mxu0 0
      %1107 = vmatpush1.bf16.msra.mxu0 0
      %1108 = vmatprep.subr.bf16.mxu0 0
      %1109 = vmatpush1.bf16.msra.mxu0 0
      %1110 = vmatprep.subr.bf16.mxu0 0
      %1111 = vmatpush1.bf16.msra.mxu0 0
      %1112 = vmatprep.subr.bf16.mxu0 0
      %1113 = vmatpush1.bf16.msra.mxu0 0
      %1114 = vmatprep.subr.bf16.mxu0 0
      %1115 = vmatpush1.bf16.msra.mxu0 0
      %1116 = vmatprep.subr.bf16.mxu0 0
      %1117 = vmatpush1.bf16.msra.mxu0 0
      %1118 = vmatprep.subr.bf16.mxu0 0
      %1119 = vmatpush1.bf16.msra.mxu0 0
      %1120 = vmatprep.subr.bf16.mxu0 0
      %1121 = vmatpush1.bf16.msra.mxu0 0
      %1122 = vmatprep.mubr.bf16.mxu0 0
      %1123 = vmatmul.mubr.bf16.gmra.mrb[0].mxu0 %v694
      %v1124 = vpop.f32.mrb[0].mxu0
      %v1125 = vadd.f32 %v323, %v1124
      %v1126 = vpop.f32.mrb[0].mxu0
      %v1127 = vadd.f32 %v327, %v1126
      %v1128 = vpop.f32.mrb[0].mxu0
      %v1129 = vadd.f32 %v323, %v1128
      %v1130 = vpop.f32.mrb[0].mxu0
      %v1131 = vadd.f32 %v327, %v1130
      %1132 = vmatprep.mubr.bf16.mxu0 0
      %1133 = vmatmul.mubr.bf16.gmra.mrb[0].mxu0 %v697
      %v1134 = vpop.f32.mrb[0].mxu0
      %v1135 = vadd.f32 %v323, %v1134
      %v1136 = vpop.f32.mrb[0].mxu0
      %v1137 = vadd.f32 %v327, %v1136
      %v1138 = vpop.f32.mrb[0].mxu0
      %v1139 = vadd.f32 %v323, %v1138
      %v1140 = vpop.f32.mrb[0].mxu0
      %v1141 = vadd.f32 %v327, %v1140
      %1142 = vmatprep.mubr.bf16.mxu0 0
      %1143 = vmatmul.mubr.bf16.gmra.mrb[0].mxu0 %v700
      %v1144 = vpop.f32.mrb[0].mxu0
      %v1145 = vadd.f32 %v323, %v1144
      %v1146 = vpop.f32.mrb[0].mxu0
      %v1147 = vadd.f32 %v327, %v1146
      %v1148 = vpop.f32.mrb[0].mxu0
      %v1149 = vadd.f32 %v323, %v1148
      %v1150 = vpop.f32.mrb[0].mxu0
      %v1151 = vadd.f32 %v327, %v1150
      %1152 = vmatprep.mubr.bf16.mxu0 0
      %1153 = vmatmul.mubr.bf16.gmra.mrb[0].mxu0 %v703
      %v1154 = vpop.f32.mrb[0].mxu0
      %v1155 = vadd.f32 %v323, %v1154
      %v1156 = vpop.f32.mrb[0].mxu0
      %v1157 = vadd.f32 %v327, %v1156
      %v1158 = vpop.f32.mrb[0].mxu0
      %v1159 = vadd.f32 %v323, %v1158
      %v1160 = vpop.f32.mrb[0].mxu0
      %v1161 = vadd.f32 %v327, %v1160
      %1162 = vmatprep.mubr.bf16.mxu0 0
      %1163 = vmatmul.mubr.bf16.gmra.mrb[0].mxu0 %v706
      %v1164 = vpop.f32.mrb[0].mxu0
      %v1165 = vadd.f32 %v323, %v1164
      %v1166 = vpop.f32.mrb[0].mxu0
      %v1167 = vadd.f32 %v327, %v1166
      %v1168 = vpop.f32.mrb[0].mxu0
      %v1169 = vadd.f32 %v323, %v1168
      %v1170 = vpop.f32.mrb[0].mxu0
      %v1171 = vadd.f32 %v327, %v1170
      %1172 = vmatprep.mubr.bf16.mxu0 0
      %1173 = vmatmul.mubr.bf16.gmra.mrb[0].mxu0 %v709
      %v1174 = vpop.f32.mrb[0].mxu0
      %v1175 = vadd.f32 %v323, %v1174
      %v1176 = vpop.f32.mrb[0].mxu0
      %v1177 = vadd.f32 %v327, %v1176
      %v1178 = vpop.f32.mrb[0].mxu0
      %v1179 = vadd.f32 %v323, %v1178
      %v1180 = vpop.f32.mrb[0].mxu0
      %v1181 = vadd.f32 %v327, %v1180
      %1182 = vmatprep.mubr.bf16.mxu0 0
      %1183 = vmatmul.mubr.bf16.gmra.mrb[0].mxu0 %v712
      %v1184 = vpop.f32.mrb[0].mxu0
      %v1185 = vadd.f32 %v323, %v1184
      %v1186 = vpop.f32.mrb[0].mxu0
      %v1187 = vadd.f32 %v327, %v1186
      %v1188 = vpop.f32.mrb[0].mxu0
      %v1189 = vadd.f32 %v323, %v1188
      %v1190 = vpop.f32.mrb[0].mxu0
      %v1191 = vadd.f32 %v327, %v1190
      %1192 = vmatprep.mubr.bf16.mxu0 0
      %1193 = vmatmul.mubr.bf16.gmra.mrb[0].mxu0 %v715
      %v1194 = vpop.f32.mrb[0].mxu0
      %v1195 = vadd.f32 %v323, %v1194
      %v1196 = vpop.f32.mrb[0].mxu0
      %v1197 = vadd.f32 %v327, %v1196
      %v1198 = vpop.f32.mrb[0].mxu0
      %v1199 = vadd.f32 %v323, %v1198
      %v1200 = vpop.f32.mrb[0].mxu0
      %v1201 = vadd.f32 %v327, %v1200
      %1202 = vmatprep.mubr.bf16.mxu0 0
      %1203 = vmatmul.mubr.bf16.gmra.mrb[0].mxu0 %v718
      %v1204 = vpop.f32.mrb[0].mxu0
      %v1205 = vadd.f32 %v323, %v1204
      %v1206 = vpop.f32.mrb[0].mxu0
      %v1207 = vadd.f32 %v327, %v1206
      %v1208 = vpop.f32.mrb[0].mxu0
      %v1209 = vadd.f32 %v323, %v1208
      %v1210 = vpop.f32.mrb[0].mxu0
      %v1211 = vadd.f32 %v327, %v1210
      %1212 = vmatprep.mubr.bf16.mxu0 0
      %1213 = vmatmul.mubr.bf16.gmra.mrb[0].mxu0 %v721
      %v1214 = vpop.f32.mrb[0].mxu0
      %v1215 = vadd.f32 %v323, %v1214
      %v1216 = vpop.f32.mrb[0].mxu0
      %v1217 = vadd.f32 %v327, %v1216
      %v1218 = vpop.f32.mrb[0].mxu0
      %v1219 = vadd.f32 %v323, %v1218
      %v1220 = vpop.f32.mrb[0].mxu0
      %v1221 = vadd.f32 %v327, %v1220
      %1222 = vmatprep.mubr.bf16.mxu0 0
      %1223 = vmatmul.mubr.bf16.gmra.mrb[0].mxu0 %v724
      %v1224 = vpop.f32.mrb[0].mxu0
      %v1225 = vadd.f32 %v323, %v1224
      %v1226 = vpop.f32.mrb[0].mxu0
      %v1227 = vadd.f32 %v327, %v1226
      %v1228 = vpop.f32.mrb[0].mxu0
      %v1229 = vadd.f32 %v323, %v1228
      %v1230 = vpop.f32.mrb[0].mxu0
      %v1231 = vadd.f32 %v327, %v1230
      %1232 = vmatprep.mubr.bf16.mxu0 0
      %1233 = vmatmul.mubr.bf16.gmra.mrb[0].mxu0 %v727
      %v1234 = vpop.f32.mrb[0].mxu0
      %v1235 = vadd.f32 %v323, %v1234
      %v1236 = vpop.f32.mrb[0].mxu0
      %v1237 = vadd.f32 %v327, %v1236
      %v1238 = vpop.f32.mrb[0].mxu0
      %v1239 = vadd.f32 %v323, %v1238
      %v1240 = vpop.f32.mrb[0].mxu0
      %v1241 = vadd.f32 %v327, %v1240
      %1242 = vmatprep.mubr.bf16.mxu0 0
      %1243 = vmatmul.mubr.bf16.gmra.mrb[0].mxu0 %v730
      %v1244 = vpop.f32.mrb[0].mxu0
      %v1245 = vadd.f32 %v323, %v1244
      %v1246 = vpop.f32.mrb[0].mxu0
      %v1247 = vadd.f32 %v327, %v1246
      %v1248 = vpop.f32.mrb[0].mxu0
      %v1249 = vadd.f32 %v323, %v1248
      %v1250 = vpop.f32.mrb[0].mxu0
      %v1251 = vadd.f32 %v327, %v1250
      %1252 = vmatprep.mubr.bf16.mxu0 0
      %1253 = vmatmul.mubr.bf16.gmra.mrb[0].mxu0 %v733
      %v1254 = vpop.f32.mrb[0].mxu0
      %v1255 = vadd.f32 %v323, %v1254
      %v1256 = vpop.f32.mrb[0].mxu0
      %v1257 = vadd.f32 %v327, %v1256
      %v1258 = vpop.f32.mrb[0].mxu0
      %v1259 = vadd.f32 %v323, %v1258
      %v1260 = vpop.f32.mrb[0].mxu0
      %v1261 = vadd.f32 %v327, %v1260
      %1262 = vmatprep.mubr.bf16.mxu0 0
      %1263 = vmatmul.mubr.bf16.gmra.mrb[0].mxu0 %v736
      %v1264 = vpop.f32.mrb[0].mxu0
      %v1265 = vadd.f32 %v323, %v1264
      %v1266 = vpop.f32.mrb[0].mxu0
      %v1267 = vadd.f32 %v327, %v1266
      %v1268 = vpop.f32.mrb[0].mxu0
      %v1269 = vadd.f32 %v323, %v1268
      %v1270 = vpop.f32.mrb[0].mxu0
      %v1271 = vadd.f32 %v327, %v1270
      %1272 = vmatprep.mubr.bf16.mxu0 0
      %1273 = vmatmul.mubr.bf16.gmra.mrb[0].mxu0 %v739
      %v1274 = vpop.f32.mrb[0].mxu0
      %v1275 = vadd.f32 %v323, %v1274
      %v1276 = vpop.f32.mrb[0].mxu0
      %v1277 = vadd.f32 %v327, %v1276
      %v1278 = vpop.f32.mrb[0].mxu0
      %v1279 = vadd.f32 %v323, %v1278
      %v1280 = vpop.f32.mrb[0].mxu0
      %v1281 = vadd.f32 %v327, %v1280
      %1282 = vmatprep.mubr.bf16.mxu0 0
      %1283 = vmatmul.mubr.bf16.gmra.mrb[0].mxu0 %v742
      %v1284 = vpop.f32.mrb[0].mxu0
      %v1285 = vadd.f32 %v323, %v1284
      %v1286 = vpop.f32.mrb[0].mxu0
      %v1287 = vadd.f32 %v327, %v1286
      %v1288 = vpop.f32.mrb[0].mxu0
      %v1289 = vadd.f32 %v323, %v1288
      %v1290 = vpop.f32.mrb[0].mxu0
      %v1291 = vadd.f32 %v327, %v1290
      %1292 = vmatprep.mubr.bf16.mxu0 0
      %1293 = vmatmul.mubr.bf16.gmra.mrb[0].mxu0 %v745
      %v1294 = vpop.f32.mrb[0].mxu0
      %v1295 = vadd.f32 %v323, %v1294
      %v1296 = vpop.f32.mrb[0].mxu0
      %v1297 = vadd.f32 %v327, %v1296
      %v1298 = vpop.f32.mrb[0].mxu0
      %v1299 = vadd.f32 %v323, %v1298
      %v1300 = vpop.f32.mrb[0].mxu0
      %v1301 = vadd.f32 %v327, %v1300
      %1302 = vmatprep.mubr.bf16.mxu0 0
      %1303 = vmatmul.mubr.bf16.gmra.mrb[0].mxu0 %v748
      %v1304 = vpop.f32.mrb[0].mxu0
      %v1305 = vadd.f32 %v323, %v1304
      %v1306 = vpop.f32.mrb[0].mxu0
      %v1307 = vadd.f32 %v327, %v1306
      %v1308 = vpop.f32.mrb[0].mxu0
      %v1309 = vadd.f32 %v323, %v1308
      %v1310 = vpop.f32.mrb[0].mxu0
      %v1311 = vadd.f32 %v327, %v1310
      %1312 = vmatprep.mubr.bf16.mxu0 0
      %1313 = vmatmul.mubr.bf16.gmra.mrb[0].mxu0 %v751
      %v1314 = vpop.f32.mrb[0].mxu0
      %v1315 = vadd.f32 %v323, %v1314
      %v1316 = vpop.f32.mrb[0].mxu0
      %v1317 = vadd.f32 %v327, %v1316
      %v1318 = vpop.f32.mrb[0].mxu0
      %v1319 = vadd.f32 %v323, %v1318
      %v1320 = vpop.f32.mrb[0].mxu0
      %v1321 = vadd.f32 %v327, %v1320
      %1322 = vmatprep.mubr.bf16.mxu0 0
      %1323 = vmatmul.mubr.bf16.gmra.mrb[0].mxu0 %v754
      %v1324 = vpop.f32.mrb[0].mxu0
      %v1325 = vadd.f32 %v323, %v1324
      %v1326 = vpop.f32.mrb[0].mxu0
      %v1327 = vadd.f32 %v327, %v1326
      %v1328 = vpop.f32.mrb[0].mxu0
      %v1329 = vadd.f32 %v323, %v1328
      %v1330 = vpop.f32.mrb[0].mxu0
      %v1331 = vadd.f32 %v327, %v1330
      %1332 = vmatprep.mubr.bf16.mxu0 0
      %1333 = vmatmul.mubr.bf16.gmra.mrb[0].mxu0 %v757
      %v1334 = vpop.f32.mrb[0].mxu0
      %v1335 = vadd.f32 %v323, %v1334
      %v1336 = vpop.f32.mrb[0].mxu0
      %v1337 = vadd.f32 %v327, %v1336
      %v1338 = vpop.f32.mrb[0].mxu0
      %v1339 = vadd.f32 %v323, %v1338
      %v1340 = vpop.f32.mrb[0].mxu0
      %v1341 = vadd.f32 %v327, %v1340
      %1342 = vmatprep.mubr.bf16.mxu0 0
      %1343 = vmatmul.mubr.bf16.gmra.mrb[0].mxu0 %v760
      %v1344 = vpop.f32.mrb[0].mxu0
      %v1345 = vadd.f32 %v323, %v1344
      %v1346 = vpop.f32.mrb[0].mxu0
      %v1347 = vadd.f32 %v327, %v1346
      %v1348 = vpop.f32.mrb[0].mxu0
      %v1349 = vadd.f32 %v323, %v1348
      %v1350 = vpop.f32.mrb[0].mxu0
      %v1351 = vadd.f32 %v327, %v1350
      %1352 = vmatprep.mubr.bf16.mxu0 0
      %1353 = vmatmul.mubr.bf16.gmra.mrb[0].mxu0 %v763
      %v1354 = vpop.f32.mrb[0].mxu0
      %v1355 = vadd.f32 %v323, %v1354
      %v1356 = vpop.f32.mrb[0].mxu0
      %v1357 = vadd.f32 %v327, %v1356
      %v1358 = vpop.f32.mrb[0].mxu0
      %v1359 = vadd.f32 %v323, %v1358
      %v1360 = vpop.f32.mrb[0].mxu0
      %v1361 = vadd.f32 %v327, %v1360
      %1362 = vmatprep.mubr.bf16.mxu0 0
      %1363 = vmatmul.mubr.bf16.gmra.mrb[0].mxu0 %v766
      %v1364 = vpop.f32.mrb[0].mxu0
      %v1365 = vadd.f32 %v323, %v1364
      %v1366 = vpop.f32.mrb[0].mxu0
      %v1367 = vadd.f32 %v327, %v1366
      %v1368 = vpop.f32.mrb[0].mxu0
      %v1369 = vadd.f32 %v323, %v1368
      %v1370 = vpop.f32.mrb[0].mxu0
      %v1371 = vadd.f32 %v327, %v1370
      %1372 = vmatprep.mubr.bf16.mxu0 0
      %1373 = vmatmul.mubr.bf16.gmra.mrb[0].mxu0 %v769
      %v1374 = vpop.f32.mrb[0].mxu0
      %v1375 = vadd.f32 %v323, %v1374
      %v1376 = vpop.f32.mrb[0].mxu0
      %v1377 = vadd.f32 %v327, %v1376
      %v1378 = vpop.f32.mrb[0].mxu0
      %v1379 = vadd.f32 %v323, %v1378
      %v1380 = vpop.f32.mrb[0].mxu0
      %v1381 = vadd.f32 %v327, %v1380
      %1382 = vmatprep.mubr.bf16.mxu0 0
      %1383 = vmatmul.mubr.bf16.gmra.mrb[0].mxu0 %v772
      %v1384 = vpop.f32.mrb[0].mxu0
      %v1385 = vadd.f32 %v323, %v1384
      %v1386 = vpop.f32.mrb[0].mxu0
      %v1387 = vadd.f32 %v327, %v1386
      %v1388 = vpop.f32.mrb[0].mxu0
      %v1389 = vadd.f32 %v323, %v1388
      %v1390 = vpop.f32.mrb[0].mxu0
      %v1391 = vadd.f32 %v327, %v1390
      %1392 = vmatprep.mubr.bf16.mxu0 0
      %1393 = vmatmul.mubr.bf16.gmra.mrb[0].mxu0 %v775
      %v1394 = vpop.f32.mrb[0].mxu0
      %v1395 = vadd.f32 %v323, %v1394
      %v1396 = vpop.f32.mrb[0].mxu0
      %v1397 = vadd.f32 %v327, %v1396
      %v1398 = vpop.f32.mrb[0].mxu0
      %v1399 = vadd.f32 %v323, %v1398
      %v1400 = vpop.f32.mrb[0].mxu0
      %v1401 = vadd.f32 %v327, %v1400
      %1402 = vdwg.mxu0
      %1403 = vmatprep.subr.bf16.mxu0 %v633
      %1404 = vmatpush1.bf16.msra.mxu0 %v632
      %1405 = vmatprep.subr.bf16.mxu0 %v649
      %1406 = vmatpush1.bf16.msra.mxu0 %v648
      %1407 = vmatprep.subr.bf16.mxu0 0
      %1408 = vmatpush1.bf16.msra.mxu0 0
      %1409 = vmatprep.subr.bf16.mxu0 0
      %1410 = vmatpush1.bf16.msra.mxu0 0
      %1411 = vmatprep.subr.bf16.mxu0 0
      %1412 = vmatpush1.bf16.msra.mxu0 0
      %1413 = vmatprep.subr.bf16.mxu0 0
      %1414 = vmatpush1.bf16.msra.mxu0 0
      %1415 = vmatprep.subr.bf16.mxu0 0
      %1416 = vmatpush1.bf16.msra.mxu0 0
      %1417 = vmatprep.subr.bf16.mxu0 0
      %1418 = vmatpush1.bf16.msra.mxu0 0
      %1419 = vmatprep.subr.bf16.mxu0 0
      %1420 = vmatpush1.bf16.msra.mxu0 0
      %1421 = vmatprep.subr.bf16.mxu0 0
      %1422 = vmatpush1.bf16.msra.mxu0 0
      %1423 = vmatprep.subr.bf16.mxu0 0
      %1424 = vmatpush1.bf16.msra.mxu0 0
      %1425 = vmatprep.subr.bf16.mxu0 0
      %1426 = vmatpush1.bf16.msra.mxu0 0
      %1427 = vmatprep.subr.bf16.mxu0 0
      %1428 = vmatpush1.bf16.msra.mxu0 0
      %1429 = vmatprep.subr.bf16.mxu0 0
      %1430 = vmatpush1.bf16.msra.mxu0 0
      %1431 = vmatprep.subr.bf16.mxu0 0
      %1432 = vmatpush1.bf16.msra.mxu0 0
      %1433 = vmatprep.subr.bf16.mxu0 0
      %1434 = vmatpush1.bf16.msra.mxu0 0
      %1435 = vmatprep.mubr.bf16.mxu0 0
      %1436 = vmatmul.mubr.bf16.gmra.mrb[0].mxu0 %v694
      %v1437 = vpop.f32.mrb[0].mxu0
      %v1438 = vadd.f32 %v331, %v1437
      %v1439 = vpop.f32.mrb[0].mxu0
      %v1440 = vadd.f32 %v335, %v1439
      %v1441 = vpop.f32.mrb[0].mxu0
      %v1442 = vadd.f32 %v331, %v1441
      %v1443 = vpop.f32.mrb[0].mxu0
      %v1444 = vadd.f32 %v335, %v1443
      %1445 = vmatprep.mubr.bf16.mxu0 0
      %1446 = vmatmul.mubr.bf16.gmra.mrb[0].mxu0 %v697
      %v1447 = vpop.f32.mrb[0].mxu0
      %v1448 = vadd.f32 %v331, %v1447
      %v1449 = vpop.f32.mrb[0].mxu0
      %v1450 = vadd.f32 %v335, %v1449
      %v1451 = vpop.f32.mrb[0].mxu0
      %v1452 = vadd.f32 %v331, %v1451
      %v1453 = vpop.f32.mrb[0].mxu0
      %v1454 = vadd.f32 %v335, %v1453
      %1455 = vmatprep.mubr.bf16.mxu0 0
      %1456 = vmatmul.mubr.bf16.gmra.mrb[0].mxu0 %v700
      %v1457 = vpop.f32.mrb[0].mxu0
      %v1458 = vadd.f32 %v331, %v1457
      %v1459 = vpop.f32.mrb[0].mxu0
      %v1460 = vadd.f32 %v335, %v1459
      %v1461 = vpop.f32.mrb[0].mxu0
      %v1462 = vadd.f32 %v331, %v1461
      %v1463 = vpop.f32.mrb[0].mxu0
      %v1464 = vadd.f32 %v335, %v1463
      %1465 = vmatprep.mubr.bf16.mxu0 0
      %1466 = vmatmul.mubr.bf16.gmra.mrb[0].mxu0 %v703
      %v1467 = vpop.f32.mrb[0].mxu0
      %v1468 = vadd.f32 %v331, %v1467
      %v1469 = vpop.f32.mrb[0].mxu0
      %v1470 = vadd.f32 %v335, %v1469
      %v1471 = vpop.f32.mrb[0].mxu0
      %v1472 = vadd.f32 %v331, %v1471
      %v1473 = vpop.f32.mrb[0].mxu0
      %v1474 = vadd.f32 %v335, %v1473
      %1475 = vmatprep.mubr.bf16.mxu0 0
      %1476 = vmatmul.mubr.bf16.gmra.mrb[0].mxu0 %v706
      %v1477 = vpop.f32.mrb[0].mxu0
      %v1478 = vadd.f32 %v331, %v1477
      %v1479 = vpop.f32.mrb[0].mxu0
      %v1480 = vadd.f32 %v335, %v1479
      %v1481 = vpop.f32.mrb[0].mxu0
      %v1482 = vadd.f32 %v331, %v1481
      %v1483 = vpop.f32.mrb[0].mxu0
      %v1484 = vadd.f32 %v335, %v1483
      %1485 = vmatprep.mubr.bf16.mxu0 0
      %1486 = vmatmul.mubr.bf16.gmra.mrb[0].mxu0 %v709
      %v1487 = vpop.f32.mrb[0].mxu0
      %v1488 = vadd.f32 %v331, %v1487
      %v1489 = vpop.f32.mrb[0].mxu0
      %v1490 = vadd.f32 %v335, %v1489
      %v1491 = vpop.f32.mrb[0].mxu0
      %v1492 = vadd.f32 %v331, %v1491
      %v1493 = vpop.f32.mrb[0].mxu0
      %v1494 = vadd.f32 %v335, %v1493
      %1495 = vmatprep.mubr.bf16.mxu0 0
      %1496 = vmatmul.mubr.bf16.gmra.mrb[0].mxu0 %v712
      %v1497 = vpop.f32.mrb[0].mxu0
      %v1498 = vadd.f32 %v331, %v1497
      %v1499 = vpop.f32.mrb[0].mxu0
      %v1500 = vadd.f32 %v335, %v1499
      %v1501 = vpop.f32.mrb[0].mxu0
      %v1502 = vadd.f32 %v331, %v1501
      %v1503 = vpop.f32.mrb[0].mxu0
      %v1504 = vadd.f32 %v335, %v1503
      %1505 = vmatprep.mubr.bf16.mxu0 0
      %1506 = vmatmul.mubr.bf16.gmra.mrb[0].mxu0 %v715
      %v1507 = vpop.f32.mrb[0].mxu0
      %v1508 = vadd.f32 %v331, %v1507
      %v1509 = vpop.f32.mrb[0].mxu0
      %v1510 = vadd.f32 %v335, %v1509
      %v1511 = vpop.f32.mrb[0].mxu0
      %v1512 = vadd.f32 %v331, %v1511
      %v1513 = vpop.f32.mrb[0].mxu0
      %v1514 = vadd.f32 %v335, %v1513
      %1515 = vmatprep.mubr.bf16.mxu0 0
      %1516 = vmatmul.mubr.bf16.gmra.mrb[0].mxu0 %v718
      %v1517 = vpop.f32.mrb[0].mxu0
      %v1518 = vadd.f32 %v331, %v1517
      %v1519 = vpop.f32.mrb[0].mxu0
      %v1520 = vadd.f32 %v335, %v1519
      %v1521 = vpop.f32.mrb[0].mxu0
      %v1522 = vadd.f32 %v331, %v1521
      %v1523 = vpop.f32.mrb[0].mxu0
      %v1524 = vadd.f32 %v335, %v1523
      %1525 = vmatprep.mubr.bf16.mxu0 0
      %1526 = vmatmul.mubr.bf16.gmra.mrb[0].mxu0 %v721
      %v1527 = vpop.f32.mrb[0].mxu0
      %v1528 = vadd.f32 %v331, %v1527
      %v1529 = vpop.f32.mrb[0].mxu0
      %v1530 = vadd.f32 %v335, %v1529
      %v1531 = vpop.f32.mrb[0].mxu0
      %v1532 = vadd.f32 %v331, %v1531
      %v1533 = vpop.f32.mrb[0].mxu0
      %v1534 = vadd.f32 %v335, %v1533
      %1535 = vmatprep.mubr.bf16.mxu0 0
      %1536 = vmatmul.mubr.bf16.gmra.mrb[0].mxu0 %v724
      %v1537 = vpop.f32.mrb[0].mxu0
      %v1538 = vadd.f32 %v331, %v1537
      %v1539 = vpop.f32.mrb[0].mxu0
      %v1540 = vadd.f32 %v335, %v1539
      %v1541 = vpop.f32.mrb[0].mxu0
      %v1542 = vadd.f32 %v331, %v1541
      %v1543 = vpop.f32.mrb[0].mxu0
      %v1544 = vadd.f32 %v335, %v1543
      %1545 = vmatprep.mubr.bf16.mxu0 0
      %1546 = vmatmul.mubr.bf16.gmra.mrb[0].mxu0 %v727
      %v1547 = vpop.f32.mrb[0].mxu0
      %v1548 = vadd.f32 %v331, %v1547
      %v1549 = vpop.f32.mrb[0].mxu0
      %v1550 = vadd.f32 %v335, %v1549
      %v1551 = vpop.f32.mrb[0].mxu0
      %v1552 = vadd.f32 %v331, %v1551
      %v1553 = vpop.f32.mrb[0].mxu0
      %v1554 = vadd.f32 %v335, %v1553
      %1555 = vmatprep.mubr.bf16.mxu0 0
      %1556 = vmatmul.mubr.bf16.gmra.mrb[0].mxu0 %v730
      %v1557 = vpop.f32.mrb[0].mxu0
      %v1558 = vadd.f32 %v331, %v1557
      %v1559 = vpop.f32.mrb[0].mxu0
      %v1560 = vadd.f32 %v335, %v1559
      %v1561 = vpop.f32.mrb[0].mxu0
      %v1562 = vadd.f32 %v331, %v1561
      %v1563 = vpop.f32.mrb[0].mxu0
      %v1564 = vadd.f32 %v335, %v1563
      %1565 = vmatprep.mubr.bf16.mxu0 0
      %1566 = vmatmul.mubr.bf16.gmra.mrb[0].mxu0 %v733
      %v1567 = vpop.f32.mrb[0].mxu0
      %v1568 = vadd.f32 %v331, %v1567
      %v1569 = vpop.f32.mrb[0].mxu0
      %v1570 = vadd.f32 %v335, %v1569
      %v1571 = vpop.f32.mrb[0].mxu0
      %v1572 = vadd.f32 %v331, %v1571
      %v1573 = vpop.f32.mrb[0].mxu0
      %v1574 = vadd.f32 %v335, %v1573
      %1575 = vmatprep.mubr.bf16.mxu0 0
      %1576 = vmatmul.mubr.bf16.gmra.mrb[0].mxu0 %v736
      %v1577 = vpop.f32.mrb[0].mxu0
      %v1578 = vadd.f32 %v331, %v1577
      %v1579 = vpop.f32.mrb[0].mxu0
      %v1580 = vadd.f32 %v335, %v1579
      %v1581 = vpop.f32.mrb[0].mxu0
      %v1582 = vadd.f32 %v331, %v1581
      %v1583 = vpop.f32.mrb[0].mxu0
      %v1584 = vadd.f32 %v335, %v1583
      %1585 = vmatprep.mubr.bf16.mxu0 0
      %1586 = vmatmul.mubr.bf16.gmra.mrb[0].mxu0 %v739
      %v1587 = vpop.f32.mrb[0].mxu0
      %v1588 = vadd.f32 %v331, %v1587
      %v1589 = vpop.f32.mrb[0].mxu0
      %v1590 = vadd.f32 %v335, %v1589
      %v1591 = vpop.f32.mrb[0].mxu0
      %v1592 = vadd.f32 %v331, %v1591
      %v1593 = vpop.f32.mrb[0].mxu0
      %v1594 = vadd.f32 %v335, %v1593
      %1595 = vmatprep.mubr.bf16.mxu0 0
      %1596 = vmatmul.mubr.bf16.gmra.mrb[0].mxu0 %v742
      %v1597 = vpop.f32.mrb[0].mxu0
      %v1598 = vadd.f32 %v331, %v1597
      %v1599 = vpop.f32.mrb[0].mxu0
      %v1600 = vadd.f32 %v335, %v1599
      %v1601 = vpop.f32.mrb[0].mxu0
      %v1602 = vadd.f32 %v331, %v1601
      %v1603 = vpop.f32.mrb[0].mxu0
      %v1604 = vadd.f32 %v335, %v1603
      %1605 = vmatprep.mubr.bf16.mxu0 0
      %1606 = vmatmul.mubr.bf16.gmra.mrb[0].mxu0 %v745
      %v1607 = vpop.f32.mrb[0].mxu0
      %v1608 = vadd.f32 %v331, %v1607
      %v1609 = vpop.f32.mrb[0].mxu0
      %v1610 = vadd.f32 %v335, %v1609
      %v1611 = vpop.f32.mrb[0].mxu0
      %v1612 = vadd.f32 %v331, %v1611
      %v1613 = vpop.f32.mrb[0].mxu0
      %v1614 = vadd.f32 %v335, %v1613
      %1615 = vmatprep.mubr.bf16.mxu0 0
      %1616 = vmatmul.mubr.bf16.gmra.mrb[0].mxu0 %v748
      %v1617 = vpop.f32.mrb[0].mxu0
      %v1618 = vadd.f32 %v331, %v1617
      %v1619 = vpop.f32.mrb[0].mxu0
      %v1620 = vadd.f32 %v335, %v1619
      %v1621 = vpop.f32.mrb[0].mxu0
      %v1622 = vadd.f32 %v331, %v1621
      %v1623 = vpop.f32.mrb[0].mxu0
      %v1624 = vadd.f32 %v335, %v1623
      %1625 = vmatprep.mubr.bf16.mxu0 0
      %1626 = vmatmul.mubr.bf16.gmra.mrb[0].mxu0 %v751
      %v1627 = vpop.f32.mrb[0].mxu0
      %v1628 = vadd.f32 %v331, %v1627
      %v1629 = vpop.f32.mrb[0].mxu0
      %v1630 = vadd.f32 %v335, %v1629
      %v1631 = vpop.f32.mrb[0].mxu0
      %v1632 = vadd.f32 %v331, %v1631
      %v1633 = vpop.f32.mrb[0].mxu0
      %v1634 = vadd.f32 %v335, %v1633
      %1635 = vmatprep.mubr.bf16.mxu0 0
      %1636 = vmatmul.mubr.bf16.gmra.mrb[0].mxu0 %v754
      %v1637 = vpop.f32.mrb[0].mxu0
      %v1638 = vadd.f32 %v331, %v1637
      %v1639 = vpop.f32.mrb[0].mxu0
      %v1640 = vadd.f32 %v335, %v1639
      %v1641 = vpop.f32.mrb[0].mxu0
      %v1642 = vadd.f32 %v331, %v1641
      %v1643 = vpop.f32.mrb[0].mxu0
      %v1644 = vadd.f32 %v335, %v1643
      %1645 = vmatprep.mubr.bf16.mxu0 0
      %1646 = vmatmul.mubr.bf16.gmra.mrb[0].mxu0 %v757
      %v1647 = vpop.f32.mrb[0].mxu0
      %v1648 = vadd.f32 %v331, %v1647
      %v1649 = vpop.f32.mrb[0].mxu0
      %v1650 = vadd.f32 %v335, %v1649
      %v1651 = vpop.f32.mrb[0].mxu0
      %v1652 = vadd.f32 %v331, %v1651
      %v1653 = vpop.f32.mrb[0].mxu0
      %v1654 = vadd.f32 %v335, %v1653
      %1655 = vmatprep.mubr.bf16.mxu0 0
      %1656 = vmatmul.mubr.bf16.gmra.mrb[0].mxu0 %v760
      %v1657 = vpop.f32.mrb[0].mxu0
      %v1658 = vadd.f32 %v331, %v1657
      %v1659 = vpop.f32.mrb[0].mxu0
      %v1660 = vadd.f32 %v335, %v1659
      %v1661 = vpop.f32.mrb[0].mxu0
      %v1662 = vadd.f32 %v331, %v1661
      %v1663 = vpop.f32.mrb[0].mxu0
      %v1664 = vadd.f32 %v335, %v1663
      %1665 = vmatprep.mubr.bf16.mxu0 0
      %1666 = vmatmul.mubr.bf16.gmra.mrb[0].mxu0 %v763
      %v1667 = vpop.f32.mrb[0].mxu0
      %v1668 = vadd.f32 %v331, %v1667
      %v1669 = vpop.f32.mrb[0].mxu0
      %v1670 = vadd.f32 %v335, %v1669
      %v1671 = vpop.f32.mrb[0].mxu0
      %v1672 = vadd.f32 %v331, %v1671
      %v1673 = vpop.f32.mrb[0].mxu0
      %v1674 = vadd.f32 %v335, %v1673
      %1675 = vmatprep.mubr.bf16.mxu0 0
      %1676 = vmatmul.mubr.bf16.gmra.mrb[0].mxu0 %v766
      %v1677 = vpop.f32.mrb[0].mxu0
      %v1678 = vadd.f32 %v331, %v1677
      %v1679 = vpop.f32.mrb[0].mxu0
      %v1680 = vadd.f32 %v335, %v1679
      %v1681 = vpop.f32.mrb[0].mxu0
      %v1682 = vadd.f32 %v331, %v1681
      %v1683 = vpop.f32.mrb[0].mxu0
      %v1684 = vadd.f32 %v335, %v1683
      %1685 = vmatprep.mubr.bf16.mxu0 0
      %1686 = vmatmul.mubr.bf16.gmra.mrb[0].mxu0 %v769
      %v1687 = vpop.f32.mrb[0].mxu0
      %v1688 = vadd.f32 %v331, %v1687
      %v1689 = vpop.f32.mrb[0].mxu0
      %v1690 = vadd.f32 %v335, %v1689
      %v1691 = vpop.f32.mrb[0].mxu0
      %v1692 = vadd.f32 %v331, %v1691
      %v1693 = vpop.f32.mrb[0].mxu0
      %v1694 = vadd.f32 %v335, %v1693
      %1695 = vmatprep.mubr.bf16.mxu0 0
      %1696 = vmatmul.mubr.bf16.gmra.mrb[0].mxu0 %v772
      %v1697 = vpop.f32.mrb[0].mxu0
      %v1698 = vadd.f32 %v331, %v1697
      %v1699 = vpop.f32.mrb[0].mxu0
      %v1700 = vadd.f32 %v335, %v1699
      %v1701 = vpop.f32.mrb[0].mxu0
      %v1702 = vadd.f32 %v331, %v1701
      %v1703 = vpop.f32.mrb[0].mxu0
      %v1704 = vadd.f32 %v335, %v1703
      %1705 = vmatprep.mubr.bf16.mxu0 0
      %1706 = vmatmul.mubr.bf16.gmra.mrb[0].mxu0 %v775
      %v1707 = vpop.f32.mrb[0].mxu0
      %v1708 = vadd.f32 %v331, %v1707
      %v1709 = vpop.f32.mrb[0].mxu0
      %v1710 = vadd.f32 %v335, %v1709
      %v1711 = vpop.f32.mrb[0].mxu0
      %v1712 = vadd.f32 %v331, %v1711
      %v1713 = vpop.f32.mrb[0].mxu0
      %v1714 = vadd.f32 %v335, %v1713
      %1715 = vdwg.mxu0
      %1716 = vmatprep.subr.bf16.mxu0 %v635
      %1717 = vmatpush1.bf16.msra.mxu0 %v634
      %1718 = vmatprep.subr.bf16.mxu0 %v651
      %1719 = vmatpush1.bf16.msra.mxu0 %v650
      %1720 = vmatprep.subr.bf16.mxu0 0
      %1721 = vmatpush1.bf16.msra.mxu0 0
      %1722 = vmatprep.subr.bf16.mxu0 0
      %1723 = vmatpush1.bf16.msra.mxu0 0
      %1724 = vmatprep.subr.bf16.mxu0 0
      %1725 = vmatpush1.bf16.msra.mxu0 0
      %1726 = vmatprep.subr.bf16.mxu0 0
      %1727 = vmatpush1.bf16.msra.mxu0 0
      %1728 = vmatprep.subr.bf16.mxu0 0
      %1729 = vmatpush1.bf16.msra.mxu0 0
      %1730 = vmatprep.subr.bf16.mxu0 0
      %1731 = vmatpush1.bf16.msra.mxu0 0
      %1732 = vmatprep.subr.bf16.mxu0 0
      %1733 = vmatpush1.bf16.msra.mxu0 0
      %1734 = vmatprep.subr.bf16.mxu0 0
      %1735 = vmatpush1.bf16.msra.mxu0 0
      %1736 = vmatprep.subr.bf16.mxu0 0
      %1737 = vmatpush1.bf16.msra.mxu0 0
      %1738 = vmatprep.subr.bf16.mxu0 0
      %1739 = vmatpush1.bf16.msra.mxu0 0
      %1740 = vmatprep.subr.bf16.mxu0 0
      %1741 = vmatpush1.bf16.msra.mxu0 0
      %1742 = vmatprep.subr.bf16.mxu0 0
      %1743 = vmatpush1.bf16.msra.mxu0 0
      %1744 = vmatprep.subr.bf16.mxu0 0
      %1745 = vmatpush1.bf16.msra.mxu0 0
      %1746 = vmatprep.subr.bf16.mxu0 0
      %1747 = vmatpush1.bf16.msra.mxu0 0
      %1748 = vmatprep.mubr.bf16.mxu0 0
      %1749 = vmatmul.mubr.bf16.gmra.mrb[0].mxu0 %v694
      %v1750 = vpop.f32.mrb[0].mxu0
      %v1751 = vadd.f32 %v339, %v1750
      %v1752 = vpop.f32.mrb[0].mxu0
      %v1753 = vadd.f32 %v343, %v1752
      %v1754 = vpop.f32.mrb[0].mxu0
      %v1755 = vadd.f32 %v339, %v1754
      %v1756 = vpop.f32.mrb[0].mxu0
      %v1757 = vadd.f32 %v343, %v1756
      %1758 = vmatprep.mubr.bf16.mxu0 0
      %1759 = vmatmul.mubr.bf16.gmra.mrb[0].mxu0 %v697
      %v1760 = vpop.f32.mrb[0].mxu0
      %v1761 = vadd.f32 %v339, %v1760
      %v1762 = vpop.f32.mrb[0].mxu0
      %v1763 = vadd.f32 %v343, %v1762
      %v1764 = vpop.f32.mrb[0].mxu0
      %v1765 = vadd.f32 %v339, %v1764
      %v1766 = vpop.f32.mrb[0].mxu0
      %v1767 = vadd.f32 %v343, %v1766
      %1768 = vmatprep.mubr.bf16.mxu0 0
      %1769 = vmatmul.mubr.bf16.gmra.mrb[0].mxu0 %v700
      %v1770 = vpop.f32.mrb[0].mxu0
      %v1771 = vadd.f32 %v339, %v1770
      %v1772 = vpop.f32.mrb[0].mxu0
      %v1773 = vadd.f32 %v343, %v1772
      %v1774 = vpop.f32.mrb[0].mxu0
      %v1775 = vadd.f32 %v339, %v1774
      %v1776 = vpop.f32.mrb[0].mxu0
      %v1777 = vadd.f32 %v343, %v1776
      %1778 = vmatprep.mubr.bf16.mxu0 0
      %1779 = vmatmul.mubr.bf16.gmra.mrb[0].mxu0 %v703
      %v1780 = vpop.f32.mrb[0].mxu0
      %v1781 = vadd.f32 %v339, %v1780
      %v1782 = vpop.f32.mrb[0].mxu0
      %v1783 = vadd.f32 %v343, %v1782
      %v1784 = vpop.f32.mrb[0].mxu0
      %v1785 = vadd.f32 %v339, %v1784
      %v1786 = vpop.f32.mrb[0].mxu0
      %v1787 = vadd.f32 %v343, %v1786
      %1788 = vmatprep.mubr.bf16.mxu0 0
      %1789 = vmatmul.mubr.bf16.gmra.mrb[0].mxu0 %v706
      %v1790 = vpop.f32.mrb[0].mxu0
      %v1791 = vadd.f32 %v339, %v1790
      %v1792 = vpop.f32.mrb[0].mxu0
      %v1793 = vadd.f32 %v343, %v1792
      %v1794 = vpop.f32.mrb[0].mxu0
      %v1795 = vadd.f32 %v339, %v1794
      %v1796 = vpop.f32.mrb[0].mxu0
      %v1797 = vadd.f32 %v343, %v1796
      %1798 = vmatprep.mubr.bf16.mxu0 0
      %1799 = vmatmul.mubr.bf16.gmra.mrb[0].mxu0 %v709
      %v1800 = vpop.f32.mrb[0].mxu0
      %v1801 = vadd.f32 %v339, %v1800
      %v1802 = vpop.f32.mrb[0].mxu0
      %v1803 = vadd.f32 %v343, %v1802
      %v1804 = vpop.f32.mrb[0].mxu0
      %v1805 = vadd.f32 %v339, %v1804
      %v1806 = vpop.f32.mrb[0].mxu0
      %v1807 = vadd.f32 %v343, %v1806
      %1808 = vmatprep.mubr.bf16.mxu0 0
      %1809 = vmatmul.mubr.bf16.gmra.mrb[0].mxu0 %v712
      %v1810 = vpop.f32.mrb[0].mxu0
      %v1811 = vadd.f32 %v339, %v1810
      %v1812 = vpop.f32.mrb[0].mxu0
      %v1813 = vadd.f32 %v343, %v1812
      %v1814 = vpop.f32.mrb[0].mxu0
      %v1815 = vadd.f32 %v339, %v1814
      %v1816 = vpop.f32.mrb[0].mxu0
      %v1817 = vadd.f32 %v343, %v1816
      %1818 = vmatprep.mubr.bf16.mxu0 0
      %1819 = vmatmul.mubr.bf16.gmra.mrb[0].mxu0 %v715
      %v1820 = vpop.f32.mrb[0].mxu0
      %v1821 = vadd.f32 %v339, %v1820
      %v1822 = vpop.f32.mrb[0].mxu0
      %v1823 = vadd.f32 %v343, %v1822
      %v1824 = vpop.f32.mrb[0].mxu0
      %v1825 = vadd.f32 %v339, %v1824
      %v1826 = vpop.f32.mrb[0].mxu0
      %v1827 = vadd.f32 %v343, %v1826
      %1828 = vmatprep.mubr.bf16.mxu0 0
      %1829 = vmatmul.mubr.bf16.gmra.mrb[0].mxu0 %v718
      %v1830 = vpop.f32.mrb[0].mxu0
      %v1831 = vadd.f32 %v339, %v1830
      %v1832 = vpop.f32.mrb[0].mxu0
      %v1833 = vadd.f32 %v343, %v1832
      %v1834 = vpop.f32.mrb[0].mxu0
      %v1835 = vadd.f32 %v339, %v1834
      %v1836 = vpop.f32.mrb[0].mxu0
      %v1837 = vadd.f32 %v343, %v1836
      %1838 = vmatprep.mubr.bf16.mxu0 0
      %1839 = vmatmul.mubr.bf16.gmra.mrb[0].mxu0 %v721
      %v1840 = vpop.f32.mrb[0].mxu0
      %v1841 = vadd.f32 %v339, %v1840
      %v1842 = vpop.f32.mrb[0].mxu0
      %v1843 = vadd.f32 %v343, %v1842
      %v1844 = vpop.f32.mrb[0].mxu0
      %v1845 = vadd.f32 %v339, %v1844
      %v1846 = vpop.f32.mrb[0].mxu0
      %v1847 = vadd.f32 %v343, %v1846
      %1848 = vmatprep.mubr.bf16.mxu0 0
      %1849 = vmatmul.mubr.bf16.gmra.mrb[0].mxu0 %v724
      %v1850 = vpop.f32.mrb[0].mxu0
      %v1851 = vadd.f32 %v339, %v1850
      %v1852 = vpop.f32.mrb[0].mxu0
      %v1853 = vadd.f32 %v343, %v1852
      %v1854 = vpop.f32.mrb[0].mxu0
      %v1855 = vadd.f32 %v339, %v1854
      %v1856 = vpop.f32.mrb[0].mxu0
      %v1857 = vadd.f32 %v343, %v1856
      %1858 = vmatprep.mubr.bf16.mxu0 0
      %1859 = vmatmul.mubr.bf16.gmra.mrb[0].mxu0 %v727
      %v1860 = vpop.f32.mrb[0].mxu0
      %v1861 = vadd.f32 %v339, %v1860
      %v1862 = vpop.f32.mrb[0].mxu0
      %v1863 = vadd.f32 %v343, %v1862
      %v1864 = vpop.f32.mrb[0].mxu0
      %v1865 = vadd.f32 %v339, %v1864
      %v1866 = vpop.f32.mrb[0].mxu0
      %v1867 = vadd.f32 %v343, %v1866
      %1868 = vmatprep.mubr.bf16.mxu0 0
      %1869 = vmatmul.mubr.bf16.gmra.mrb[0].mxu0 %v730
      %v1870 = vpop.f32.mrb[0].mxu0
      %v1871 = vadd.f32 %v339, %v1870
      %v1872 = vpop.f32.mrb[0].mxu0
      %v1873 = vadd.f32 %v343, %v1872
      %v1874 = vpop.f32.mrb[0].mxu0
      %v1875 = vadd.f32 %v339, %v1874
      %v1876 = vpop.f32.mrb[0].mxu0
      %v1877 = vadd.f32 %v343, %v1876
      %1878 = vmatprep.mubr.bf16.mxu0 0
      %1879 = vmatmul.mubr.bf16.gmra.mrb[0].mxu0 %v733
      %v1880 = vpop.f32.mrb[0].mxu0
      %v1881 = vadd.f32 %v339, %v1880
      %v1882 = vpop.f32.mrb[0].mxu0
      %v1883 = vadd.f32 %v343, %v1882
      %v1884 = vpop.f32.mrb[0].mxu0
      %v1885 = vadd.f32 %v339, %v1884
      %v1886 = vpop.f32.mrb[0].mxu0
      %v1887 = vadd.f32 %v343, %v1886
      %1888 = vmatprep.mubr.bf16.mxu0 0
      %1889 = vmatmul.mubr.bf16.gmra.mrb[0].mxu0 %v736
      %v1890 = vpop.f32.mrb[0].mxu0
      %v1891 = vadd.f32 %v339, %v1890
      %v1892 = vpop.f32.mrb[0].mxu0
      %v1893 = vadd.f32 %v343, %v1892
      %v1894 = vpop.f32.mrb[0].mxu0
      %v1895 = vadd.f32 %v339, %v1894
      %v1896 = vpop.f32.mrb[0].mxu0
      %v1897 = vadd.f32 %v343, %v1896
      %1898 = vmatprep.mubr.bf16.mxu0 0
      %1899 = vmatmul.mubr.bf16.gmra.mrb[0].mxu0 %v739
      %v1900 = vpop.f32.mrb[0].mxu0
      %v1901 = vadd.f32 %v339, %v1900
      %v1902 = vpop.f32.mrb[0].mxu0
      %v1903 = vadd.f32 %v343, %v1902
      %v1904 = vpop.f32.mrb[0].mxu0
      %v1905 = vadd.f32 %v339, %v1904
      %v1906 = vpop.f32.mrb[0].mxu0
      %v1907 = vadd.f32 %v343, %v1906
      %1908 = vmatprep.mubr.bf16.mxu0 0
      %1909 = vmatmul.mubr.bf16.gmra.mrb[0].mxu0 %v742
      %v1910 = vpop.f32.mrb[0].mxu0
      %v1911 = vadd.f32 %v339, %v1910
      %v1912 = vpop.f32.mrb[0].mxu0
      %v1913 = vadd.f32 %v343, %v1912
      %v1914 = vpop.f32.mrb[0].mxu0
      %v1915 = vadd.f32 %v339, %v1914
      %v1916 = vpop.f32.mrb[0].mxu0
      %v1917 = vadd.f32 %v343, %v1916
      %1918 = vmatprep.mubr.bf16.mxu0 0
      %1919 = vmatmul.mubr.bf16.gmra.mrb[0].mxu0 %v745
      %v1920 = vpop.f32.mrb[0].mxu0
      %v1921 = vadd.f32 %v339, %v1920
      %v1922 = vpop.f32.mrb[0].mxu0
      %v1923 = vadd.f32 %v343, %v1922
      %v1924 = vpop.f32.mrb[0].mxu0
      %v1925 = vadd.f32 %v339, %v1924
      %v1926 = vpop.f32.mrb[0].mxu0
      %v1927 = vadd.f32 %v343, %v1926
      %1928 = vmatprep.mubr.bf16.mxu0 0
      %1929 = vmatmul.mubr.bf16.gmra.mrb[0].mxu0 %v748
      %v1930 = vpop.f32.mrb[0].mxu0
      %v1931 = vadd.f32 %v339, %v1930
      %v1932 = vpop.f32.mrb[0].mxu0
      %v1933 = vadd.f32 %v343, %v1932
      %v1934 = vpop.f32.mrb[0].mxu0
      %v1935 = vadd.f32 %v339, %v1934
      %v1936 = vpop.f32.mrb[0].mxu0
      %v1937 = vadd.f32 %v343, %v1936
      %1938 = vmatprep.mubr.bf16.mxu0 0
      %1939 = vmatmul.mubr.bf16.gmra.mrb[0].mxu0 %v751
      %v1940 = vpop.f32.mrb[0].mxu0
      %v1941 = vadd.f32 %v339, %v1940
      %v1942 = vpop.f32.mrb[0].mxu0
      %v1943 = vadd.f32 %v343, %v1942
      %v1944 = vpop.f32.mrb[0].mxu0
      %v1945 = vadd.f32 %v339, %v1944
      %v1946 = vpop.f32.mrb[0].mxu0
      %v1947 = vadd.f32 %v343, %v1946
      %1948 = vmatprep.mubr.bf16.mxu0 0
      %1949 = vmatmul.mubr.bf16.gmra.mrb[0].mxu0 %v754
      %v1950 = vpop.f32.mrb[0].mxu0
      %v1951 = vadd.f32 %v339, %v1950
      %v1952 = vpop.f32.mrb[0].mxu0
      %v1953 = vadd.f32 %v343, %v1952
      %v1954 = vpop.f32.mrb[0].mxu0
      %v1955 = vadd.f32 %v339, %v1954
      %v1956 = vpop.f32.mrb[0].mxu0
      %v1957 = vadd.f32 %v343, %v1956
      %1958 = vmatprep.mubr.bf16.mxu0 0
      %1959 = vmatmul.mubr.bf16.gmra.mrb[0].mxu0 %v757
      %v1960 = vpop.f32.mrb[0].mxu0
      %v1961 = vadd.f32 %v339, %v1960
      %v1962 = vpop.f32.mrb[0].mxu0
      %v1963 = vadd.f32 %v343, %v1962
      %v1964 = vpop.f32.mrb[0].mxu0
      %v1965 = vadd.f32 %v339, %v1964
      %v1966 = vpop.f32.mrb[0].mxu0
      %v1967 = vadd.f32 %v343, %v1966
      %1968 = vmatprep.mubr.bf16.mxu0 0
      %1969 = vmatmul.mubr.bf16.gmra.mrb[0].mxu0 %v760
      %v1970 = vpop.f32.mrb[0].mxu0
      %v1971 = vadd.f32 %v339, %v1970
      %v1972 = vpop.f32.mrb[0].mxu0
      %v1973 = vadd.f32 %v343, %v1972
      %v1974 = vpop.f32.mrb[0].mxu0
      %v1975 = vadd.f32 %v339, %v1974
      %v1976 = vpop.f32.mrb[0].mxu0
      %v1977 = vadd.f32 %v343, %v1976
      %1978 = vmatprep.mubr.bf16.mxu0 0
      %1979 = vmatmul.mubr.bf16.gmra.mrb[0].mxu0 %v763
      %v1980 = vpop.f32.mrb[0].mxu0
      %v1981 = vadd.f32 %v339, %v1980
      %v1982 = vpop.f32.mrb[0].mxu0
      %v1983 = vadd.f32 %v343, %v1982
      %v1984 = vpop.f32.mrb[0].mxu0
      %v1985 = vadd.f32 %v339, %v1984
      %v1986 = vpop.f32.mrb[0].mxu0
      %v1987 = vadd.f32 %v343, %v1986
      %1988 = vmatprep.mubr.bf16.mxu0 0
      %1989 = vmatmul.mubr.bf16.gmra.mrb[0].mxu0 %v766
      %v1990 = vpop.f32.mrb[0].mxu0
      %v1991 = vadd.f32 %v339, %v1990
      %v1992 = vpop.f32.mrb[0].mxu0
      %v1993 = vadd.f32 %v343, %v1992
      %v1994 = vpop.f32.mrb[0].mxu0
      %v1995 = vadd.f32 %v339, %v1994
      %v1996 = vpop.f32.mrb[0].mxu0
      %v1997 = vadd.f32 %v343, %v1996
      %1998 = vmatprep.mubr.bf16.mxu0 0
      %1999 = vmatmul.mubr.bf16.gmra.mrb[0].mxu0 %v769
      %v2000 = vpop.f32.mrb[0].mxu0
      %v2001 = vadd.f32 %v339, %v2000
      %v2002 = vpop.f32.mrb[0].mxu0
      %v2003 = vadd.f32 %v343, %v2002
      %v2004 = vpop.f32.mrb[0].mxu0
      %v2005 = vadd.f32 %v339, %v2004
      %v2006 = vpop.f32.mrb[0].mxu0
      %v2007 = vadd.f32 %v343, %v2006
      %2008 = vmatprep.mubr.bf16.mxu0 0
      %2009 = vmatmul.mubr.bf16.gmra.mrb[0].mxu0 %v772
      %v2010 = vpop.f32.mrb[0].mxu0
      %v2011 = vadd.f32 %v339, %v2010
      %v2012 = vpop.f32.mrb[0].mxu0
      %v2013 = vadd.f32 %v343, %v2012
      %v2014 = vpop.f32.mrb[0].mxu0
      %v2015 = vadd.f32 %v339, %v2014
      %v2016 = vpop.f32.mrb[0].mxu0
      %v2017 = vadd.f32 %v343, %v2016
      %2018 = vmatprep.mubr.bf16.mxu0 0
      %2019 = vmatmul.mubr.bf16.gmra.mrb[0].mxu0 %v775
      %v2020 = vpop.f32.mrb[0].mxu0
      %v2021 = vadd.f32 %v339, %v2020
      %v2022 = vpop.f32.mrb[0].mxu0
      %v2023 = vadd.f32 %v343, %v2022
      %v2024 = vpop.f32.mrb[0].mxu0
      %v2025 = vadd.f32 %v339, %v2024
      %v2026 = vpop.f32.mrb[0].mxu0
      %v2027 = vadd.f32 %v343, %v2026
      %2028 = vdwg.mxu0
      %2029 = vmatprep.subr.bf16.mxu0 %v637
      %2030 = vmatpush1.bf16.msra.mxu0 %v636
      %2031 = vmatprep.subr.bf16.mxu0 %v653
      %2032 = vmatpush1.bf16.msra.mxu0 %v652
      %2033 = vmatprep.subr.bf16.mxu0 0
      %2034 = vmatpush1.bf16.msra.mxu0 0
      %2035 = vmatprep.subr.bf16.mxu0 0
      %2036 = vmatpush1.bf16.msra.mxu0 0
      %2037 = vmatprep.subr.bf16.mxu0 0
      %2038 = vmatpush1.bf16.msra.mxu0 0
      %2039 = vmatprep.subr.bf16.mxu0 0
      %2040 = vmatpush1.bf16.msra.mxu0 0
      %2041 = vmatprep.subr.bf16.mxu0 0
      %2042 = vmatpush1.bf16.msra.mxu0 0
      %2043 = vmatprep.subr.bf16.mxu0 0
      %2044 = vmatpush1.bf16.msra.mxu0 0
      %2045 = vmatprep.subr.bf16.mxu0 0
      %2046 = vmatpush1.bf16.msra.mxu0 0
      %2047 = vmatprep.subr.bf16.mxu0 0
      %2048 = vmatpush1.bf16.msra.mxu0 0
      %2049 = vmatprep.subr.bf16.mxu0 0
      %2050 = vmatpush1.bf16.msra.mxu0 0
      %2051 = vmatprep.subr.bf16.mxu0 0
      %2052 = vmatpush1.bf16.msra.mxu0 0
      %2053 = vmatprep.subr.bf16.mxu0 0
      %2054 = vmatpush1.bf16.msra.mxu0 0
      %2055 = vmatprep.subr.bf16.mxu0 0
      %2056 = vmatpush1.bf16.msra.mxu0 0
      %2057 = vmatprep.subr.bf16.mxu0 0
      %2058 = vmatpush1.bf16.msra.mxu0 0
      %2059 = vmatprep.subr.bf16.mxu0 0
      %2060 = vmatpush1.bf16.msra.mxu0 0
      %2061 = vmatprep.mubr.bf16.mxu0 0
      %2062 = vmatmul.mubr.bf16.gmra.mrb[0].mxu0 %v694
      %v2063 = vpop.f32.mrb[0].mxu0
      %v2064 = vadd.f32 %v347, %v2063
      %v2065 = vpop.f32.mrb[0].mxu0
      %v2066 = vadd.f32 %v351, %v2065
      %v2067 = vpop.f32.mrb[0].mxu0
      %v2068 = vadd.f32 %v347, %v2067
      %v2069 = vpop.f32.mrb[0].mxu0
      %v2070 = vadd.f32 %v351, %v2069
      %2071 = vmatprep.mubr.bf16.mxu0 0
      %2072 = vmatmul.mubr.bf16.gmra.mrb[0].mxu0 %v697
      %v2073 = vpop.f32.mrb[0].mxu0
      %v2074 = vadd.f32 %v347, %v2073
      %v2075 = vpop.f32.mrb[0].mxu0
      %v2076 = vadd.f32 %v351, %v2075
      %v2077 = vpop.f32.mrb[0].mxu0
      %v2078 = vadd.f32 %v347, %v2077
      %v2079 = vpop.f32.mrb[0].mxu0
      %v2080 = vadd.f32 %v351, %v2079
      %2081 = vmatprep.mubr.bf16.mxu0 0
      %2082 = vmatmul.mubr.bf16.gmra.mrb[0].mxu0 %v700
      %v2083 = vpop.f32.mrb[0].mxu0
      %v2084 = vadd.f32 %v347, %v2083
      %v2085 = vpop.f32.mrb[0].mxu0
      %v2086 = vadd.f32 %v351, %v2085
      %v2087 = vpop.f32.mrb[0].mxu0
      %v2088 = vadd.f32 %v347, %v2087
      %v2089 = vpop.f32.mrb[0].mxu0
      %v2090 = vadd.f32 %v351, %v2089
      %2091 = vmatprep.mubr.bf16.mxu0 0
      %2092 = vmatmul.mubr.bf16.gmra.mrb[0].mxu0 %v703
      %v2093 = vpop.f32.mrb[0].mxu0
      %v2094 = vadd.f32 %v347, %v2093
      %v2095 = vpop.f32.mrb[0].mxu0
      %v2096 = vadd.f32 %v351, %v2095
      %v2097 = vpop.f32.mrb[0].mxu0
      %v2098 = vadd.f32 %v347, %v2097
      %v2099 = vpop.f32.mrb[0].mxu0
      %v2100 = vadd.f32 %v351, %v2099
      %2101 = vmatprep.mubr.bf16.mxu0 0
      %2102 = vmatmul.mubr.bf16.gmra.mrb[0].mxu0 %v706
      %v2103 = vpop.f32.mrb[0].mxu0
      %v2104 = vadd.f32 %v347, %v2103
      %v2105 = vpop.f32.mrb[0].mxu0
      %v2106 = vadd.f32 %v351, %v2105
      %v2107 = vpop.f32.mrb[0].mxu0
      %v2108 = vadd.f32 %v347, %v2107
      %v2109 = vpop.f32.mrb[0].mxu0
      %v2110 = vadd.f32 %v351, %v2109
      %2111 = vmatprep.mubr.bf16.mxu0 0
      %2112 = vmatmul.mubr.bf16.gmra.mrb[0].mxu0 %v709
      %v2113 = vpop.f32.mrb[0].mxu0
      %v2114 = vadd.f32 %v347, %v2113
      %v2115 = vpop.f32.mrb[0].mxu0
      %v2116 = vadd.f32 %v351, %v2115
      %v2117 = vpop.f32.mrb[0].mxu0
      %v2118 = vadd.f32 %v347, %v2117
      %v2119 = vpop.f32.mrb[0].mxu0
      %v2120 = vadd.f32 %v351, %v2119
      %2121 = vmatprep.mubr.bf16.mxu0 0
      %2122 = vmatmul.mubr.bf16.gmra.mrb[0].mxu0 %v712
      %v2123 = vpop.f32.mrb[0].mxu0
      %v2124 = vadd.f32 %v347, %v2123
      %v2125 = vpop.f32.mrb[0].mxu0
      %v2126 = vadd.f32 %v351, %v2125
      %v2127 = vpop.f32.mrb[0].mxu0
      %v2128 = vadd.f32 %v347, %v2127
      %v2129 = vpop.f32.mrb[0].mxu0
      %v2130 = vadd.f32 %v351, %v2129
      %2131 = vmatprep.mubr.bf16.mxu0 0
      %2132 = vmatmul.mubr.bf16.gmra.mrb[0].mxu0 %v715
      %v2133 = vpop.f32.mrb[0].mxu0
      %v2134 = vadd.f32 %v347, %v2133
      %v2135 = vpop.f32.mrb[0].mxu0
      %v2136 = vadd.f32 %v351, %v2135
      %v2137 = vpop.f32.mrb[0].mxu0
      %v2138 = vadd.f32 %v347, %v2137
      %v2139 = vpop.f32.mrb[0].mxu0
      %v2140 = vadd.f32 %v351, %v2139
      %2141 = vmatprep.mubr.bf16.mxu0 0
      %2142 = vmatmul.mubr.bf16.gmra.mrb[0].mxu0 %v718
      %v2143 = vpop.f32.mrb[0].mxu0
      %v2144 = vadd.f32 %v347, %v2143
      %v2145 = vpop.f32.mrb[0].mxu0
      %v2146 = vadd.f32 %v351, %v2145
      %v2147 = vpop.f32.mrb[0].mxu0
      %v2148 = vadd.f32 %v347, %v2147
      %v2149 = vpop.f32.mrb[0].mxu0
      %v2150 = vadd.f32 %v351, %v2149
      %2151 = vmatprep.mubr.bf16.mxu0 0
      %2152 = vmatmul.mubr.bf16.gmra.mrb[0].mxu0 %v721
      %v2153 = vpop.f32.mrb[0].mxu0
      %v2154 = vadd.f32 %v347, %v2153
      %v2155 = vpop.f32.mrb[0].mxu0
      %v2156 = vadd.f32 %v351, %v2155
      %v2157 = vpop.f32.mrb[0].mxu0
      %v2158 = vadd.f32 %v347, %v2157
      %v2159 = vpop.f32.mrb[0].mxu0
      %v2160 = vadd.f32 %v351, %v2159
      %2161 = vmatprep.mubr.bf16.mxu0 0
      %2162 = vmatmul.mubr.bf16.gmra.mrb[0].mxu0 %v724
      %v2163 = vpop.f32.mrb[0].mxu0
      %v2164 = vadd.f32 %v347, %v2163
      %v2165 = vpop.f32.mrb[0].mxu0
      %v2166 = vadd.f32 %v351, %v2165
      %v2167 = vpop.f32.mrb[0].mxu0
      %v2168 = vadd.f32 %v347, %v2167
      %v2169 = vpop.f32.mrb[0].mxu0
      %v2170 = vadd.f32 %v351, %v2169
      %2171 = vmatprep.mubr.bf16.mxu0 0
      %2172 = vmatmul.mubr.bf16.gmra.mrb[0].mxu0 %v727
      %v2173 = vpop.f32.mrb[0].mxu0
      %v2174 = vadd.f32 %v347, %v2173
      %v2175 = vpop.f32.mrb[0].mxu0
      %v2176 = vadd.f32 %v351, %v2175
      %v2177 = vpop.f32.mrb[0].mxu0
      %v2178 = vadd.f32 %v347, %v2177
      %v2179 = vpop.f32.mrb[0].mxu0
      %v2180 = vadd.f32 %v351, %v2179
      %2181 = vmatprep.mubr.bf16.mxu0 0
      %2182 = vmatmul.mubr.bf16.gmra.mrb[0].mxu0 %v730
      %v2183 = vpop.f32.mrb[0].mxu0
      %v2184 = vadd.f32 %v347, %v2183
      %v2185 = vpop.f32.mrb[0].mxu0
      %v2186 = vadd.f32 %v351, %v2185
      %v2187 = vpop.f32.mrb[0].mxu0
      %v2188 = vadd.f32 %v347, %v2187
      %v2189 = vpop.f32.mrb[0].mxu0
      %v2190 = vadd.f32 %v351, %v2189
      %2191 = vmatprep.mubr.bf16.mxu0 0
      %2192 = vmatmul.mubr.bf16.gmra.mrb[0].mxu0 %v733
      %v2193 = vpop.f32.mrb[0].mxu0
      %v2194 = vadd.f32 %v347, %v2193
      %v2195 = vpop.f32.mrb[0].mxu0
      %v2196 = vadd.f32 %v351, %v2195
      %v2197 = vpop.f32.mrb[0].mxu0
      %v2198 = vadd.f32 %v347, %v2197
      %v2199 = vpop.f32.mrb[0].mxu0
      %v2200 = vadd.f32 %v351, %v2199
      %2201 = vmatprep.mubr.bf16.mxu0 0
      %2202 = vmatmul.mubr.bf16.gmra.mrb[0].mxu0 %v736
      %v2203 = vpop.f32.mrb[0].mxu0
      %v2204 = vadd.f32 %v347, %v2203
      %v2205 = vpop.f32.mrb[0].mxu0
      %v2206 = vadd.f32 %v351, %v2205
      %v2207 = vpop.f32.mrb[0].mxu0
      %v2208 = vadd.f32 %v347, %v2207
      %v2209 = vpop.f32.mrb[0].mxu0
      %v2210 = vadd.f32 %v351, %v2209
      %2211 = vmatprep.mubr.bf16.mxu0 0
      %2212 = vmatmul.mubr.bf16.gmra.mrb[0].mxu0 %v739
      %v2213 = vpop.f32.mrb[0].mxu0
      %v2214 = vadd.f32 %v347, %v2213
      %v2215 = vpop.f32.mrb[0].mxu0
      %v2216 = vadd.f32 %v351, %v2215
      %v2217 = vpop.f32.mrb[0].mxu0
      %v2218 = vadd.f32 %v347, %v2217
      %v2219 = vpop.f32.mrb[0].mxu0
      %v2220 = vadd.f32 %v351, %v2219
      %2221 = vmatprep.mubr.bf16.mxu0 0
      %2222 = vmatmul.mubr.bf16.gmra.mrb[0].mxu0 %v742
      %v2223 = vpop.f32.mrb[0].mxu0
      %v2224 = vadd.f32 %v347, %v2223
      %v2225 = vpop.f32.mrb[0].mxu0
      %v2226 = vadd.f32 %v351, %v2225
      %v2227 = vpop.f32.mrb[0].mxu0
      %v2228 = vadd.f32 %v347, %v2227
      %v2229 = vpop.f32.mrb[0].mxu0
      %v2230 = vadd.f32 %v351, %v2229
      %2231 = vmatprep.mubr.bf16.mxu0 0
      %2232 = vmatmul.mubr.bf16.gmra.mrb[0].mxu0 %v745
      %v2233 = vpop.f32.mrb[0].mxu0
      %v2234 = vadd.f32 %v347, %v2233
      %v2235 = vpop.f32.mrb[0].mxu0
      %v2236 = vadd.f32 %v351, %v2235
      %v2237 = vpop.f32.mrb[0].mxu0
      %v2238 = vadd.f32 %v347, %v2237
      %v2239 = vpop.f32.mrb[0].mxu0
      %v2240 = vadd.f32 %v351, %v2239
      %2241 = vmatprep.mubr.bf16.mxu0 0
      %2242 = vmatmul.mubr.bf16.gmra.mrb[0].mxu0 %v748
      %v2243 = vpop.f32.mrb[0].mxu0
      %v2244 = vadd.f32 %v347, %v2243
      %v2245 = vpop.f32.mrb[0].mxu0
      %v2246 = vadd.f32 %v351, %v2245
      %v2247 = vpop.f32.mrb[0].mxu0
      %v2248 = vadd.f32 %v347, %v2247
      %v2249 = vpop.f32.mrb[0].mxu0
      %v2250 = vadd.f32 %v351, %v2249
      %2251 = vmatprep.mubr.bf16.mxu0 0
      %2252 = vmatmul.mubr.bf16.gmra.mrb[0].mxu0 %v751
      %v2253 = vpop.f32.mrb[0].mxu0
      %v2254 = vadd.f32 %v347, %v2253
      %v2255 = vpop.f32.mrb[0].mxu0
      %v2256 = vadd.f32 %v351, %v2255
      %v2257 = vpop.f32.mrb[0].mxu0
      %v2258 = vadd.f32 %v347, %v2257
      %v2259 = vpop.f32.mrb[0].mxu0
      %v2260 = vadd.f32 %v351, %v2259
      %2261 = vmatprep.mubr.bf16.mxu0 0
      %2262 = vmatmul.mubr.bf16.gmra.mrb[0].mxu0 %v754
      %v2263 = vpop.f32.mrb[0].mxu0
      %v2264 = vadd.f32 %v347, %v2263
      %v2265 = vpop.f32.mrb[0].mxu0
      %v2266 = vadd.f32 %v351, %v2265
      %v2267 = vpop.f32.mrb[0].mxu0
      %v2268 = vadd.f32 %v347, %v2267
      %v2269 = vpop.f32.mrb[0].mxu0
      %v2270 = vadd.f32 %v351, %v2269
      %2271 = vmatprep.mubr.bf16.mxu0 0
      %2272 = vmatmul.mubr.bf16.gmra.mrb[0].mxu0 %v757
      %v2273 = vpop.f32.mrb[0].mxu0
      %v2274 = vadd.f32 %v347, %v2273
      %v2275 = vpop.f32.mrb[0].mxu0
      %v2276 = vadd.f32 %v351, %v2275
      %v2277 = vpop.f32.mrb[0].mxu0
      %v2278 = vadd.f32 %v347, %v2277
      %v2279 = vpop.f32.mrb[0].mxu0
      %v2280 = vadd.f32 %v351, %v2279
      %2281 = vmatprep.mubr.bf16.mxu0 0
      %2282 = vmatmul.mubr.bf16.gmra.mrb[0].mxu0 %v760
      %v2283 = vpop.f32.mrb[0].mxu0
      %v2284 = vadd.f32 %v347, %v2283
      %v2285 = vpop.f32.mrb[0].mxu0
      %v2286 = vadd.f32 %v351, %v2285
      %v2287 = vpop.f32.mrb[0].mxu0
      %v2288 = vadd.f32 %v347, %v2287
      %v2289 = vpop.f32.mrb[0].mxu0
      %v2290 = vadd.f32 %v351, %v2289
      %2291 = vmatprep.mubr.bf16.mxu0 0
      %2292 = vmatmul.mubr.bf16.gmra.mrb[0].mxu0 %v763
      %v2293 = vpop.f32.mrb[0].mxu0
      %v2294 = vadd.f32 %v347, %v2293
      %v2295 = vpop.f32.mrb[0].mxu0
      %v2296 = vadd.f32 %v351, %v2295
      %v2297 = vpop.f32.mrb[0].mxu0
      %v2298 = vadd.f32 %v347, %v2297
      %v2299 = vpop.f32.mrb[0].mxu0
      %v2300 = vadd.f32 %v351, %v2299
      %2301 = vmatprep.mubr.bf16.mxu0 0
      %2302 = vmatmul.mubr.bf16.gmra.mrb[0].mxu0 %v766
      %v2303 = vpop.f32.mrb[0].mxu0
      %v2304 = vadd.f32 %v347, %v2303
      %v2305 = vpop.f32.mrb[0].mxu0
      %v2306 = vadd.f32 %v351, %v2305
      %v2307 = vpop.f32.mrb[0].mxu0
      %v2308 = vadd.f32 %v347, %v2307
      %v2309 = vpop.f32.mrb[0].mxu0
      %v2310 = vadd.f32 %v351, %v2309
      %2311 = vmatprep.mubr.bf16.mxu0 0
      %2312 = vmatmul.mubr.bf16.gmra.mrb[0].mxu0 %v769
      %v2313 = vpop.f32.mrb[0].mxu0
      %v2314 = vadd.f32 %v347, %v2313
      %v2315 = vpop.f32.mrb[0].mxu0
      %v2316 = vadd.f32 %v351, %v2315
      %v2317 = vpop.f32.mrb[0].mxu0
      %v2318 = vadd.f32 %v347, %v2317
      %v2319 = vpop.f32.mrb[0].mxu0
      %v2320 = vadd.f32 %v351, %v2319
      %2321 = vmatprep.mubr.bf16.mxu0 0
      %2322 = vmatmul.mubr.bf16.gmra.mrb[0].mxu0 %v772
      %v2323 = vpop.f32.mrb[0].mxu0
      %v2324 = vadd.f32 %v347, %v2323
      %v2325 = vpop.f32.mrb[0].mxu0
      %v2326 = vadd.f32 %v351, %v2325
      %v2327 = vpop.f32.mrb[0].mxu0
      %v2328 = vadd.f32 %v347, %v2327
      %v2329 = vpop.f32.mrb[0].mxu0
      %v2330 = vadd.f32 %v351, %v2329
      %2331 = vmatprep.mubr.bf16.mxu0 0
      %2332 = vmatmul.mubr.bf16.gmra.mrb[0].mxu0 %v775
      %v2333 = vpop.f32.mrb[0].mxu0
      %v2334 = vadd.f32 %v347, %v2333
      %v2335 = vpop.f32.mrb[0].mxu0
      %v2336 = vadd.f32 %v351, %v2335
      %v2337 = vpop.f32.mrb[0].mxu0
      %v2338 = vadd.f32 %v347, %v2337
      %v2339 = vpop.f32.mrb[0].mxu0
      %v2340 = vadd.f32 %v351, %v2339
      %2341 = vdwg.mxu0
      %2342 = vmatprep.subr.bf16.mxu0 %v639
      %2343 = vmatpush1.bf16.msra.mxu0 %v638
      %2344 = vmatprep.subr.bf16.mxu0 %v655
      %2345 = vmatpush1.bf16.msra.mxu0 %v654
      %2346 = vmatprep.subr.bf16.mxu0 0
      %2347 = vmatpush1.bf16.msra.mxu0 0
      %2348 = vmatprep.subr.bf16.mxu0 0
      %2349 = vmatpush1.bf16.msra.mxu0 0
      %2350 = vmatprep.subr.bf16.mxu0 0
      %2351 = vmatpush1.bf16.msra.mxu0 0
      %2352 = vmatprep.subr.bf16.mxu0 0
      %2353 = vmatpush1.bf16.msra.mxu0 0
      %2354 = vmatprep.subr.bf16.mxu0 0
      %2355 = vmatpush1.bf16.msra.mxu0 0
      %2356 = vmatprep.subr.bf16.mxu0 0
      %2357 = vmatpush1.bf16.msra.mxu0 0
      %2358 = vmatprep.subr.bf16.mxu0 0
      %2359 = vmatpush1.bf16.msra.mxu0 0
      %2360 = vmatprep.subr.bf16.mxu0 0
      %2361 = vmatpush1.bf16.msra.mxu0 0
      %2362 = vmatprep.subr.bf16.mxu0 0
      %2363 = vmatpush1.bf16.msra.mxu0 0
      %2364 = vmatprep.subr.bf16.mxu0 0
      %2365 = vmatpush1.bf16.msra.mxu0 0
      %2366 = vmatprep.subr.bf16.mxu0 0
      %2367 = vmatpush1.bf16.msra.mxu0 0
      %2368 = vmatprep.subr.bf16.mxu0 0
      %2369 = vmatpush1.bf16.msra.mxu0 0
      %2370 = vmatprep.subr.bf16.mxu0 0
      %2371 = vmatpush1.bf16.msra.mxu0 0
      %2372 = vmatprep.subr.bf16.mxu0 0
      %2373 = vmatpush1.bf16.msra.mxu0 0
      %2374 = vmatprep.mubr.bf16.mxu0 0
      %2375 = vmatmul.mubr.bf16.gmra.mrb[0].mxu0 %v694
      %v2376 = vpop.f32.mrb[0].mxu0
      %v2377 = vadd.f32 %v355, %v2376
      %v2378 = vpop.f32.mrb[0].mxu0
      %v2379 = vadd.f32 %v359, %v2378
      %v2380 = vpop.f32.mrb[0].mxu0
      %v2381 = vadd.f32 %v355, %v2380
      %v2382 = vpop.f32.mrb[0].mxu0
      %v2383 = vadd.f32 %v359, %v2382
      %2384 = vmatprep.mubr.bf16.mxu0 0
      %2385 = vmatmul.mubr.bf16.gmra.mrb[0].mxu0 %v697
      %v2386 = vpop.f32.mrb[0].mxu0
      %v2387 = vadd.f32 %v355, %v2386
      %v2388 = vpop.f32.mrb[0].mxu0
      %v2389 = vadd.f32 %v359, %v2388
      %v2390 = vpop.f32.mrb[0].mxu0
      %v2391 = vadd.f32 %v355, %v2390
      %v2392 = vpop.f32.mrb[0].mxu0
      %v2393 = vadd.f32 %v359, %v2392
      %2394 = vmatprep.mubr.bf16.mxu0 0
      %2395 = vmatmul.mubr.bf16.gmra.mrb[0].mxu0 %v700
      %v2396 = vpop.f32.mrb[0].mxu0
      %v2397 = vadd.f32 %v355, %v2396
      %v2398 = vpop.f32.mrb[0].mxu0
      %v2399 = vadd.f32 %v359, %v2398
      %v2400 = vpop.f32.mrb[0].mxu0
      %v2401 = vadd.f32 %v355, %v2400
      %v2402 = vpop.f32.mrb[0].mxu0
      %v2403 = vadd.f32 %v359, %v2402
      %2404 = vmatprep.mubr.bf16.mxu0 0
      %2405 = vmatmul.mubr.bf16.gmra.mrb[0].mxu0 %v703
      %v2406 = vpop.f32.mrb[0].mxu0
      %v2407 = vadd.f32 %v355, %v2406
      %v2408 = vpop.f32.mrb[0].mxu0
      %v2409 = vadd.f32 %v359, %v2408
      %v2410 = vpop.f32.mrb[0].mxu0
      %v2411 = vadd.f32 %v355, %v2410
      %v2412 = vpop.f32.mrb[0].mxu0
      %v2413 = vadd.f32 %v359, %v2412
      %2414 = vmatprep.mubr.bf16.mxu0 0
      %2415 = vmatmul.mubr.bf16.gmra.mrb[0].mxu0 %v706
      %v2416 = vpop.f32.mrb[0].mxu0
      %v2417 = vadd.f32 %v355, %v2416
      %v2418 = vpop.f32.mrb[0].mxu0
      %v2419 = vadd.f32 %v359, %v2418
      %v2420 = vpop.f32.mrb[0].mxu0
      %v2421 = vadd.f32 %v355, %v2420
      %v2422 = vpop.f32.mrb[0].mxu0
      %v2423 = vadd.f32 %v359, %v2422
      %2424 = vmatprep.mubr.bf16.mxu0 0
      %2425 = vmatmul.mubr.bf16.gmra.mrb[0].mxu0 %v709
      %v2426 = vpop.f32.mrb[0].mxu0
      %v2427 = vadd.f32 %v355, %v2426
      %v2428 = vpop.f32.mrb[0].mxu0
      %v2429 = vadd.f32 %v359, %v2428
      %v2430 = vpop.f32.mrb[0].mxu0
      %v2431 = vadd.f32 %v355, %v2430
      %v2432 = vpop.f32.mrb[0].mxu0
      %v2433 = vadd.f32 %v359, %v2432
      %2434 = vmatprep.mubr.bf16.mxu0 0
      %2435 = vmatmul.mubr.bf16.gmra.mrb[0].mxu0 %v712
      %v2436 = vpop.f32.mrb[0].mxu0
      %v2437 = vadd.f32 %v355, %v2436
      %v2438 = vpop.f32.mrb[0].mxu0
      %v2439 = vadd.f32 %v359, %v2438
      %v2440 = vpop.f32.mrb[0].mxu0
      %v2441 = vadd.f32 %v355, %v2440
      %v2442 = vpop.f32.mrb[0].mxu0
      %v2443 = vadd.f32 %v359, %v2442
      %2444 = vmatprep.mubr.bf16.mxu0 0
      %2445 = vmatmul.mubr.bf16.gmra.mrb[0].mxu0 %v715
      %v2446 = vpop.f32.mrb[0].mxu0
      %v2447 = vadd.f32 %v355, %v2446
      %v2448 = vpop.f32.mrb[0].mxu0
      %v2449 = vadd.f32 %v359, %v2448
      %v2450 = vpop.f32.mrb[0].mxu0
      %v2451 = vadd.f32 %v355, %v2450
      %v2452 = vpop.f32.mrb[0].mxu0
      %v2453 = vadd.f32 %v359, %v2452
      %2454 = vmatprep.mubr.bf16.mxu0 0
      %2455 = vmatmul.mubr.bf16.gmra.mrb[0].mxu0 %v718
      %v2456 = vpop.f32.mrb[0].mxu0
      %v2457 = vadd.f32 %v355, %v2456
      %v2458 = vpop.f32.mrb[0].mxu0
      %v2459 = vadd.f32 %v359, %v2458
      %v2460 = vpop.f32.mrb[0].mxu0
      %v2461 = vadd.f32 %v355, %v2460
      %v2462 = vpop.f32.mrb[0].mxu0
      %v2463 = vadd.f32 %v359, %v2462
      %2464 = vmatprep.mubr.bf16.mxu0 0
      %2465 = vmatmul.mubr.bf16.gmra.mrb[0].mxu0 %v721
      %v2466 = vpop.f32.mrb[0].mxu0
      %v2467 = vadd.f32 %v355, %v2466
      %v2468 = vpop.f32.mrb[0].mxu0
      %v2469 = vadd.f32 %v359, %v2468
      %v2470 = vpop.f32.mrb[0].mxu0
      %v2471 = vadd.f32 %v355, %v2470
      %v2472 = vpop.f32.mrb[0].mxu0
      %v2473 = vadd.f32 %v359, %v2472
      %2474 = vmatprep.mubr.bf16.mxu0 0
      %2475 = vmatmul.mubr.bf16.gmra.mrb[0].mxu0 %v724
      %v2476 = vpop.f32.mrb[0].mxu0
      %v2477 = vadd.f32 %v355, %v2476
      %v2478 = vpop.f32.mrb[0].mxu0
      %v2479 = vadd.f32 %v359, %v2478
      %v2480 = vpop.f32.mrb[0].mxu0
      %v2481 = vadd.f32 %v355, %v2480
      %v2482 = vpop.f32.mrb[0].mxu0
      %v2483 = vadd.f32 %v359, %v2482
      %2484 = vmatprep.mubr.bf16.mxu0 0
      %2485 = vmatmul.mubr.bf16.gmra.mrb[0].mxu0 %v727
      %v2486 = vpop.f32.mrb[0].mxu0
      %v2487 = vadd.f32 %v355, %v2486
      %v2488 = vpop.f32.mrb[0].mxu0
      %v2489 = vadd.f32 %v359, %v2488
      %v2490 = vpop.f32.mrb[0].mxu0
      %v2491 = vadd.f32 %v355, %v2490
      %v2492 = vpop.f32.mrb[0].mxu0
      %v2493 = vadd.f32 %v359, %v2492
      %2494 = vmatprep.mubr.bf16.mxu0 0
      %2495 = vmatmul.mubr.bf16.gmra.mrb[0].mxu0 %v730
      %v2496 = vpop.f32.mrb[0].mxu0
      %v2497 = vadd.f32 %v355, %v2496
      %v2498 = vpop.f32.mrb[0].mxu0
      %v2499 = vadd.f32 %v359, %v2498
      %v2500 = vpop.f32.mrb[0].mxu0
      %v2501 = vadd.f32 %v355, %v2500
      %v2502 = vpop.f32.mrb[0].mxu0
      %v2503 = vadd.f32 %v359, %v2502
      %2504 = vmatprep.mubr.bf16.mxu0 0
      %2505 = vmatmul.mubr.bf16.gmra.mrb[0].mxu0 %v733
      %v2506 = vpop.f32.mrb[0].mxu0
      %v2507 = vadd.f32 %v355, %v2506
      %v2508 = vpop.f32.mrb[0].mxu0
      %v2509 = vadd.f32 %v359, %v2508
      %v2510 = vpop.f32.mrb[0].mxu0
      %v2511 = vadd.f32 %v355, %v2510
      %v2512 = vpop.f32.mrb[0].mxu0
      %v2513 = vadd.f32 %v359, %v2512
      %2514 = vmatprep.mubr.bf16.mxu0 0
      %2515 = vmatmul.mubr.bf16.gmra.mrb[0].mxu0 %v736
      %v2516 = vpop.f32.mrb[0].mxu0
      %v2517 = vadd.f32 %v355, %v2516
      %v2518 = vpop.f32.mrb[0].mxu0
      %v2519 = vadd.f32 %v359, %v2518
      %v2520 = vpop.f32.mrb[0].mxu0
      %v2521 = vadd.f32 %v355, %v2520
      %v2522 = vpop.f32.mrb[0].mxu0
      %v2523 = vadd.f32 %v359, %v2522
      %2524 = vmatprep.mubr.bf16.mxu0 0
      %2525 = vmatmul.mubr.bf16.gmra.mrb[0].mxu0 %v739
      %v2526 = vpop.f32.mrb[0].mxu0
      %v2527 = vadd.f32 %v355, %v2526
      %v2528 = vpop.f32.mrb[0].mxu0
      %v2529 = vadd.f32 %v359, %v2528
      %v2530 = vpop.f32.mrb[0].mxu0
      %v2531 = vadd.f32 %v355, %v2530
      %v2532 = vpop.f32.mrb[0].mxu0
      %v2533 = vadd.f32 %v359, %v2532
      %2534 = vmatprep.mubr.bf16.mxu0 0
      %2535 = vmatmul.mubr.bf16.gmra.mrb[0].mxu0 %v742
      %v2536 = vpop.f32.mrb[0].mxu0
      %v2537 = vadd.f32 %v355, %v2536
      %v2538 = vpop.f32.mrb[0].mxu0
      %v2539 = vadd.f32 %v359, %v2538
      %v2540 = vpop.f32.mrb[0].mxu0
      %v2541 = vadd.f32 %v355, %v2540
      %v2542 = vpop.f32.mrb[0].mxu0
      %v2543 = vadd.f32 %v359, %v2542
      %2544 = vmatprep.mubr.bf16.mxu0 0
      %2545 = vmatmul.mubr.bf16.gmra.mrb[0].mxu0 %v745
      %v2546 = vpop.f32.mrb[0].mxu0
      %v2547 = vadd.f32 %v355, %v2546
      %v2548 = vpop.f32.mrb[0].mxu0
      %v2549 = vadd.f32 %v359, %v2548
      %v2550 = vpop.f32.mrb[0].mxu0
      %v2551 = vadd.f32 %v355, %v2550
      %v2552 = vpop.f32.mrb[0].mxu0
      %v2553 = vadd.f32 %v359, %v2552
      %2554 = vmatprep.mubr.bf16.mxu0 0
      %2555 = vmatmul.mubr.bf16.gmra.mrb[0].mxu0 %v748
      %v2556 = vpop.f32.mrb[0].mxu0
      %v2557 = vadd.f32 %v355, %v2556
      %v2558 = vpop.f32.mrb[0].mxu0
      %v2559 = vadd.f32 %v359, %v2558
      %v2560 = vpop.f32.mrb[0].mxu0
      %v2561 = vadd.f32 %v355, %v2560
      %v2562 = vpop.f32.mrb[0].mxu0
      %v2563 = vadd.f32 %v359, %v2562
      %2564 = vmatprep.mubr.bf16.mxu0 0
      %2565 = vmatmul.mubr.bf16.gmra.mrb[0].mxu0 %v751
      %v2566 = vpop.f32.mrb[0].mxu0
      %v2567 = vadd.f32 %v355, %v2566
      %v2568 = vpop.f32.mrb[0].mxu0
      %v2569 = vadd.f32 %v359, %v2568
      %v2570 = vpop.f32.mrb[0].mxu0
      %v2571 = vadd.f32 %v355, %v2570
      %v2572 = vpop.f32.mrb[0].mxu0
      %v2573 = vadd.f32 %v359, %v2572
      %2574 = vmatprep.mubr.bf16.mxu0 0
      %2575 = vmatmul.mubr.bf16.gmra.mrb[0].mxu0 %v754
      %v2576 = vpop.f32.mrb[0].mxu0
      %v2577 = vadd.f32 %v355, %v2576
      %v2578 = vpop.f32.mrb[0].mxu0
      %v2579 = vadd.f32 %v359, %v2578
      %v2580 = vpop.f32.mrb[0].mxu0
      %v2581 = vadd.f32 %v355, %v2580
      %v2582 = vpop.f32.mrb[0].mxu0
      %v2583 = vadd.f32 %v359, %v2582
      %2584 = vmatprep.mubr.bf16.mxu0 0
      %2585 = vmatmul.mubr.bf16.gmra.mrb[0].mxu0 %v757
      %v2586 = vpop.f32.mrb[0].mxu0
      %v2587 = vadd.f32 %v355, %v2586
      %v2588 = vpop.f32.mrb[0].mxu0
      %v2589 = vadd.f32 %v359, %v2588
      %v2590 = vpop.f32.mrb[0].mxu0
      %v2591 = vadd.f32 %v355, %v2590
      %v2592 = vpop.f32.mrb[0].mxu0
      %v2593 = vadd.f32 %v359, %v2592
      %2594 = vmatprep.mubr.bf16.mxu0 0
      %2595 = vmatmul.mubr.bf16.gmra.mrb[0].mxu0 %v760
      %v2596 = vpop.f32.mrb[0].mxu0
      %v2597 = vadd.f32 %v355, %v2596
      %v2598 = vpop.f32.mrb[0].mxu0
      %v2599 = vadd.f32 %v359, %v2598
      %v2600 = vpop.f32.mrb[0].mxu0
      %v2601 = vadd.f32 %v355, %v2600
      %v2602 = vpop.f32.mrb[0].mxu0
      %v2603 = vadd.f32 %v359, %v2602
      %2604 = vmatprep.mubr.bf16.mxu0 0
      %2605 = vmatmul.mubr.bf16.gmra.mrb[0].mxu0 %v763
      %v2606 = vpop.f32.mrb[0].mxu0
      %v2607 = vadd.f32 %v355, %v2606
      %v2608 = vpop.f32.mrb[0].mxu0
      %v2609 = vadd.f32 %v359, %v2608
      %v2610 = vpop.f32.mrb[0].mxu0
      %v2611 = vadd.f32 %v355, %v2610
      %v2612 = vpop.f32.mrb[0].mxu0
      %v2613 = vadd.f32 %v359, %v2612
      %2614 = vmatprep.mubr.bf16.mxu0 0
      %2615 = vmatmul.mubr.bf16.gmra.mrb[0].mxu0 %v766
      %v2616 = vpop.f32.mrb[0].mxu0
      %v2617 = vadd.f32 %v355, %v2616
      %v2618 = vpop.f32.mrb[0].mxu0
      %v2619 = vadd.f32 %v359, %v2618
      %v2620 = vpop.f32.mrb[0].mxu0
      %v2621 = vadd.f32 %v355, %v2620
      %v2622 = vpop.f32.mrb[0].mxu0
      %v2623 = vadd.f32 %v359, %v2622
      %2624 = vmatprep.mubr.bf16.mxu0 0
      %2625 = vmatmul.mubr.bf16.gmra.mrb[0].mxu0 %v769
      %v2626 = vpop.f32.mrb[0].mxu0
      %v2627 = vadd.f32 %v355, %v2626
      %v2628 = vpop.f32.mrb[0].mxu0
      %v2629 = vadd.f32 %v359, %v2628
      %v2630 = vpop.f32.mrb[0].mxu0
      %v2631 = vadd.f32 %v355, %v2630
      %v2632 = vpop.f32.mrb[0].mxu0
      %v2633 = vadd.f32 %v359, %v2632
      %2634 = vmatprep.mubr.bf16.mxu0 0
      %2635 = vmatmul.mubr.bf16.gmra.mrb[0].mxu0 %v772
      %v2636 = vpop.f32.mrb[0].mxu0
      %v2637 = vadd.f32 %v355, %v2636
      %v2638 = vpop.f32.mrb[0].mxu0
      %v2639 = vadd.f32 %v359, %v2638
      %v2640 = vpop.f32.mrb[0].mxu0
      %v2641 = vadd.f32 %v355, %v2640
      %v2642 = vpop.f32.mrb[0].mxu0
      %v2643 = vadd.f32 %v359, %v2642
      %2644 = vmatprep.mubr.bf16.mxu0 0
      %2645 = vmatmul.mubr.bf16.gmra.mrb[0].mxu0 %v775
      %v2646 = vpop.f32.mrb[0].mxu0
      %v2647 = vadd.f32 %v355, %v2646
      %v2648 = vpop.f32.mrb[0].mxu0
      %v2649 = vadd.f32 %v359, %v2648
      %v2650 = vpop.f32.mrb[0].mxu0
      %v2651 = vadd.f32 %v355, %v2650
      %v2652 = vpop.f32.mrb[0].mxu0
      %v2653 = vadd.f32 %v359, %v2652
      %2654 = vdwg.mxu0
      %2655 = vmatprep.subr.bf16.mxu0 %v641
      %2656 = vmatpush1.bf16.msra.mxu0 %v640
      %2657 = vmatprep.subr.bf16.mxu0 %v657
      %2658 = vmatpush1.bf16.msra.mxu0 %v656
      %2659 = vmatprep.subr.bf16.mxu0 0
      %2660 = vmatpush1.bf16.msra.mxu0 0
      %2661 = vmatprep.subr.bf16.mxu0 0
      %2662 = vmatpush1.bf16.msra.mxu0 0
      %2663 = vmatprep.subr.bf16.mxu0 0
      %2664 = vmatpush1.bf16.msra.mxu0 0
      %2665 = vmatprep.subr.bf16.mxu0 0
      %2666 = vmatpush1.bf16.msra.mxu0 0
      %2667 = vmatprep.subr.bf16.mxu0 0
      %2668 = vmatpush1.bf16.msra.mxu0 0
      %2669 = vmatprep.subr.bf16.mxu0 0
      %2670 = vmatpush1.bf16.msra.mxu0 0
      %2671 = vmatprep.subr.bf16.mxu0 0
      %2672 = vmatpush1.bf16.msra.mxu0 0
      %2673 = vmatprep.subr.bf16.mxu0 0
      %2674 = vmatpush1.bf16.msra.mxu0 0
      %2675 = vmatprep.subr.bf16.mxu0 0
      %2676 = vmatpush1.bf16.msra.mxu0 0
      %2677 = vmatprep.subr.bf16.mxu0 0
      %2678 = vmatpush1.bf16.msra.mxu0 0
      %2679 = vmatprep.subr.bf16.mxu0 0
      %2680 = vmatpush1.bf16.msra.mxu0 0
      %2681 = vmatprep.subr.bf16.mxu0 0
      %2682 = vmatpush1.bf16.msra.mxu0 0
      %2683 = vmatprep.subr.bf16.mxu0 0
      %2684 = vmatpush1.bf16.msra.mxu0 0
      %2685 = vmatprep.subr.bf16.mxu0 0
      %2686 = vmatpush1.bf16.msra.mxu0 0
      %2687 = vmatprep.mubr.bf16.mxu0 0
      %2688 = vmatmul.mubr.bf16.gmra.mrb[0].mxu0 %v694
      %v2689 = vpop.f32.mrb[0].mxu0
      %v2690 = vadd.f32 %v363, %v2689
      %v2691 = vpop.f32.mrb[0].mxu0
      %v2692 = vadd.f32 %v367, %v2691
      %v2693 = vpop.f32.mrb[0].mxu0
      %v2694 = vadd.f32 %v363, %v2693
      %v2695 = vpop.f32.mrb[0].mxu0
      %v2696 = vadd.f32 %v367, %v2695
      %2697 = vmatprep.mubr.bf16.mxu0 0
      %2698 = vmatmul.mubr.bf16.gmra.mrb[0].mxu0 %v697
      %v2699 = vpop.f32.mrb[0].mxu0
      %v2700 = vadd.f32 %v363, %v2699
      %v2701 = vpop.f32.mrb[0].mxu0
      %v2702 = vadd.f32 %v367, %v2701
      %v2703 = vpop.f32.mrb[0].mxu0
      %v2704 = vadd.f32 %v363, %v2703
      %v2705 = vpop.f32.mrb[0].mxu0
      %v2706 = vadd.f32 %v367, %v2705
      %2707 = vmatprep.mubr.bf16.mxu0 0
      %2708 = vmatmul.mubr.bf16.gmra.mrb[0].mxu0 %v700
      %v2709 = vpop.f32.mrb[0].mxu0
      %v2710 = vadd.f32 %v363, %v2709
      %v2711 = vpop.f32.mrb[0].mxu0
      %v2712 = vadd.f32 %v367, %v2711
      %v2713 = vpop.f32.mrb[0].mxu0
      %v2714 = vadd.f32 %v363, %v2713
      %v2715 = vpop.f32.mrb[0].mxu0
      %v2716 = vadd.f32 %v367, %v2715
      %2717 = vmatprep.mubr.bf16.mxu0 0
      %2718 = vmatmul.mubr.bf16.gmra.mrb[0].mxu0 %v703
      %v2719 = vpop.f32.mrb[0].mxu0
      %v2720 = vadd.f32 %v363, %v2719
      %v2721 = vpop.f32.mrb[0].mxu0
      %v2722 = vadd.f32 %v367, %v2721
      %v2723 = vpop.f32.mrb[0].mxu0
      %v2724 = vadd.f32 %v363, %v2723
      %v2725 = vpop.f32.mrb[0].mxu0
      %v2726 = vadd.f32 %v367, %v2725
      %2727 = vmatprep.mubr.bf16.mxu0 0
      %2728 = vmatmul.mubr.bf16.gmra.mrb[0].mxu0 %v706
      %v2729 = vpop.f32.mrb[0].mxu0
      %v2730 = vadd.f32 %v363, %v2729
      %v2731 = vpop.f32.mrb[0].mxu0
      %v2732 = vadd.f32 %v367, %v2731
      %v2733 = vpop.f32.mrb[0].mxu0
      %v2734 = vadd.f32 %v363, %v2733
      %v2735 = vpop.f32.mrb[0].mxu0
      %v2736 = vadd.f32 %v367, %v2735
      %2737 = vmatprep.mubr.bf16.mxu0 0
      %2738 = vmatmul.mubr.bf16.gmra.mrb[0].mxu0 %v709
      %v2739 = vpop.f32.mrb[0].mxu0
      %v2740 = vadd.f32 %v363, %v2739
      %v2741 = vpop.f32.mrb[0].mxu0
      %v2742 = vadd.f32 %v367, %v2741
      %v2743 = vpop.f32.mrb[0].mxu0
      %v2744 = vadd.f32 %v363, %v2743
      %v2745 = vpop.f32.mrb[0].mxu0
      %v2746 = vadd.f32 %v367, %v2745
      %2747 = vmatprep.mubr.bf16.mxu0 0
      %2748 = vmatmul.mubr.bf16.gmra.mrb[0].mxu0 %v712
      %v2749 = vpop.f32.mrb[0].mxu0
      %v2750 = vadd.f32 %v363, %v2749
      %v2751 = vpop.f32.mrb[0].mxu0
      %v2752 = vadd.f32 %v367, %v2751
      %v2753 = vpop.f32.mrb[0].mxu0
      %v2754 = vadd.f32 %v363, %v2753
      %v2755 = vpop.f32.mrb[0].mxu0
      %v2756 = vadd.f32 %v367, %v2755
      %2757 = vmatprep.mubr.bf16.mxu0 0
      %2758 = vmatmul.mubr.bf16.gmra.mrb[0].mxu0 %v715
      %v2759 = vpop.f32.mrb[0].mxu0
      %v2760 = vadd.f32 %v363, %v2759
      %v2761 = vpop.f32.mrb[0].mxu0
      %v2762 = vadd.f32 %v367, %v2761
      %v2763 = vpop.f32.mrb[0].mxu0
      %v2764 = vadd.f32 %v363, %v2763
      %v2765 = vpop.f32.mrb[0].mxu0
      %v2766 = vadd.f32 %v367, %v2765
      %2767 = vmatprep.mubr.bf16.mxu0 0
      %2768 = vmatmul.mubr.bf16.gmra.mrb[0].mxu0 %v718
      %v2769 = vpop.f32.mrb[0].mxu0
      %v2770 = vadd.f32 %v363, %v2769
      %v2771 = vpop.f32.mrb[0].mxu0
      %v2772 = vadd.f32 %v367, %v2771
      %v2773 = vpop.f32.mrb[0].mxu0
      %v2774 = vadd.f32 %v363, %v2773
      %v2775 = vpop.f32.mrb[0].mxu0
      %v2776 = vadd.f32 %v367, %v2775
      %2777 = vmatprep.mubr.bf16.mxu0 0
      %2778 = vmatmul.mubr.bf16.gmra.mrb[0].mxu0 %v721
      %v2779 = vpop.f32.mrb[0].mxu0
      %v2780 = vadd.f32 %v363, %v2779
      %v2781 = vpop.f32.mrb[0].mxu0
      %v2782 = vadd.f32 %v367, %v2781
      %v2783 = vpop.f32.mrb[0].mxu0
      %v2784 = vadd.f32 %v363, %v2783
      %v2785 = vpop.f32.mrb[0].mxu0
      %v2786 = vadd.f32 %v367, %v2785
      %2787 = vmatprep.mubr.bf16.mxu0 0
      %2788 = vmatmul.mubr.bf16.gmra.mrb[0].mxu0 %v724
      %v2789 = vpop.f32.mrb[0].mxu0
      %v2790 = vadd.f32 %v363, %v2789
      %v2791 = vpop.f32.mrb[0].mxu0
      %v2792 = vadd.f32 %v367, %v2791
      %v2793 = vpop.f32.mrb[0].mxu0
      %v2794 = vadd.f32 %v363, %v2793
      %v2795 = vpop.f32.mrb[0].mxu0
      %v2796 = vadd.f32 %v367, %v2795
      %2797 = vmatprep.mubr.bf16.mxu0 0
      %2798 = vmatmul.mubr.bf16.gmra.mrb[0].mxu0 %v727
      %v2799 = vpop.f32.mrb[0].mxu0
      %v2800 = vadd.f32 %v363, %v2799
      %v2801 = vpop.f32.mrb[0].mxu0
      %v2802 = vadd.f32 %v367, %v2801
      %v2803 = vpop.f32.mrb[0].mxu0
      %v2804 = vadd.f32 %v363, %v2803
      %v2805 = vpop.f32.mrb[0].mxu0
      %v2806 = vadd.f32 %v367, %v2805
      %2807 = vmatprep.mubr.bf16.mxu0 0
      %2808 = vmatmul.mubr.bf16.gmra.mrb[0].mxu0 %v730
      %v2809 = vpop.f32.mrb[0].mxu0
      %v2810 = vadd.f32 %v363, %v2809
      %v2811 = vpop.f32.mrb[0].mxu0
      %v2812 = vadd.f32 %v367, %v2811
      %v2813 = vpop.f32.mrb[0].mxu0
      %v2814 = vadd.f32 %v363, %v2813
      %v2815 = vpop.f32.mrb[0].mxu0
      %v2816 = vadd.f32 %v367, %v2815
      %2817 = vmatprep.mubr.bf16.mxu0 0
      %2818 = vmatmul.mubr.bf16.gmra.mrb[0].mxu0 %v733
      %v2819 = vpop.f32.mrb[0].mxu0
      %v2820 = vadd.f32 %v363, %v2819
      %v2821 = vpop.f32.mrb[0].mxu0
      %v2822 = vadd.f32 %v367, %v2821
      %v2823 = vpop.f32.mrb[0].mxu0
      %v2824 = vadd.f32 %v363, %v2823
      %v2825 = vpop.f32.mrb[0].mxu0
      %v2826 = vadd.f32 %v367, %v2825
      %2827 = vmatprep.mubr.bf16.mxu0 0
      %2828 = vmatmul.mubr.bf16.gmra.mrb[0].mxu0 %v736
      %v2829 = vpop.f32.mrb[0].mxu0
      %v2830 = vadd.f32 %v363, %v2829
      %v2831 = vpop.f32.mrb[0].mxu0
      %v2832 = vadd.f32 %v367, %v2831
      %v2833 = vpop.f32.mrb[0].mxu0
      %v2834 = vadd.f32 %v363, %v2833
      %v2835 = vpop.f32.mrb[0].mxu0
      %v2836 = vadd.f32 %v367, %v2835
      %2837 = vmatprep.mubr.bf16.mxu0 0
      %2838 = vmatmul.mubr.bf16.gmra.mrb[0].mxu0 %v739
      %v2839 = vpop.f32.mrb[0].mxu0
      %v2840 = vadd.f32 %v363, %v2839
      %v2841 = vpop.f32.mrb[0].mxu0
      %v2842 = vadd.f32 %v367, %v2841
      %v2843 = vpop.f32.mrb[0].mxu0
      %v2844 = vadd.f32 %v363, %v2843
      %v2845 = vpop.f32.mrb[0].mxu0
      %v2846 = vadd.f32 %v367, %v2845
      %2847 = vmatprep.mubr.bf16.mxu0 0
      %2848 = vmatmul.mubr.bf16.gmra.mrb[0].mxu0 %v742
      %v2849 = vpop.f32.mrb[0].mxu0
      %v2850 = vadd.f32 %v363, %v2849
      %v2851 = vpop.f32.mrb[0].mxu0
      %v2852 = vadd.f32 %v367, %v2851
      %v2853 = vpop.f32.mrb[0].mxu0
      %v2854 = vadd.f32 %v363, %v2853
      %v2855 = vpop.f32.mrb[0].mxu0
      %v2856 = vadd.f32 %v367, %v2855
      %2857 = vmatprep.mubr.bf16.mxu0 0
      %2858 = vmatmul.mubr.bf16.gmra.mrb[0].mxu0 %v745
      %v2859 = vpop.f32.mrb[0].mxu0
      %v2860 = vadd.f32 %v363, %v2859
      %v2861 = vpop.f32.mrb[0].mxu0
      %v2862 = vadd.f32 %v367, %v2861
      %v2863 = vpop.f32.mrb[0].mxu0
      %v2864 = vadd.f32 %v363, %v2863
      %v2865 = vpop.f32.mrb[0].mxu0
      %v2866 = vadd.f32 %v367, %v2865
      %2867 = vmatprep.mubr.bf16.mxu0 0
      %2868 = vmatmul.mubr.bf16.gmra.mrb[0].mxu0 %v748
      %v2869 = vpop.f32.mrb[0].mxu0
      %v2870 = vadd.f32 %v363, %v2869
      %v2871 = vpop.f32.mrb[0].mxu0
      %v2872 = vadd.f32 %v367, %v2871
      %v2873 = vpop.f32.mrb[0].mxu0
      %v2874 = vadd.f32 %v363, %v2873
      %v2875 = vpop.f32.mrb[0].mxu0
      %v2876 = vadd.f32 %v367, %v2875
      %2877 = vmatprep.mubr.bf16.mxu0 0
      %2878 = vmatmul.mubr.bf16.gmra.mrb[0].mxu0 %v751
      %v2879 = vpop.f32.mrb[0].mxu0
      %v2880 = vadd.f32 %v363, %v2879
      %v2881 = vpop.f32.mrb[0].mxu0
      %v2882 = vadd.f32 %v367, %v2881
      %v2883 = vpop.f32.mrb[0].mxu0
      %v2884 = vadd.f32 %v363, %v2883
      %v2885 = vpop.f32.mrb[0].mxu0
      %v2886 = vadd.f32 %v367, %v2885
      %2887 = vmatprep.mubr.bf16.mxu0 0
      %2888 = vmatmul.mubr.bf16.gmra.mrb[0].mxu0 %v754
      %v2889 = vpop.f32.mrb[0].mxu0
      %v2890 = vadd.f32 %v363, %v2889
      %v2891 = vpop.f32.mrb[0].mxu0
      %v2892 = vadd.f32 %v367, %v2891
      %v2893 = vpop.f32.mrb[0].mxu0
      %v2894 = vadd.f32 %v363, %v2893
      %v2895 = vpop.f32.mrb[0].mxu0
      %v2896 = vadd.f32 %v367, %v2895
      %2897 = vmatprep.mubr.bf16.mxu0 0
      %2898 = vmatmul.mubr.bf16.gmra.mrb[0].mxu0 %v757
      %v2899 = vpop.f32.mrb[0].mxu0
      %v2900 = vadd.f32 %v363, %v2899
      %v2901 = vpop.f32.mrb[0].mxu0
      %v2902 = vadd.f32 %v367, %v2901
      %v2903 = vpop.f32.mrb[0].mxu0
      %v2904 = vadd.f32 %v363, %v2903
      %v2905 = vpop.f32.mrb[0].mxu0
      %v2906 = vadd.f32 %v367, %v2905
      %2907 = vmatprep.mubr.bf16.mxu0 0
      %2908 = vmatmul.mubr.bf16.gmra.mrb[0].mxu0 %v760
      %v2909 = vpop.f32.mrb[0].mxu0
      %v2910 = vadd.f32 %v363, %v2909
      %v2911 = vpop.f32.mrb[0].mxu0
      %v2912 = vadd.f32 %v367, %v2911
      %v2913 = vpop.f32.mrb[0].mxu0
      %v2914 = vadd.f32 %v363, %v2913
      %v2915 = vpop.f32.mrb[0].mxu0
      %v2916 = vadd.f32 %v367, %v2915
      %2917 = vmatprep.mubr.bf16.mxu0 0
      %2918 = vmatmul.mubr.bf16.gmra.mrb[0].mxu0 %v763
      %v2919 = vpop.f32.mrb[0].mxu0
      %v2920 = vadd.f32 %v363, %v2919
      %v2921 = vpop.f32.mrb[0].mxu0
      %v2922 = vadd.f32 %v367, %v2921
      %v2923 = vpop.f32.mrb[0].mxu0
      %v2924 = vadd.f32 %v363, %v2923
      %v2925 = vpop.f32.mrb[0].mxu0
      %v2926 = vadd.f32 %v367, %v2925
      %2927 = vmatprep.mubr.bf16.mxu0 0
      %2928 = vmatmul.mubr.bf16.gmra.mrb[0].mxu0 %v766
      %v2929 = vpop.f32.mrb[0].mxu0
      %v2930 = vadd.f32 %v363, %v2929
      %v2931 = vpop.f32.mrb[0].mxu0
      %v2932 = vadd.f32 %v367, %v2931
      %v2933 = vpop.f32.mrb[0].mxu0
      %v2934 = vadd.f32 %v363, %v2933
      %v2935 = vpop.f32.mrb[0].mxu0
      %v2936 = vadd.f32 %v367, %v2935
      %2937 = vmatprep.mubr.bf16.mxu0 0
      %2938 = vmatmul.mubr.bf16.gmra.mrb[0].mxu0 %v769
      %v2939 = vpop.f32.mrb[0].mxu0
      %v2940 = vadd.f32 %v363, %v2939
      %v2941 = vpop.f32.mrb[0].mxu0
      %v2942 = vadd.f32 %v367, %v2941
      %v2943 = vpop.f32.mrb[0].mxu0
      %v2944 = vadd.f32 %v363, %v2943
      %v2945 = vpop.f32.mrb[0].mxu0
      %v2946 = vadd.f32 %v367, %v2945
      %2947 = vmatprep.mubr.bf16.mxu0 0
      %2948 = vmatmul.mubr.bf16.gmra.mrb[0].mxu0 %v772
      %v2949 = vpop.f32.mrb[0].mxu0
      %v2950 = vadd.f32 %v363, %v2949
      %v2951 = vpop.f32.mrb[0].mxu0
      %v2952 = vadd.f32 %v367, %v2951
      %v2953 = vpop.f32.mrb[0].mxu0
      %v2954 = vadd.f32 %v363, %v2953
      %v2955 = vpop.f32.mrb[0].mxu0
      %v2956 = vadd.f32 %v367, %v2955
      %2957 = vmatprep.mubr.bf16.mxu0 0
      %2958 = vmatmul.mubr.bf16.gmra.mrb[0].mxu0 %v775
      %v2959 = vpop.f32.mrb[0].mxu0
      %v2960 = vadd.f32 %v363, %v2959
      %v2961 = vpop.f32.mrb[0].mxu0
      %v2962 = vadd.f32 %v367, %v2961
      %v2963 = vpop.f32.mrb[0].mxu0
      %v2964 = vadd.f32 %v363, %v2963
      %v2965 = vpop.f32.mrb[0].mxu0
      %v2966 = vadd.f32 %v367, %v2965
      %2967 = vdwg.mxu0
      %2968 = vmatprep.subr.bf16.mxu0 %v643
      %2969 = vmatpush1.bf16.msra.mxu0 %v642
      %2970 = vmatprep.subr.bf16.mxu0 %v659
      %2971 = vmatpush1.bf16.msra.mxu0 %v658
      %2972 = vmatprep.subr.bf16.mxu0 0
      %2973 = vmatpush1.bf16.msra.mxu0 0
      %2974 = vmatprep.subr.bf16.mxu0 0
      %2975 = vmatpush1.bf16.msra.mxu0 0
      %2976 = vmatprep.subr.bf16.mxu0 0
      %2977 = vmatpush1.bf16.msra.mxu0 0
      %2978 = vmatprep.subr.bf16.mxu0 0
      %2979 = vmatpush1.bf16.msra.mxu0 0
      %2980 = vmatprep.subr.bf16.mxu0 0
      %2981 = vmatpush1.bf16.msra.mxu0 0
      %2982 = vmatprep.subr.bf16.mxu0 0
      %2983 = vmatpush1.bf16.msra.mxu0 0
      %2984 = vmatprep.subr.bf16.mxu0 0
      %2985 = vmatpush1.bf16.msra.mxu0 0
      %2986 = vmatprep.subr.bf16.mxu0 0
      %2987 = vmatpush1.bf16.msra.mxu0 0
      %2988 = vmatprep.subr.bf16.mxu0 0
      %2989 = vmatpush1.bf16.msra.mxu0 0
      %2990 = vmatprep.subr.bf16.mxu0 0
      %2991 = vmatpush1.bf16.msra.mxu0 0
      %2992 = vmatprep.subr.bf16.mxu0 0
      %2993 = vmatpush1.bf16.msra.mxu0 0
      %2994 = vmatprep.subr.bf16.mxu0 0
      %2995 = vmatpush1.bf16.msra.mxu0 0
      %2996 = vmatprep.subr.bf16.mxu0 0
      %2997 = vmatpush1.bf16.msra.mxu0 0
      %2998 = vmatprep.subr.bf16.mxu0 0
      %2999 = vmatpush1.bf16.msra.mxu0 0
      %3000 = vmatprep.mubr.bf16.mxu0 0
      %3001 = vmatmul.mubr.bf16.gmra.mrb[0].mxu0 %v694
      %v3002 = vpop.f32.mrb[0].mxu0
      %v3003 = vadd.f32 %v371, %v3002
      %v3004 = vpop.f32.mrb[0].mxu0
      %v3005 = vadd.f32 %v375, %v3004
      %v3006 = vpop.f32.mrb[0].mxu0
      %v3007 = vadd.f32 %v371, %v3006
      %v3008 = vpop.f32.mrb[0].mxu0
      %v3009 = vadd.f32 %v375, %v3008
      %3010 = vmatprep.mubr.bf16.mxu0 0
      %3011 = vmatmul.mubr.bf16.gmra.mrb[0].mxu0 %v697
      %v3012 = vpop.f32.mrb[0].mxu0
      %v3013 = vadd.f32 %v371, %v3012
      %v3014 = vpop.f32.mrb[0].mxu0
      %v3015 = vadd.f32 %v375, %v3014
      %v3016 = vpop.f32.mrb[0].mxu0
      %v3017 = vadd.f32 %v371, %v3016
      %v3018 = vpop.f32.mrb[0].mxu0
      %v3019 = vadd.f32 %v375, %v3018
      %3020 = vmatprep.mubr.bf16.mxu0 0
      %3021 = vmatmul.mubr.bf16.gmra.mrb[0].mxu0 %v700
      %v3022 = vpop.f32.mrb[0].mxu0
      %v3023 = vadd.f32 %v371, %v3022
      %v3024 = vpop.f32.mrb[0].mxu0
      %v3025 = vadd.f32 %v375, %v3024
      %v3026 = vpop.f32.mrb[0].mxu0
      %v3027 = vadd.f32 %v371, %v3026
      %v3028 = vpop.f32.mrb[0].mxu0
      %v3029 = vadd.f32 %v375, %v3028
      %3030 = vmatprep.mubr.bf16.mxu0 0
      %3031 = vmatmul.mubr.bf16.gmra.mrb[0].mxu0 %v703
      %v3032 = vpop.f32.mrb[0].mxu0
      %v3033 = vadd.f32 %v371, %v3032
      %v3034 = vpop.f32.mrb[0].mxu0
      %v3035 = vadd.f32 %v375, %v3034
      %v3036 = vpop.f32.mrb[0].mxu0
      %v3037 = vadd.f32 %v371, %v3036
      %v3038 = vpop.f32.mrb[0].mxu0
      %v3039 = vadd.f32 %v375, %v3038
      %3040 = vmatprep.mubr.bf16.mxu0 0
      %3041 = vmatmul.mubr.bf16.gmra.mrb[0].mxu0 %v706
      %v3042 = vpop.f32.mrb[0].mxu0
      %v3043 = vadd.f32 %v371, %v3042
      %v3044 = vpop.f32.mrb[0].mxu0
      %v3045 = vadd.f32 %v375, %v3044
      %v3046 = vpop.f32.mrb[0].mxu0
      %v3047 = vadd.f32 %v371, %v3046
      %v3048 = vpop.f32.mrb[0].mxu0
      %v3049 = vadd.f32 %v375, %v3048
      %3050 = vmatprep.mubr.bf16.mxu0 0
      %3051 = vmatmul.mubr.bf16.gmra.mrb[0].mxu0 %v709
      %v3052 = vpop.f32.mrb[0].mxu0
      %v3053 = vadd.f32 %v371, %v3052
      %v3054 = vpop.f32.mrb[0].mxu0
      %v3055 = vadd.f32 %v375, %v3054
      %v3056 = vpop.f32.mrb[0].mxu0
      %v3057 = vadd.f32 %v371, %v3056
      %v3058 = vpop.f32.mrb[0].mxu0
      %v3059 = vadd.f32 %v375, %v3058
      %3060 = vmatprep.mubr.bf16.mxu0 0
      %3061 = vmatmul.mubr.bf16.gmra.mrb[0].mxu0 %v712
      %v3062 = vpop.f32.mrb[0].mxu0
      %v3063 = vadd.f32 %v371, %v3062
      %v3064 = vpop.f32.mrb[0].mxu0
      %v3065 = vadd.f32 %v375, %v3064
      %v3066 = vpop.f32.mrb[0].mxu0
      %v3067 = vadd.f32 %v371, %v3066
      %v3068 = vpop.f32.mrb[0].mxu0
      %v3069 = vadd.f32 %v375, %v3068
      %3070 = vmatprep.mubr.bf16.mxu0 0
      %3071 = vmatmul.mubr.bf16.gmra.mrb[0].mxu0 %v715
      %v3072 = vpop.f32.mrb[0].mxu0
      %v3073 = vadd.f32 %v371, %v3072
      %v3074 = vpop.f32.mrb[0].mxu0
      %v3075 = vadd.f32 %v375, %v3074
      %v3076 = vpop.f32.mrb[0].mxu0
      %v3077 = vadd.f32 %v371, %v3076
      %v3078 = vpop.f32.mrb[0].mxu0
      %v3079 = vadd.f32 %v375, %v3078
      %3080 = vmatprep.mubr.bf16.mxu0 0
      %3081 = vmatmul.mubr.bf16.gmra.mrb[0].mxu0 %v718
      %v3082 = vpop.f32.mrb[0].mxu0
      %v3083 = vadd.f32 %v371, %v3082
      %v3084 = vpop.f32.mrb[0].mxu0
      %v3085 = vadd.f32 %v375, %v3084
      %v3086 = vpop.f32.mrb[0].mxu0
      %v3087 = vadd.f32 %v371, %v3086
      %v3088 = vpop.f32.mrb[0].mxu0
      %v3089 = vadd.f32 %v375, %v3088
      %3090 = vmatprep.mubr.bf16.mxu0 0
      %3091 = vmatmul.mubr.bf16.gmra.mrb[0].mxu0 %v721
      %v3092 = vpop.f32.mrb[0].mxu0
      %v3093 = vadd.f32 %v371, %v3092
      %v3094 = vpop.f32.mrb[0].mxu0
      %v3095 = vadd.f32 %v375, %v3094
      %v3096 = vpop.f32.mrb[0].mxu0
      %v3097 = vadd.f32 %v371, %v3096
      %v3098 = vpop.f32.mrb[0].mxu0
      %v3099 = vadd.f32 %v375, %v3098
      %3100 = vmatprep.mubr.bf16.mxu0 0
      %3101 = vmatmul.mubr.bf16.gmra.mrb[0].mxu0 %v724
      %v3102 = vpop.f32.mrb[0].mxu0
      %v3103 = vadd.f32 %v371, %v3102
      %v3104 = vpop.f32.mrb[0].mxu0
      %v3105 = vadd.f32 %v375, %v3104
      %v3106 = vpop.f32.mrb[0].mxu0
      %v3107 = vadd.f32 %v371, %v3106
      %v3108 = vpop.f32.mrb[0].mxu0
      %v3109 = vadd.f32 %v375, %v3108
      %3110 = vmatprep.mubr.bf16.mxu0 0
      %3111 = vmatmul.mubr.bf16.gmra.mrb[0].mxu0 %v727
      %v3112 = vpop.f32.mrb[0].mxu0
      %v3113 = vadd.f32 %v371, %v3112
      %v3114 = vpop.f32.mrb[0].mxu0
      %v3115 = vadd.f32 %v375, %v3114
      %v3116 = vpop.f32.mrb[0].mxu0
      %v3117 = vadd.f32 %v371, %v3116
      %v3118 = vpop.f32.mrb[0].mxu0
      %v3119 = vadd.f32 %v375, %v3118
      %3120 = vmatprep.mubr.bf16.mxu0 0
      %3121 = vmatmul.mubr.bf16.gmra.mrb[0].mxu0 %v730
      %v3122 = vpop.f32.mrb[0].mxu0
      %v3123 = vadd.f32 %v371, %v3122
      %v3124 = vpop.f32.mrb[0].mxu0
      %v3125 = vadd.f32 %v375, %v3124
      %v3126 = vpop.f32.mrb[0].mxu0
      %v3127 = vadd.f32 %v371, %v3126
      %v3128 = vpop.f32.mrb[0].mxu0
      %v3129 = vadd.f32 %v375, %v3128
      %3130 = vmatprep.mubr.bf16.mxu0 0
      %3131 = vmatmul.mubr.bf16.gmra.mrb[0].mxu0 %v733
      %v3132 = vpop.f32.mrb[0].mxu0
      %v3133 = vadd.f32 %v371, %v3132
      %v3134 = vpop.f32.mrb[0].mxu0
      %v3135 = vadd.f32 %v375, %v3134
      %v3136 = vpop.f32.mrb[0].mxu0
      %v3137 = vadd.f32 %v371, %v3136
      %v3138 = vpop.f32.mrb[0].mxu0
      %v3139 = vadd.f32 %v375, %v3138
      %3140 = vmatprep.mubr.bf16.mxu0 0
      %3141 = vmatmul.mubr.bf16.gmra.mrb[0].mxu0 %v736
      %v3142 = vpop.f32.mrb[0].mxu0
      %v3143 = vadd.f32 %v371, %v3142
      %v3144 = vpop.f32.mrb[0].mxu0
      %v3145 = vadd.f32 %v375, %v3144
      %v3146 = vpop.f32.mrb[0].mxu0
      %v3147 = vadd.f32 %v371, %v3146
      %v3148 = vpop.f32.mrb[0].mxu0
      %v3149 = vadd.f32 %v375, %v3148
      %3150 = vmatprep.mubr.bf16.mxu0 0
      %3151 = vmatmul.mubr.bf16.gmra.mrb[0].mxu0 %v739
      %v3152 = vpop.f32.mrb[0].mxu0
      %v3153 = vadd.f32 %v371, %v3152
      %v3154 = vpop.f32.mrb[0].mxu0
      %v3155 = vadd.f32 %v375, %v3154
      %v3156 = vpop.f32.mrb[0].mxu0
      %v3157 = vadd.f32 %v371, %v3156
      %v3158 = vpop.f32.mrb[0].mxu0
      %v3159 = vadd.f32 %v375, %v3158
      %3160 = vmatprep.mubr.bf16.mxu0 0
      %3161 = vmatmul.mubr.bf16.gmra.mrb[0].mxu0 %v742
      %v3162 = vpop.f32.mrb[0].mxu0
      %v3163 = vadd.f32 %v371, %v3162
      %v3164 = vpop.f32.mrb[0].mxu0
      %v3165 = vadd.f32 %v375, %v3164
      %v3166 = vpop.f32.mrb[0].mxu0
      %v3167 = vadd.f32 %v371, %v3166
      %v3168 = vpop.f32.mrb[0].mxu0
      %v3169 = vadd.f32 %v375, %v3168
      %3170 = vmatprep.mubr.bf16.mxu0 0
      %3171 = vmatmul.mubr.bf16.gmra.mrb[0].mxu0 %v745
      %v3172 = vpop.f32.mrb[0].mxu0
      %v3173 = vadd.f32 %v371, %v3172
      %v3174 = vpop.f32.mrb[0].mxu0
      %v3175 = vadd.f32 %v375, %v3174
      %v3176 = vpop.f32.mrb[0].mxu0
      %v3177 = vadd.f32 %v371, %v3176
      %v3178 = vpop.f32.mrb[0].mxu0
      %v3179 = vadd.f32 %v375, %v3178
      %3180 = vmatprep.mubr.bf16.mxu0 0
      %3181 = vmatmul.mubr.bf16.gmra.mrb[0].mxu0 %v748
      %v3182 = vpop.f32.mrb[0].mxu0
      %v3183 = vadd.f32 %v371, %v3182
      %v3184 = vpop.f32.mrb[0].mxu0
      %v3185 = vadd.f32 %v375, %v3184
      %v3186 = vpop.f32.mrb[0].mxu0
      %v3187 = vadd.f32 %v371, %v3186
      %v3188 = vpop.f32.mrb[0].mxu0
      %v3189 = vadd.f32 %v375, %v3188
      %3190 = vmatprep.mubr.bf16.mxu0 0
      %3191 = vmatmul.mubr.bf16.gmra.mrb[0].mxu0 %v751
      %v3192 = vpop.f32.mrb[0].mxu0
      %v3193 = vadd.f32 %v371, %v3192
      %v3194 = vpop.f32.mrb[0].mxu0
      %v3195 = vadd.f32 %v375, %v3194
      %v3196 = vpop.f32.mrb[0].mxu0
      %v3197 = vadd.f32 %v371, %v3196
      %v3198 = vpop.f32.mrb[0].mxu0
      %v3199 = vadd.f32 %v375, %v3198
      %3200 = vmatprep.mubr.bf16.mxu0 0
      %3201 = vmatmul.mubr.bf16.gmra.mrb[0].mxu0 %v754
      %v3202 = vpop.f32.mrb[0].mxu0
      %v3203 = vadd.f32 %v371, %v3202
      %v3204 = vpop.f32.mrb[0].mxu0
      %v3205 = vadd.f32 %v375, %v3204
      %v3206 = vpop.f32.mrb[0].mxu0
      %v3207 = vadd.f32 %v371, %v3206
      %v3208 = vpop.f32.mrb[0].mxu0
      %v3209 = vadd.f32 %v375, %v3208
      %3210 = vmatprep.mubr.bf16.mxu0 0
      %3211 = vmatmul.mubr.bf16.gmra.mrb[0].mxu0 %v757
      %v3212 = vpop.f32.mrb[0].mxu0
      %v3213 = vadd.f32 %v371, %v3212
      %v3214 = vpop.f32.mrb[0].mxu0
      %v3215 = vadd.f32 %v375, %v3214
      %v3216 = vpop.f32.mrb[0].mxu0
      %v3217 = vadd.f32 %v371, %v3216
      %v3218 = vpop.f32.mrb[0].mxu0
      %v3219 = vadd.f32 %v375, %v3218
      %3220 = vmatprep.mubr.bf16.mxu0 0
      %3221 = vmatmul.mubr.bf16.gmra.mrb[0].mxu0 %v760
      %v3222 = vpop.f32.mrb[0].mxu0
      %v3223 = vadd.f32 %v371, %v3222
      %v3224 = vpop.f32.mrb[0].mxu0
      %v3225 = vadd.f32 %v375, %v3224
      %v3226 = vpop.f32.mrb[0].mxu0
      %v3227 = vadd.f32 %v371, %v3226
      %v3228 = vpop.f32.mrb[0].mxu0
      %v3229 = vadd.f32 %v375, %v3228
      %3230 = vmatprep.mubr.bf16.mxu0 0
      %3231 = vmatmul.mubr.bf16.gmra.mrb[0].mxu0 %v763
      %v3232 = vpop.f32.mrb[0].mxu0
      %v3233 = vadd.f32 %v371, %v3232
      %v3234 = vpop.f32.mrb[0].mxu0
      %v3235 = vadd.f32 %v375, %v3234
      %v3236 = vpop.f32.mrb[0].mxu0
      %v3237 = vadd.f32 %v371, %v3236
      %v3238 = vpop.f32.mrb[0].mxu0
      %v3239 = vadd.f32 %v375, %v3238
      %3240 = vmatprep.mubr.bf16.mxu0 0
      %3241 = vmatmul.mubr.bf16.gmra.mrb[0].mxu0 %v766
      %v3242 = vpop.f32.mrb[0].mxu0
      %v3243 = vadd.f32 %v371, %v3242
      %v3244 = vpop.f32.mrb[0].mxu0
      %v3245 = vadd.f32 %v375, %v3244
      %v3246 = vpop.f32.mrb[0].mxu0
      %v3247 = vadd.f32 %v371, %v3246
      %v3248 = vpop.f32.mrb[0].mxu0
      %v3249 = vadd.f32 %v375, %v3248
      %3250 = vmatprep.mubr.bf16.mxu0 0
      %3251 = vmatmul.mubr.bf16.gmra.mrb[0].mxu0 %v769
      %v3252 = vpop.f32.mrb[0].mxu0
      %v3253 = vadd.f32 %v371, %v3252
      %v3254 = vpop.f32.mrb[0].mxu0
      %v3255 = vadd.f32 %v375, %v3254
      %v3256 = vpop.f32.mrb[0].mxu0
      %v3257 = vadd.f32 %v371, %v3256
      %v3258 = vpop.f32.mrb[0].mxu0
      %v3259 = vadd.f32 %v375, %v3258
      %3260 = vmatprep.mubr.bf16.mxu0 0
      %3261 = vmatmul.mubr.bf16.gmra.mrb[0].mxu0 %v772
      %v3262 = vpop.f32.mrb[0].mxu0
      %v3263 = vadd.f32 %v371, %v3262
      %v3264 = vpop.f32.mrb[0].mxu0
      %v3265 = vadd.f32 %v375, %v3264
      %v3266 = vpop.f32.mrb[0].mxu0
      %v3267 = vadd.f32 %v371, %v3266
      %v3268 = vpop.f32.mrb[0].mxu0
      %v3269 = vadd.f32 %v375, %v3268
      %3270 = vmatprep.mubr.bf16.mxu0 0
      %3271 = vmatmul.mubr.bf16.gmra.mrb[0].mxu0 %v775
      %v3272 = vpop.f32.mrb[0].mxu0
      %v3273 = vadd.f32 %v371, %v3272
      %v3274 = vpop.f32.mrb[0].mxu0
      %v3275 = vadd.f32 %v375, %v3274
      %v3276 = vpop.f32.mrb[0].mxu0
      %v3277 = vadd.f32 %v371, %v3276
      %v3278 = vpop.f32.mrb[0].mxu0
      %v3279 = vadd.f32 %v375, %v3278
      %3280 = vdwg.mxu0
      %v3281 = vmax.f32 %v812, 0.0
      %v3282 = vmax.f32 %v814, 0.0
      %v3283 = vmax.f32 %v1125, 0.0
      %v3284 = vmax.f32 %v1127, 0.0
      %v3285 = vmax.f32 %v1438, 0.0
      %v3286 = vmax.f32 %v1440, 0.0
      %v3287 = vmax.f32 %v1751, 0.0
      %v3288 = vmax.f32 %v1753, 0.0
      %v3289 = vmax.f32 %v2064, 0.0
      %v3290 = vmax.f32 %v2066, 0.0
      %v3291 = vmax.f32 %v2377, 0.0
      %v3292 = vmax.f32 %v2379, 0.0
      %v3293 = vmax.f32 %v2690, 0.0
      %v3294 = vmax.f32 %v2692, 0.0
      %v3295 = vmax.f32 %v3003, 0.0
      %v3296 = vmax.f32 %v3005, 0.0
      %v3297 = vmax.f32 %v816, 0.0
      %v3298 = vmax.f32 %v818, 0.0
      %v3299 = vmax.f32 %v1129, 0.0
      %v3300 = vmax.f32 %v1131, 0.0
      %v3301 = vmax.f32 %v1442, 0.0
      %v3302 = vmax.f32 %v1444, 0.0
      %v3303 = vmax.f32 %v1755, 0.0
      %v3304 = vmax.f32 %v1757, 0.0
      %v3305 = vmax.f32 %v2068, 0.0
      %v3306 = vmax.f32 %v2070, 0.0
      %v3307 = vmax.f32 %v2381, 0.0
      %v3308 = vmax.f32 %v2383, 0.0
      %v3309 = vmax.f32 %v2694, 0.0
      %v3310 = vmax.f32 %v2696, 0.0
      %v3311 = vmax.f32 %v3007, 0.0
      %v3312 = vmax.f32 %v3009, 0.0
      %v3313 = vmax.f32 %v822, 0.0
      %v3314 = vmax.f32 %v824, 0.0
      %v3315 = vmax.f32 %v1135, 0.0
      %v3316 = vmax.f32 %v1137, 0.0
      %v3317 = vmax.f32 %v1448, 0.0
      %v3318 = vmax.f32 %v1450, 0.0
      %v3319 = vmax.f32 %v1761, 0.0
      %v3320 = vmax.f32 %v1763, 0.0
      %v3321 = vmax.f32 %v2074, 0.0
      %v3322 = vmax.f32 %v2076, 0.0
      %v3323 = vmax.f32 %v2387, 0.0
      %v3324 = vmax.f32 %v2389, 0.0
      %v3325 = vmax.f32 %v2700, 0.0
      %v3326 = vmax.f32 %v2702, 0.0
      %v3327 = vmax.f32 %v3013, 0.0
      %v3328 = vmax.f32 %v3015, 0.0
      %v3329 = vmax.f32 %v826, 0.0
      %v3330 = vmax.f32 %v828, 0.0
      %v3331 = vmax.f32 %v1139, 0.0
      %v3332 = vmax.f32 %v1141, 0.0
      %v3333 = vmax.f32 %v1452, 0.0
      %v3334 = vmax.f32 %v1454, 0.0
      %v3335 = vmax.f32 %v1765, 0.0
      %v3336 = vmax.f32 %v1767, 0.0
      %v3337 = vmax.f32 %v2078, 0.0
      %v3338 = vmax.f32 %v2080, 0.0
      %v3339 = vmax.f32 %v2391, 0.0
      %v3340 = vmax.f32 %v2393, 0.0
      %v3341 = vmax.f32 %v2704, 0.0
      %v3342 = vmax.f32 %v2706, 0.0
      %v3343 = vmax.f32 %v3017, 0.0
      %v3344 = vmax.f32 %v3019, 0.0
      %v3345 = vmax.f32 %v832, 0.0
      %v3346 = vmax.f32 %v834, 0.0
      %v3347 = vmax.f32 %v1145, 0.0
      %v3348 = vmax.f32 %v1147, 0.0
      %v3349 = vmax.f32 %v1458, 0.0
      %v3350 = vmax.f32 %v1460, 0.0
      %v3351 = vmax.f32 %v1771, 0.0
      %v3352 = vmax.f32 %v1773, 0.0
      %v3353 = vmax.f32 %v2084, 0.0
      %v3354 = vmax.f32 %v2086, 0.0
      %v3355 = vmax.f32 %v2397, 0.0
      %v3356 = vmax.f32 %v2399, 0.0
      %v3357 = vmax.f32 %v2710, 0.0
      %v3358 = vmax.f32 %v2712, 0.0
      %v3359 = vmax.f32 %v3023, 0.0
      %v3360 = vmax.f32 %v3025, 0.0
      %v3361 = vmax.f32 %v836, 0.0
      %v3362 = vmax.f32 %v838, 0.0
      %v3363 = vmax.f32 %v1149, 0.0
      %v3364 = vmax.f32 %v1151, 0.0
      %v3365 = vmax.f32 %v1462, 0.0
      %v3366 = vmax.f32 %v1464, 0.0
      %v3367 = vmax.f32 %v1775, 0.0
      %v3368 = vmax.f32 %v1777, 0.0
      %v3369 = vmax.f32 %v2088, 0.0
      %v3370 = vmax.f32 %v2090, 0.0
      %v3371 = vmax.f32 %v2401, 0.0
      %v3372 = vmax.f32 %v2403, 0.0
      %v3373 = vmax.f32 %v2714, 0.0
      %v3374 = vmax.f32 %v2716, 0.0
      %v3375 = vmax.f32 %v3027, 0.0
      %v3376 = vmax.f32 %v3029, 0.0
      %v3377 = vmax.f32 %v842, 0.0
      %v3378 = vmax.f32 %v844, 0.0
      %v3379 = vmax.f32 %v1155, 0.0
      %v3380 = vmax.f32 %v1157, 0.0
      %v3381 = vmax.f32 %v1468, 0.0
      %v3382 = vmax.f32 %v1470, 0.0
      %v3383 = vmax.f32 %v1781, 0.0
      %v3384 = vmax.f32 %v1783, 0.0
      %v3385 = vmax.f32 %v2094, 0.0
      %v3386 = vmax.f32 %v2096, 0.0
      %v3387 = vmax.f32 %v2407, 0.0
      %v3388 = vmax.f32 %v2409, 0.0
      %v3389 = vmax.f32 %v2720, 0.0
      %v3390 = vmax.f32 %v2722, 0.0
      %v3391 = vmax.f32 %v3033, 0.0
      %v3392 = vmax.f32 %v3035, 0.0
      %v3393 = vmax.f32 %v846, 0.0
      %v3394 = vmax.f32 %v848, 0.0
      %v3395 = vmax.f32 %v1159, 0.0
      %v3396 = vmax.f32 %v1161, 0.0
      %v3397 = vmax.f32 %v1472, 0.0
      %v3398 = vmax.f32 %v1474, 0.0
      %v3399 = vmax.f32 %v1785, 0.0
      %v3400 = vmax.f32 %v1787, 0.0
      %v3401 = vmax.f32 %v2098, 0.0
      %v3402 = vmax.f32 %v2100, 0.0
      %v3403 = vmax.f32 %v2411, 0.0
      %v3404 = vmax.f32 %v2413, 0.0
      %v3405 = vmax.f32 %v2724, 0.0
      %v3406 = vmax.f32 %v2726, 0.0
      %v3407 = vmax.f32 %v3037, 0.0
      %v3408 = vmax.f32 %v3039, 0.0
      %v3409 = vmax.f32 %v852, 0.0
      %v3410 = vmax.f32 %v854, 0.0
      %v3411 = vmax.f32 %v1165, 0.0
      %v3412 = vmax.f32 %v1167, 0.0
      %v3413 = vmax.f32 %v1478, 0.0
      %v3414 = vmax.f32 %v1480, 0.0
      %v3415 = vmax.f32 %v1791, 0.0
      %v3416 = vmax.f32 %v1793, 0.0
      %v3417 = vmax.f32 %v2104, 0.0
      %v3418 = vmax.f32 %v2106, 0.0
      %v3419 = vmax.f32 %v2417, 0.0
      %v3420 = vmax.f32 %v2419, 0.0
      %v3421 = vmax.f32 %v2730, 0.0
      %v3422 = vmax.f32 %v2732, 0.0
      %v3423 = vmax.f32 %v3043, 0.0
      %v3424 = vmax.f32 %v3045, 0.0
      %v3425 = vmax.f32 %v856, 0.0
      %v3426 = vmax.f32 %v858, 0.0
      %v3427 = vmax.f32 %v1169, 0.0
      %v3428 = vmax.f32 %v1171, 0.0
      %v3429 = vmax.f32 %v1482, 0.0
      %v3430 = vmax.f32 %v1484, 0.0
      %v3431 = vmax.f32 %v1795, 0.0
      %v3432 = vmax.f32 %v1797, 0.0
      %v3433 = vmax.f32 %v2108, 0.0
      %v3434 = vmax.f32 %v2110, 0.0
      %v3435 = vmax.f32 %v2421, 0.0
      %v3436 = vmax.f32 %v2423, 0.0
      %v3437 = vmax.f32 %v2734, 0.0
      %v3438 = vmax.f32 %v2736, 0.0
      %v3439 = vmax.f32 %v3047, 0.0
      %v3440 = vmax.f32 %v3049, 0.0
      %v3441 = vmax.f32 %v862, 0.0
      %v3442 = vmax.f32 %v864, 0.0
      %v3443 = vmax.f32 %v1175, 0.0
      %v3444 = vmax.f32 %v1177, 0.0
      %v3445 = vmax.f32 %v1488, 0.0
      %v3446 = vmax.f32 %v1490, 0.0
      %v3447 = vmax.f32 %v1801, 0.0
      %v3448 = vmax.f32 %v1803, 0.0
      %v3449 = vmax.f32 %v2114, 0.0
      %v3450 = vmax.f32 %v2116, 0.0
      %v3451 = vmax.f32 %v2427, 0.0
      %v3452 = vmax.f32 %v2429, 0.0
      %v3453 = vmax.f32 %v2740, 0.0
      %v3454 = vmax.f32 %v2742, 0.0
      %v3455 = vmax.f32 %v3053, 0.0
      %v3456 = vmax.f32 %v3055, 0.0
      %v3457 = vmax.f32 %v866, 0.0
      %v3458 = vmax.f32 %v868, 0.0
      %v3459 = vmax.f32 %v1179, 0.0
      %v3460 = vmax.f32 %v1181, 0.0
      %v3461 = vmax.f32 %v1492, 0.0
      %v3462 = vmax.f32 %v1494, 0.0
      %v3463 = vmax.f32 %v1805, 0.0
      %v3464 = vmax.f32 %v1807, 0.0
      %v3465 = vmax.f32 %v2118, 0.0
      %v3466 = vmax.f32 %v2120, 0.0
      %v3467 = vmax.f32 %v2431, 0.0
      %v3468 = vmax.f32 %v2433, 0.0
      %v3469 = vmax.f32 %v2744, 0.0
      %v3470 = vmax.f32 %v2746, 0.0
      %v3471 = vmax.f32 %v3057, 0.0
      %v3472 = vmax.f32 %v3059, 0.0
      %v3473 = vmax.f32 %v872, 0.0
      %v3474 = vmax.f32 %v874, 0.0
      %v3475 = vmax.f32 %v1185, 0.0
      %v3476 = vmax.f32 %v1187, 0.0
      %v3477 = vmax.f32 %v1498, 0.0
      %v3478 = vmax.f32 %v1500, 0.0
      %v3479 = vmax.f32 %v1811, 0.0
      %v3480 = vmax.f32 %v1813, 0.0
      %v3481 = vmax.f32 %v2124, 0.0
      %v3482 = vmax.f32 %v2126, 0.0
      %v3483 = vmax.f32 %v2437, 0.0
      %v3484 = vmax.f32 %v2439, 0.0
      %v3485 = vmax.f32 %v2750, 0.0
      %v3486 = vmax.f32 %v2752, 0.0
      %v3487 = vmax.f32 %v3063, 0.0
      %v3488 = vmax.f32 %v3065, 0.0
      %v3489 = vmax.f32 %v876, 0.0
      %v3490 = vmax.f32 %v878, 0.0
      %v3491 = vmax.f32 %v1189, 0.0
      %v3492 = vmax.f32 %v1191, 0.0
      %v3493 = vmax.f32 %v1502, 0.0
      %v3494 = vmax.f32 %v1504, 0.0
      %v3495 = vmax.f32 %v1815, 0.0
      %v3496 = vmax.f32 %v1817, 0.0
      %v3497 = vmax.f32 %v2128, 0.0
      %v3498 = vmax.f32 %v2130, 0.0
      %v3499 = vmax.f32 %v2441, 0.0
      %v3500 = vmax.f32 %v2443, 0.0
      %v3501 = vmax.f32 %v2754, 0.0
      %v3502 = vmax.f32 %v2756, 0.0
      %v3503 = vmax.f32 %v3067, 0.0
      %v3504 = vmax.f32 %v3069, 0.0
      %v3505 = vmax.f32 %v882, 0.0
      %v3506 = vmax.f32 %v884, 0.0
      %v3507 = vmax.f32 %v1195, 0.0
      %v3508 = vmax.f32 %v1197, 0.0
      %v3509 = vmax.f32 %v1508, 0.0
      %v3510 = vmax.f32 %v1510, 0.0
      %v3511 = vmax.f32 %v1821, 0.0
      %v3512 = vmax.f32 %v1823, 0.0
      %v3513 = vmax.f32 %v2134, 0.0
      %v3514 = vmax.f32 %v2136, 0.0
      %v3515 = vmax.f32 %v2447, 0.0
      %v3516 = vmax.f32 %v2449, 0.0
      %v3517 = vmax.f32 %v2760, 0.0
      %v3518 = vmax.f32 %v2762, 0.0
      %v3519 = vmax.f32 %v3073, 0.0
      %v3520 = vmax.f32 %v3075, 0.0
      %v3521 = vmax.f32 %v886, 0.0
      %v3522 = vmax.f32 %v888, 0.0
      %v3523 = vmax.f32 %v1199, 0.0
      %v3524 = vmax.f32 %v1201, 0.0
      %v3525 = vmax.f32 %v1512, 0.0
      %v3526 = vmax.f32 %v1514, 0.0
      %v3527 = vmax.f32 %v1825, 0.0
      %v3528 = vmax.f32 %v1827, 0.0
      %v3529 = vmax.f32 %v2138, 0.0
      %v3530 = vmax.f32 %v2140, 0.0
      %v3531 = vmax.f32 %v2451, 0.0
      %v3532 = vmax.f32 %v2453, 0.0
      %v3533 = vmax.f32 %v2764, 0.0
      %v3534 = vmax.f32 %v2766, 0.0
      %v3535 = vmax.f32 %v3077, 0.0
      %v3536 = vmax.f32 %v3079, 0.0
      %v3537 = vmax.f32 %v892, 0.0
      %v3538 = vmax.f32 %v894, 0.0
      %v3539 = vmax.f32 %v1205, 0.0
      %v3540 = vmax.f32 %v1207, 0.0
      %v3541 = vmax.f32 %v1518, 0.0
      %v3542 = vmax.f32 %v1520, 0.0
      %v3543 = vmax.f32 %v1831, 0.0
      %v3544 = vmax.f32 %v1833, 0.0
      %v3545 = vmax.f32 %v2144, 0.0
      %v3546 = vmax.f32 %v2146, 0.0
      %v3547 = vmax.f32 %v2457, 0.0
      %v3548 = vmax.f32 %v2459, 0.0
      %v3549 = vmax.f32 %v2770, 0.0
      %v3550 = vmax.f32 %v2772, 0.0
      %v3551 = vmax.f32 %v3083, 0.0
      %v3552 = vmax.f32 %v3085, 0.0
      %v3553 = vmax.f32 %v896, 0.0
      %v3554 = vmax.f32 %v898, 0.0
      %v3555 = vmax.f32 %v1209, 0.0
      %v3556 = vmax.f32 %v1211, 0.0
      %v3557 = vmax.f32 %v1522, 0.0
      %v3558 = vmax.f32 %v1524, 0.0
      %v3559 = vmax.f32 %v1835, 0.0
      %v3560 = vmax.f32 %v1837, 0.0
      %v3561 = vmax.f32 %v2148, 0.0
      %v3562 = vmax.f32 %v2150, 0.0
      %v3563 = vmax.f32 %v2461, 0.0
      %v3564 = vmax.f32 %v2463, 0.0
      %v3565 = vmax.f32 %v2774, 0.0
      %v3566 = vmax.f32 %v2776, 0.0
      %v3567 = vmax.f32 %v3087, 0.0
      %v3568 = vmax.f32 %v3089, 0.0
      %v3569 = vmax.f32 %v902, 0.0
      %v3570 = vmax.f32 %v904, 0.0
      %v3571 = vmax.f32 %v1215, 0.0
      %v3572 = vmax.f32 %v1217, 0.0
      %v3573 = vmax.f32 %v1528, 0.0
      %v3574 = vmax.f32 %v1530, 0.0
      %v3575 = vmax.f32 %v1841, 0.0
      %v3576 = vmax.f32 %v1843, 0.0
      %v3577 = vmax.f32 %v2154, 0.0
      %v3578 = vmax.f32 %v2156, 0.0
      %v3579 = vmax.f32 %v2467, 0.0
      %v3580 = vmax.f32 %v2469, 0.0
      %v3581 = vmax.f32 %v2780, 0.0
      %v3582 = vmax.f32 %v2782, 0.0
      %v3583 = vmax.f32 %v3093, 0.0
      %v3584 = vmax.f32 %v3095, 0.0
      %v3585 = vmax.f32 %v906, 0.0
      %v3586 = vmax.f32 %v908, 0.0
      %v3587 = vmax.f32 %v1219, 0.0
      %v3588 = vmax.f32 %v1221, 0.0
      %v3589 = vmax.f32 %v1532, 0.0
      %v3590 = vmax.f32 %v1534, 0.0
      %v3591 = vmax.f32 %v1845, 0.0
      %v3592 = vmax.f32 %v1847, 0.0
      %v3593 = vmax.f32 %v2158, 0.0
      %v3594 = vmax.f32 %v2160, 0.0
      %v3595 = vmax.f32 %v2471, 0.0
      %v3596 = vmax.f32 %v2473, 0.0
      %v3597 = vmax.f32 %v2784, 0.0
      %v3598 = vmax.f32 %v2786, 0.0
      %v3599 = vmax.f32 %v3097, 0.0
      %v3600 = vmax.f32 %v3099, 0.0
      %v3601 = vmax.f32 %v912, 0.0
      %v3602 = vmax.f32 %v914, 0.0
      %v3603 = vmax.f32 %v1225, 0.0
      %v3604 = vmax.f32 %v1227, 0.0
      %v3605 = vmax.f32 %v1538, 0.0
      %v3606 = vmax.f32 %v1540, 0.0
      %v3607 = vmax.f32 %v1851, 0.0
      %v3608 = vmax.f32 %v1853, 0.0
      %v3609 = vmax.f32 %v2164, 0.0
      %v3610 = vmax.f32 %v2166, 0.0
      %v3611 = vmax.f32 %v2477, 0.0
      %v3612 = vmax.f32 %v2479, 0.0
      %v3613 = vmax.f32 %v2790, 0.0
      %v3614 = vmax.f32 %v2792, 0.0
      %v3615 = vmax.f32 %v3103, 0.0
      %v3616 = vmax.f32 %v3105, 0.0
      %v3617 = vmax.f32 %v916, 0.0
      %v3618 = vmax.f32 %v918, 0.0
      %v3619 = vmax.f32 %v1229, 0.0
      %v3620 = vmax.f32 %v1231, 0.0
      %v3621 = vmax.f32 %v1542, 0.0
      %v3622 = vmax.f32 %v1544, 0.0
      %v3623 = vmax.f32 %v1855, 0.0
      %v3624 = vmax.f32 %v1857, 0.0
      %v3625 = vmax.f32 %v2168, 0.0
      %v3626 = vmax.f32 %v2170, 0.0
      %v3627 = vmax.f32 %v2481, 0.0
      %v3628 = vmax.f32 %v2483, 0.0
      %v3629 = vmax.f32 %v2794, 0.0
      %v3630 = vmax.f32 %v2796, 0.0
      %v3631 = vmax.f32 %v3107, 0.0
      %v3632 = vmax.f32 %v3109, 0.0
      %v3633 = vmax.f32 %v922, 0.0
      %v3634 = vmax.f32 %v924, 0.0
      %v3635 = vmax.f32 %v1235, 0.0
      %v3636 = vmax.f32 %v1237, 0.0
      %v3637 = vmax.f32 %v1548, 0.0
      %v3638 = vmax.f32 %v1550, 0.0
      %v3639 = vmax.f32 %v1861, 0.0
      %v3640 = vmax.f32 %v1863, 0.0
      %v3641 = vmax.f32 %v2174, 0.0
      %v3642 = vmax.f32 %v2176, 0.0
      %v3643 = vmax.f32 %v2487, 0.0
      %v3644 = vmax.f32 %v2489, 0.0
      %v3645 = vmax.f32 %v2800, 0.0
      %v3646 = vmax.f32 %v2802, 0.0
      %v3647 = vmax.f32 %v3113, 0.0
      %v3648 = vmax.f32 %v3115, 0.0
      %v3649 = vmax.f32 %v926, 0.0
      %v3650 = vmax.f32 %v928, 0.0
      %v3651 = vmax.f32 %v1239, 0.0
      %v3652 = vmax.f32 %v1241, 0.0
      %v3653 = vmax.f32 %v1552, 0.0
      %v3654 = vmax.f32 %v1554, 0.0
      %v3655 = vmax.f32 %v1865, 0.0
      %v3656 = vmax.f32 %v1867, 0.0
      %v3657 = vmax.f32 %v2178, 0.0
      %v3658 = vmax.f32 %v2180, 0.0
      %v3659 = vmax.f32 %v2491, 0.0
      %v3660 = vmax.f32 %v2493, 0.0
      %v3661 = vmax.f32 %v2804, 0.0
      %v3662 = vmax.f32 %v2806, 0.0
      %v3663 = vmax.f32 %v3117, 0.0
      %v3664 = vmax.f32 %v3119, 0.0
      %v3665 = vmax.f32 %v932, 0.0
      %v3666 = vmax.f32 %v934, 0.0
      %v3667 = vmax.f32 %v1245, 0.0
      %v3668 = vmax.f32 %v1247, 0.0
      %v3669 = vmax.f32 %v1558, 0.0
      %v3670 = vmax.f32 %v1560, 0.0
      %v3671 = vmax.f32 %v1871, 0.0
      %v3672 = vmax.f32 %v1873, 0.0
      %v3673 = vmax.f32 %v2184, 0.0
      %v3674 = vmax.f32 %v2186, 0.0
      %v3675 = vmax.f32 %v2497, 0.0
      %v3676 = vmax.f32 %v2499, 0.0
      %v3677 = vmax.f32 %v2810, 0.0
      %v3678 = vmax.f32 %v2812, 0.0
      %v3679 = vmax.f32 %v3123, 0.0
      %v3680 = vmax.f32 %v3125, 0.0
      %v3681 = vmax.f32 %v936, 0.0
      %v3682 = vmax.f32 %v938, 0.0
      %v3683 = vmax.f32 %v1249, 0.0
      %v3684 = vmax.f32 %v1251, 0.0
      %v3685 = vmax.f32 %v1562, 0.0
      %v3686 = vmax.f32 %v1564, 0.0
      %v3687 = vmax.f32 %v1875, 0.0
      %v3688 = vmax.f32 %v1877, 0.0
      %v3689 = vmax.f32 %v2188, 0.0
      %v3690 = vmax.f32 %v2190, 0.0
      %v3691 = vmax.f32 %v2501, 0.0
      %v3692 = vmax.f32 %v2503, 0.0
      %v3693 = vmax.f32 %v2814, 0.0
      %v3694 = vmax.f32 %v2816, 0.0
      %v3695 = vmax.f32 %v3127, 0.0
      %v3696 = vmax.f32 %v3129, 0.0
      %v3697 = vmax.f32 %v942, 0.0
      %v3698 = vmax.f32 %v944, 0.0
      %v3699 = vmax.f32 %v1255, 0.0
      %v3700 = vmax.f32 %v1257, 0.0
      %v3701 = vmax.f32 %v1568, 0.0
      %v3702 = vmax.f32 %v1570, 0.0
      %v3703 = vmax.f32 %v1881, 0.0
      %v3704 = vmax.f32 %v1883, 0.0
      %v3705 = vmax.f32 %v2194, 0.0
      %v3706 = vmax.f32 %v2196, 0.0
      %v3707 = vmax.f32 %v2507, 0.0
      %v3708 = vmax.f32 %v2509, 0.0
      %v3709 = vmax.f32 %v2820, 0.0
      %v3710 = vmax.f32 %v2822, 0.0
      %v3711 = vmax.f32 %v3133, 0.0
      %v3712 = vmax.f32 %v3135, 0.0
      %v3713 = vmax.f32 %v946, 0.0
      %v3714 = vmax.f32 %v948, 0.0
      %v3715 = vmax.f32 %v1259, 0.0
      %v3716 = vmax.f32 %v1261, 0.0
      %v3717 = vmax.f32 %v1572, 0.0
      %v3718 = vmax.f32 %v1574, 0.0
      %v3719 = vmax.f32 %v1885, 0.0
      %v3720 = vmax.f32 %v1887, 0.0
      %v3721 = vmax.f32 %v2198, 0.0
      %v3722 = vmax.f32 %v2200, 0.0
      %v3723 = vmax.f32 %v2511, 0.0
      %v3724 = vmax.f32 %v2513, 0.0
      %v3725 = vmax.f32 %v2824, 0.0
      %v3726 = vmax.f32 %v2826, 0.0
      %v3727 = vmax.f32 %v3137, 0.0
      %v3728 = vmax.f32 %v3139, 0.0
      %v3729 = vmax.f32 %v952, 0.0
      %v3730 = vmax.f32 %v954, 0.0
      %v3731 = vmax.f32 %v1265, 0.0
      %v3732 = vmax.f32 %v1267, 0.0
      %v3733 = vmax.f32 %v1578, 0.0
      %v3734 = vmax.f32 %v1580, 0.0
      %v3735 = vmax.f32 %v1891, 0.0
      %v3736 = vmax.f32 %v1893, 0.0
      %v3737 = vmax.f32 %v2204, 0.0
      %v3738 = vmax.f32 %v2206, 0.0
      %v3739 = vmax.f32 %v2517, 0.0
      %v3740 = vmax.f32 %v2519, 0.0
      %v3741 = vmax.f32 %v2830, 0.0
      %v3742 = vmax.f32 %v2832, 0.0
      %v3743 = vmax.f32 %v3143, 0.0
      %v3744 = vmax.f32 %v3145, 0.0
      %v3745 = vmax.f32 %v956, 0.0
      %v3746 = vmax.f32 %v958, 0.0
      %v3747 = vmax.f32 %v1269, 0.0
      %v3748 = vmax.f32 %v1271, 0.0
      %v3749 = vmax.f32 %v1582, 0.0
      %v3750 = vmax.f32 %v1584, 0.0
      %v3751 = vmax.f32 %v1895, 0.0
      %v3752 = vmax.f32 %v1897, 0.0
      %v3753 = vmax.f32 %v2208, 0.0
      %v3754 = vmax.f32 %v2210, 0.0
      %v3755 = vmax.f32 %v2521, 0.0
      %v3756 = vmax.f32 %v2523, 0.0
      %v3757 = vmax.f32 %v2834, 0.0
      %v3758 = vmax.f32 %v2836, 0.0
      %v3759 = vmax.f32 %v3147, 0.0
      %v3760 = vmax.f32 %v3149, 0.0
      %v3761 = vmax.f32 %v962, 0.0
      %v3762 = vmax.f32 %v964, 0.0
      %v3763 = vmax.f32 %v1275, 0.0
      %v3764 = vmax.f32 %v1277, 0.0
      %v3765 = vmax.f32 %v1588, 0.0
      %v3766 = vmax.f32 %v1590, 0.0
      %v3767 = vmax.f32 %v1901, 0.0
      %v3768 = vmax.f32 %v1903, 0.0
      %v3769 = vmax.f32 %v2214, 0.0
      %v3770 = vmax.f32 %v2216, 0.0
      %v3771 = vmax.f32 %v2527, 0.0
      %v3772 = vmax.f32 %v2529, 0.0
      %v3773 = vmax.f32 %v2840, 0.0
      %v3774 = vmax.f32 %v2842, 0.0
      %v3775 = vmax.f32 %v3153, 0.0
      %v3776 = vmax.f32 %v3155, 0.0
      %v3777 = vmax.f32 %v966, 0.0
      %v3778 = vmax.f32 %v968, 0.0
      %v3779 = vmax.f32 %v1279, 0.0
      %v3780 = vmax.f32 %v1281, 0.0
      %v3781 = vmax.f32 %v1592, 0.0
      %v3782 = vmax.f32 %v1594, 0.0
      %v3783 = vmax.f32 %v1905, 0.0
      %v3784 = vmax.f32 %v1907, 0.0
      %v3785 = vmax.f32 %v2218, 0.0
      %v3786 = vmax.f32 %v2220, 0.0
      %v3787 = vmax.f32 %v2531, 0.0
      %v3788 = vmax.f32 %v2533, 0.0
      %v3789 = vmax.f32 %v2844, 0.0
      %v3790 = vmax.f32 %v2846, 0.0
      %v3791 = vmax.f32 %v3157, 0.0
      %v3792 = vmax.f32 %v3159, 0.0
      %v3793 = vmax.f32 %v972, 0.0
      %v3794 = vmax.f32 %v974, 0.0
      %v3795 = vmax.f32 %v1285, 0.0
      %v3796 = vmax.f32 %v1287, 0.0
      %v3797 = vmax.f32 %v1598, 0.0
      %v3798 = vmax.f32 %v1600, 0.0
      %v3799 = vmax.f32 %v1911, 0.0
      %v3800 = vmax.f32 %v1913, 0.0
      %v3801 = vmax.f32 %v2224, 0.0
      %v3802 = vmax.f32 %v2226, 0.0
      %v3803 = vmax.f32 %v2537, 0.0
      %v3804 = vmax.f32 %v2539, 0.0
      %v3805 = vmax.f32 %v2850, 0.0
      %v3806 = vmax.f32 %v2852, 0.0
      %v3807 = vmax.f32 %v3163, 0.0
      %v3808 = vmax.f32 %v3165, 0.0
      %v3809 = vmax.f32 %v976, 0.0
      %v3810 = vmax.f32 %v978, 0.0
      %v3811 = vmax.f32 %v1289, 0.0
      %v3812 = vmax.f32 %v1291, 0.0
      %v3813 = vmax.f32 %v1602, 0.0
      %v3814 = vmax.f32 %v1604, 0.0
      %v3815 = vmax.f32 %v1915, 0.0
      %v3816 = vmax.f32 %v1917, 0.0
      %v3817 = vmax.f32 %v2228, 0.0
      %v3818 = vmax.f32 %v2230, 0.0
      %v3819 = vmax.f32 %v2541, 0.0
      %v3820 = vmax.f32 %v2543, 0.0
      %v3821 = vmax.f32 %v2854, 0.0
      %v3822 = vmax.f32 %v2856, 0.0
      %v3823 = vmax.f32 %v3167, 0.0
      %v3824 = vmax.f32 %v3169, 0.0
      %v3825 = vmax.f32 %v982, 0.0
      %v3826 = vmax.f32 %v984, 0.0
      %v3827 = vmax.f32 %v1295, 0.0
      %v3828 = vmax.f32 %v1297, 0.0
      %v3829 = vmax.f32 %v1608, 0.0
      %v3830 = vmax.f32 %v1610, 0.0
      %v3831 = vmax.f32 %v1921, 0.0
      %v3832 = vmax.f32 %v1923, 0.0
      %v3833 = vmax.f32 %v2234, 0.0
      %v3834 = vmax.f32 %v2236, 0.0
      %v3835 = vmax.f32 %v2547, 0.0
      %v3836 = vmax.f32 %v2549, 0.0
      %v3837 = vmax.f32 %v2860, 0.0
      %v3838 = vmax.f32 %v2862, 0.0
      %v3839 = vmax.f32 %v3173, 0.0
      %v3840 = vmax.f32 %v3175, 0.0
      %v3841 = vmax.f32 %v986, 0.0
      %v3842 = vmax.f32 %v988, 0.0
      %v3843 = vmax.f32 %v1299, 0.0
      %v3844 = vmax.f32 %v1301, 0.0
      %v3845 = vmax.f32 %v1612, 0.0
      %v3846 = vmax.f32 %v1614, 0.0
      %v3847 = vmax.f32 %v1925, 0.0
      %v3848 = vmax.f32 %v1927, 0.0
      %v3849 = vmax.f32 %v2238, 0.0
      %v3850 = vmax.f32 %v2240, 0.0
      %v3851 = vmax.f32 %v2551, 0.0
      %v3852 = vmax.f32 %v2553, 0.0
      %v3853 = vmax.f32 %v2864, 0.0
      %v3854 = vmax.f32 %v2866, 0.0
      %v3855 = vmax.f32 %v3177, 0.0
      %v3856 = vmax.f32 %v3179, 0.0
      %v3857 = vmax.f32 %v992, 0.0
      %v3858 = vmax.f32 %v994, 0.0
      %v3859 = vmax.f32 %v1305, 0.0
      %v3860 = vmax.f32 %v1307, 0.0
      %v3861 = vmax.f32 %v1618, 0.0
      %v3862 = vmax.f32 %v1620, 0.0
      %v3863 = vmax.f32 %v1931, 0.0
      %v3864 = vmax.f32 %v1933, 0.0
      %v3865 = vmax.f32 %v2244, 0.0
      %v3866 = vmax.f32 %v2246, 0.0
      %v3867 = vmax.f32 %v2557, 0.0
      %v3868 = vmax.f32 %v2559, 0.0
      %v3869 = vmax.f32 %v2870, 0.0
      %v3870 = vmax.f32 %v2872, 0.0
      %v3871 = vmax.f32 %v3183, 0.0
      %v3872 = vmax.f32 %v3185, 0.0
      %v3873 = vmax.f32 %v996, 0.0
      %v3874 = vmax.f32 %v998, 0.0
      %v3875 = vmax.f32 %v1309, 0.0
      %v3876 = vmax.f32 %v1311, 0.0
      %v3877 = vmax.f32 %v1622, 0.0
      %v3878 = vmax.f32 %v1624, 0.0
      %v3879 = vmax.f32 %v1935, 0.0
      %v3880 = vmax.f32 %v1937, 0.0
      %v3881 = vmax.f32 %v2248, 0.0
      %v3882 = vmax.f32 %v2250, 0.0
      %v3883 = vmax.f32 %v2561, 0.0
      %v3884 = vmax.f32 %v2563, 0.0
      %v3885 = vmax.f32 %v2874, 0.0
      %v3886 = vmax.f32 %v2876, 0.0
      %v3887 = vmax.f32 %v3187, 0.0
      %v3888 = vmax.f32 %v3189, 0.0
      %v3889 = vmax.f32 %v1002, 0.0
      %v3890 = vmax.f32 %v1004, 0.0
      %v3891 = vmax.f32 %v1315, 0.0
      %v3892 = vmax.f32 %v1317, 0.0
      %v3893 = vmax.f32 %v1628, 0.0
      %v3894 = vmax.f32 %v1630, 0.0
      %v3895 = vmax.f32 %v1941, 0.0
      %v3896 = vmax.f32 %v1943, 0.0
      %v3897 = vmax.f32 %v2254, 0.0
      %v3898 = vmax.f32 %v2256, 0.0
      %v3899 = vmax.f32 %v2567, 0.0
      %v3900 = vmax.f32 %v2569, 0.0
      %v3901 = vmax.f32 %v2880, 0.0
      %v3902 = vmax.f32 %v2882, 0.0
      %v3903 = vmax.f32 %v3193, 0.0
      %v3904 = vmax.f32 %v3195, 0.0
      %v3905 = vmax.f32 %v1006, 0.0
      %v3906 = vmax.f32 %v1008, 0.0
      %v3907 = vmax.f32 %v1319, 0.0
      %v3908 = vmax.f32 %v1321, 0.0
      %v3909 = vmax.f32 %v1632, 0.0
      %v3910 = vmax.f32 %v1634, 0.0
      %v3911 = vmax.f32 %v1945, 0.0
      %v3912 = vmax.f32 %v1947, 0.0
      %v3913 = vmax.f32 %v2258, 0.0
      %v3914 = vmax.f32 %v2260, 0.0
      %v3915 = vmax.f32 %v2571, 0.0
      %v3916 = vmax.f32 %v2573, 0.0
      %v3917 = vmax.f32 %v2884, 0.0
      %v3918 = vmax.f32 %v2886, 0.0
      %v3919 = vmax.f32 %v3197, 0.0
      %v3920 = vmax.f32 %v3199, 0.0
      %v3921 = vmax.f32 %v1012, 0.0
      %v3922 = vmax.f32 %v1014, 0.0
      %v3923 = vmax.f32 %v1325, 0.0
      %v3924 = vmax.f32 %v1327, 0.0
      %v3925 = vmax.f32 %v1638, 0.0
      %v3926 = vmax.f32 %v1640, 0.0
      %v3927 = vmax.f32 %v1951, 0.0
      %v3928 = vmax.f32 %v1953, 0.0
      %v3929 = vmax.f32 %v2264, 0.0
      %v3930 = vmax.f32 %v2266, 0.0
      %v3931 = vmax.f32 %v2577, 0.0
      %v3932 = vmax.f32 %v2579, 0.0
      %v3933 = vmax.f32 %v2890, 0.0
      %v3934 = vmax.f32 %v2892, 0.0
      %v3935 = vmax.f32 %v3203, 0.0
      %v3936 = vmax.f32 %v3205, 0.0
      %v3937 = vmax.f32 %v1016, 0.0
      %v3938 = vmax.f32 %v1018, 0.0
      %v3939 = vmax.f32 %v1329, 0.0
      %v3940 = vmax.f32 %v1331, 0.0
      %v3941 = vmax.f32 %v1642, 0.0
      %v3942 = vmax.f32 %v1644, 0.0
      %v3943 = vmax.f32 %v1955, 0.0
      %v3944 = vmax.f32 %v1957, 0.0
      %v3945 = vmax.f32 %v2268, 0.0
      %v3946 = vmax.f32 %v2270, 0.0
      %v3947 = vmax.f32 %v2581, 0.0
      %v3948 = vmax.f32 %v2583, 0.0
      %v3949 = vmax.f32 %v2894, 0.0
      %v3950 = vmax.f32 %v2896, 0.0
      %v3951 = vmax.f32 %v3207, 0.0
      %v3952 = vmax.f32 %v3209, 0.0
      %v3953 = vmax.f32 %v1022, 0.0
      %v3954 = vmax.f32 %v1024, 0.0
      %v3955 = vmax.f32 %v1335, 0.0
      %v3956 = vmax.f32 %v1337, 0.0
      %v3957 = vmax.f32 %v1648, 0.0
      %v3958 = vmax.f32 %v1650, 0.0
      %v3959 = vmax.f32 %v1961, 0.0
      %v3960 = vmax.f32 %v1963, 0.0
      %v3961 = vmax.f32 %v2274, 0.0
      %v3962 = vmax.f32 %v2276, 0.0
      %v3963 = vmax.f32 %v2587, 0.0
      %v3964 = vmax.f32 %v2589, 0.0
      %v3965 = vmax.f32 %v2900, 0.0
      %v3966 = vmax.f32 %v2902, 0.0
      %v3967 = vmax.f32 %v3213, 0.0
      %v3968 = vmax.f32 %v3215, 0.0
      %v3969 = vmax.f32 %v1026, 0.0
      %v3970 = vmax.f32 %v1028, 0.0
      %v3971 = vmax.f32 %v1339, 0.0
      %v3972 = vmax.f32 %v1341, 0.0
      %v3973 = vmax.f32 %v1652, 0.0
      %v3974 = vmax.f32 %v1654, 0.0
      %v3975 = vmax.f32 %v1965, 0.0
      %v3976 = vmax.f32 %v1967, 0.0
      %v3977 = vmax.f32 %v2278, 0.0
      %v3978 = vmax.f32 %v2280, 0.0
      %v3979 = vmax.f32 %v2591, 0.0
      %v3980 = vmax.f32 %v2593, 0.0
      %v3981 = vmax.f32 %v2904, 0.0
      %v3982 = vmax.f32 %v2906, 0.0
      %v3983 = vmax.f32 %v3217, 0.0
      %v3984 = vmax.f32 %v3219, 0.0
      %v3985 = vmax.f32 %v1032, 0.0
      %v3986 = vmax.f32 %v1034, 0.0
      %v3987 = vmax.f32 %v1345, 0.0
      %v3988 = vmax.f32 %v1347, 0.0
      %v3989 = vmax.f32 %v1658, 0.0
      %v3990 = vmax.f32 %v1660, 0.0
      %v3991 = vmax.f32 %v1971, 0.0
      %v3992 = vmax.f32 %v1973, 0.0
      %v3993 = vmax.f32 %v2284, 0.0
      %v3994 = vmax.f32 %v2286, 0.0
      %v3995 = vmax.f32 %v2597, 0.0
      %v3996 = vmax.f32 %v2599, 0.0
      %v3997 = vmax.f32 %v2910, 0.0
      %v3998 = vmax.f32 %v2912, 0.0
      %v3999 = vmax.f32 %v3223, 0.0
      %v4000 = vmax.f32 %v3225, 0.0
      %v4001 = vmax.f32 %v1036, 0.0
      %v4002 = vmax.f32 %v1038, 0.0
      %v4003 = vmax.f32 %v1349, 0.0
      %v4004 = vmax.f32 %v1351, 0.0
      %v4005 = vmax.f32 %v1662, 0.0
      %v4006 = vmax.f32 %v1664, 0.0
      %v4007 = vmax.f32 %v1975, 0.0
      %v4008 = vmax.f32 %v1977, 0.0
      %v4009 = vmax.f32 %v2288, 0.0
      %v4010 = vmax.f32 %v2290, 0.0
      %v4011 = vmax.f32 %v2601, 0.0
      %v4012 = vmax.f32 %v2603, 0.0
      %v4013 = vmax.f32 %v2914, 0.0
      %v4014 = vmax.f32 %v2916, 0.0
      %v4015 = vmax.f32 %v3227, 0.0
      %v4016 = vmax.f32 %v3229, 0.0
      %v4017 = vmax.f32 %v1042, 0.0
      %v4018 = vmax.f32 %v1044, 0.0
      %v4019 = vmax.f32 %v1355, 0.0
      %v4020 = vmax.f32 %v1357, 0.0
      %v4021 = vmax.f32 %v1668, 0.0
      %v4022 = vmax.f32 %v1670, 0.0
      %v4023 = vmax.f32 %v1981, 0.0
      %v4024 = vmax.f32 %v1983, 0.0
      %v4025 = vmax.f32 %v2294, 0.0
      %v4026 = vmax.f32 %v2296, 0.0
      %v4027 = vmax.f32 %v2607, 0.0
      %v4028 = vmax.f32 %v2609, 0.0
      %v4029 = vmax.f32 %v2920, 0.0
      %v4030 = vmax.f32 %v2922, 0.0
      %v4031 = vmax.f32 %v3233, 0.0
      %v4032 = vmax.f32 %v3235, 0.0
      %v4033 = vmax.f32 %v1046, 0.0
      %v4034 = vmax.f32 %v1048, 0.0
      %v4035 = vmax.f32 %v1359, 0.0
      %v4036 = vmax.f32 %v1361, 0.0
      %v4037 = vmax.f32 %v1672, 0.0
      %v4038 = vmax.f32 %v1674, 0.0
      %v4039 = vmax.f32 %v1985, 0.0
      %v4040 = vmax.f32 %v1987, 0.0
      %v4041 = vmax.f32 %v2298, 0.0
      %v4042 = vmax.f32 %v2300, 0.0
      %v4043 = vmax.f32 %v2611, 0.0
      %v4044 = vmax.f32 %v2613, 0.0
      %v4045 = vmax.f32 %v2924, 0.0
      %v4046 = vmax.f32 %v2926, 0.0
      %v4047 = vmax.f32 %v3237, 0.0
      %v4048 = vmax.f32 %v3239, 0.0
      %v4049 = vmax.f32 %v1052, 0.0
      %v4050 = vmax.f32 %v1054, 0.0
      %v4051 = vmax.f32 %v1365, 0.0
      %v4052 = vmax.f32 %v1367, 0.0
      %v4053 = vmax.f32 %v1678, 0.0
      %v4054 = vmax.f32 %v1680, 0.0
      %v4055 = vmax.f32 %v1991, 0.0
      %v4056 = vmax.f32 %v1993, 0.0
      %v4057 = vmax.f32 %v2304, 0.0
      %v4058 = vmax.f32 %v2306, 0.0
      %v4059 = vmax.f32 %v2617, 0.0
      %v4060 = vmax.f32 %v2619, 0.0
      %v4061 = vmax.f32 %v2930, 0.0
      %v4062 = vmax.f32 %v2932, 0.0
      %v4063 = vmax.f32 %v3243, 0.0
      %v4064 = vmax.f32 %v3245, 0.0
      %v4065 = vmax.f32 %v1056, 0.0
      %v4066 = vmax.f32 %v1058, 0.0
      %v4067 = vmax.f32 %v1369, 0.0
      %v4068 = vmax.f32 %v1371, 0.0
      %v4069 = vmax.f32 %v1682, 0.0
      %v4070 = vmax.f32 %v1684, 0.0
      %v4071 = vmax.f32 %v1995, 0.0
      %v4072 = vmax.f32 %v1997, 0.0
      %v4073 = vmax.f32 %v2308, 0.0
      %v4074 = vmax.f32 %v2310, 0.0
      %v4075 = vmax.f32 %v2621, 0.0
      %v4076 = vmax.f32 %v2623, 0.0
      %v4077 = vmax.f32 %v2934, 0.0
      %v4078 = vmax.f32 %v2936, 0.0
      %v4079 = vmax.f32 %v3247, 0.0
      %v4080 = vmax.f32 %v3249, 0.0
      %v4081 = vmax.f32 %v1062, 0.0
      %v4082 = vmax.f32 %v1064, 0.0
      %v4083 = vmax.f32 %v1375, 0.0
      %v4084 = vmax.f32 %v1377, 0.0
      %v4085 = vmax.f32 %v1688, 0.0
      %v4086 = vmax.f32 %v1690, 0.0
      %v4087 = vmax.f32 %v2001, 0.0
      %v4088 = vmax.f32 %v2003, 0.0
      %v4089 = vmax.f32 %v2314, 0.0
      %v4090 = vmax.f32 %v2316, 0.0
      %v4091 = vmax.f32 %v2627, 0.0
      %v4092 = vmax.f32 %v2629, 0.0
      %v4093 = vmax.f32 %v2940, 0.0
      %v4094 = vmax.f32 %v2942, 0.0
      %v4095 = vmax.f32 %v3253, 0.0
      %v4096 = vmax.f32 %v3255, 0.0
      %v4097 = vmax.f32 %v1066, 0.0
      %v4098 = vmax.f32 %v1068, 0.0
      %v4099 = vmax.f32 %v1379, 0.0
      %v4100 = vmax.f32 %v1381, 0.0
      %v4101 = vmax.f32 %v1692, 0.0
      %v4102 = vmax.f32 %v1694, 0.0
      %v4103 = vmax.f32 %v2005, 0.0
      %v4104 = vmax.f32 %v2007, 0.0
      %v4105 = vmax.f32 %v2318, 0.0
      %v4106 = vmax.f32 %v2320, 0.0
      %v4107 = vmax.f32 %v2631, 0.0
      %v4108 = vmax.f32 %v2633, 0.0
      %v4109 = vmax.f32 %v2944, 0.0
      %v4110 = vmax.f32 %v2946, 0.0
      %v4111 = vmax.f32 %v3257, 0.0
      %v4112 = vmax.f32 %v3259, 0.0
      %v4113 = vmax.f32 %v1072, 0.0
      %v4114 = vmax.f32 %v1074, 0.0
      %v4115 = vmax.f32 %v1385, 0.0
      %v4116 = vmax.f32 %v1387, 0.0
      %v4117 = vmax.f32 %v1698, 0.0
      %v4118 = vmax.f32 %v1700, 0.0
      %v4119 = vmax.f32 %v2011, 0.0
      %v4120 = vmax.f32 %v2013, 0.0
      %v4121 = vmax.f32 %v2324, 0.0
      %v4122 = vmax.f32 %v2326, 0.0
      %v4123 = vmax.f32 %v2637, 0.0
      %v4124 = vmax.f32 %v2639, 0.0
      %v4125 = vmax.f32 %v2950, 0.0
      %v4126 = vmax.f32 %v2952, 0.0
      %v4127 = vmax.f32 %v3263, 0.0
      %v4128 = vmax.f32 %v3265, 0.0
      %v4129 = vmax.f32 %v1076, 0.0
      %v4130 = vmax.f32 %v1078, 0.0
      %v4131 = vmax.f32 %v1389, 0.0
      %v4132 = vmax.f32 %v1391, 0.0
      %v4133 = vmax.f32 %v1702, 0.0
      %v4134 = vmax.f32 %v1704, 0.0
      %v4135 = vmax.f32 %v2015, 0.0
      %v4136 = vmax.f32 %v2017, 0.0
      %v4137 = vmax.f32 %v2328, 0.0
      %v4138 = vmax.f32 %v2330, 0.0
      %v4139 = vmax.f32 %v2641, 0.0
      %v4140 = vmax.f32 %v2643, 0.0
      %v4141 = vmax.f32 %v2954, 0.0
      %v4142 = vmax.f32 %v2956, 0.0
      %v4143 = vmax.f32 %v3267, 0.0
      %v4144 = vmax.f32 %v3269, 0.0
      %v4145 = vmax.f32 %v1082, 0.0
      %v4146 = vmax.f32 %v1084, 0.0
      %v4147 = vmax.f32 %v1395, 0.0
      %v4148 = vmax.f32 %v1397, 0.0
      %v4149 = vmax.f32 %v1708, 0.0
      %v4150 = vmax.f32 %v1710, 0.0
      %v4151 = vmax.f32 %v2021, 0.0
      %v4152 = vmax.f32 %v2023, 0.0
      %v4153 = vmax.f32 %v2334, 0.0
      %v4154 = vmax.f32 %v2336, 0.0
      %v4155 = vmax.f32 %v2647, 0.0
      %v4156 = vmax.f32 %v2649, 0.0
      %v4157 = vmax.f32 %v2960, 0.0
      %v4158 = vmax.f32 %v2962, 0.0
      %v4159 = vmax.f32 %v3273, 0.0
      %v4160 = vmax.f32 %v3275, 0.0
      %v4161 = vmax.f32 %v1086, 0.0
      %v4162 = vmax.f32 %v1088, 0.0
      %v4163 = vmax.f32 %v1399, 0.0
      %v4164 = vmax.f32 %v1401, 0.0
      %v4165 = vmax.f32 %v1712, 0.0
      %v4166 = vmax.f32 %v1714, 0.0
      %v4167 = vmax.f32 %v2025, 0.0
      %v4168 = vmax.f32 %v2027, 0.0
      %v4169 = vmax.f32 %v2338, 0.0
      %v4170 = vmax.f32 %v2340, 0.0
      %v4171 = vmax.f32 %v2651, 0.0
      %v4172 = vmax.f32 %v2653, 0.0
      %v4173 = vmax.f32 %v2964, 0.0
      %v4174 = vmax.f32 %v2966, 0.0
      %v4175 = vmax.f32 %v3277, 0.0
      %v4176 = vmax.f32 %v3279, 0.0
      %v4177 = vld [vmem:[#allocation2] sm:$0x7f]
      %v4178 = vld [vmem:[#allocation2 + $0x8] sm:$0x7f]
      %v4179 = vld [vmem:[#allocation2 + $0x10] sm:$0x7f]
      %v4180 = vld [vmem:[#allocation2 + $0x18] sm:$0x7f]
      %v4181 = vld [vmem:[#allocation2 + $0x20] sm:$0x7f]
      %v4182 = vld [vmem:[#allocation2 + $0x28] sm:$0x7f]
      %v4183 = vld [vmem:[#allocation2 + $0x30] sm:$0x7f]
      %v4184 = vld [vmem:[#allocation2 + $0x38] sm:$0x7f]
      %v4185 = vld [vmem:[#allocation2 + $0x40] sm:$0x7f]
      %v4186 = vld [vmem:[#allocation2 + $0x48] sm:$0x7f]
      %v4187 = vld [vmem:[#allocation2 + $0x50] sm:$0x7f]
      %v4188 = vld [vmem:[#allocation2 + $0x58] sm:$0x7f]
      %v4189 = vld [vmem:[#allocation2 + $0x60] sm:$0x7f]
      %v4190 = vld [vmem:[#allocation2 + $0x68] sm:$0x7f]
      %v4191 = vld [vmem:[#allocation2 + $0x70] sm:$0x7f]
      %v4192 = vld [vmem:[#allocation2 + $0x78] sm:$0x7f]
      %v4193 = vadd.f32 %v3281, %v3297
      %v4194 = vadd.f32 %v4193, %v3313
      %v4195 = vadd.f32 %v4194, %v3329
      %v4196 = vadd.f32 %v4195, %v3345
      %v4197 = vadd.f32 %v4196, %v3361
      %v4198 = vadd.f32 %v4197, %v3377
      %v4199 = vadd.f32 %v4198, %v3393
      %v4200 = vrot.slane %v4199, 4
      %v4201 = vadd.f32 %v4199, %v4200
      %v4202 = vrot.slane %v4201, 2
      %v4203 = vadd.f32 %v4201, %v4202
      %v4204 = vrot.slane %v4203, 1
      %v4205 = vadd.f32 %v4203, %v4204
      %v4206 = vadd.f32 %v3282, %v3298
      %v4207 = vadd.f32 %v4206, %v3314
      %v4208 = vadd.f32 %v4207, %v3330
      %v4209 = vadd.f32 %v4208, %v3346
      %v4210 = vadd.f32 %v4209, %v3362
      %v4211 = vadd.f32 %v4210, %v3378
      %v4212 = vadd.f32 %v4211, %v3394
      %v4213 = vrot.slane %v4212, 4
      %v4214 = vadd.f32 %v4212, %v4213
      %v4215 = vrot.slane %v4214, 2
      %v4216 = vadd.f32 %v4214, %v4215
      %v4217 = vrot.slane %v4216, 1
      %v4218 = vadd.f32 %v4216, %v4217
      %v4219 = vadd.f32 %v3283, %v3299
      %v4220 = vadd.f32 %v4219, %v3315
      %v4221 = vadd.f32 %v4220, %v3331
      %v4222 = vadd.f32 %v4221, %v3347
      %v4223 = vadd.f32 %v4222, %v3363
      %v4224 = vadd.f32 %v4223, %v3379
      %v4225 = vadd.f32 %v4224, %v3395
      %v4226 = vrot.slane %v4225, 4
      %v4227 = vadd.f32 %v4225, %v4226
      %v4228 = vrot.slane %v4227, 2
      %v4229 = vadd.f32 %v4227, %v4228
      %v4230 = vrot.slane %v4229, 1
      %v4231 = vadd.f32 %v4229, %v4230
      %v4232 = vadd.f32 %v3284, %v3300
      %v4233 = vadd.f32 %v4232, %v3316
      %v4234 = vadd.f32 %v4233, %v3332
      %v4235 = vadd.f32 %v4234, %v3348
      %v4236 = vadd.f32 %v4235, %v3364
      %v4237 = vadd.f32 %v4236, %v3380
      %v4238 = vadd.f32 %v4237, %v3396
      %v4239 = vrot.slane %v4238, 4
      %v4240 = vadd.f32 %v4238, %v4239
      %v4241 = vrot.slane %v4240, 2
      %v4242 = vadd.f32 %v4240, %v4241
      %v4243 = vrot.slane %v4242, 1
      %v4244 = vadd.f32 %v4242, %v4243
      %v4245 = vadd.f32 %v3285, %v3301
      %v4246 = vadd.f32 %v4245, %v3317
      %v4247 = vadd.f32 %v4246, %v3333
      %v4248 = vadd.f32 %v4247, %v3349
      %v4249 = vadd.f32 %v4248, %v3365
      %v4250 = vadd.f32 %v4249, %v3381
      %v4251 = vadd.f32 %v4250, %v3397
      %v4252 = vrot.slane %v4251, 4
      %v4253 = vadd.f32 %v4251, %v4252
      %v4254 = vrot.slane %v4253, 2
      %v4255 = vadd.f32 %v4253, %v4254
      %v4256 = vrot.slane %v4255, 1
      %v4257 = vadd.f32 %v4255, %v4256
      %v4258 = vadd.f32 %v3286, %v3302
      %v4259 = vadd.f32 %v4258, %v3318
      %v4260 = vadd.f32 %v4259, %v3334
      %v4261 = vadd.f32 %v4260, %v3350
      %v4262 = vadd.f32 %v4261, %v3366
      %v4263 = vadd.f32 %v4262, %v3382
      %v4264 = vadd.f32 %v4263, %v3398
      %v4265 = vrot.slane %v4264, 4
      %v4266 = vadd.f32 %v4264, %v4265
      %v4267 = vrot.slane %v4266, 2
      %v4268 = vadd.f32 %v4266, %v4267
      %v4269 = vrot.slane %v4268, 1
      %v4270 = vadd.f32 %v4268, %v4269
      %v4271 = vadd.f32 %v3287, %v3303
      %v4272 = vadd.f32 %v4271, %v3319
      %v4273 = vadd.f32 %v4272, %v3335
      %v4274 = vadd.f32 %v4273, %v3351
      %v4275 = vadd.f32 %v4274, %v3367
      %v4276 = vadd.f32 %v4275, %v3383
      %v4277 = vadd.f32 %v4276, %v3399
      %v4278 = vrot.slane %v4277, 4
      %v4279 = vadd.f32 %v4277, %v4278
      %v4280 = vrot.slane %v4279, 2
      %v4281 = vadd.f32 %v4279, %v4280
      %v4282 = vrot.slane %v4281, 1
      %v4283 = vadd.f32 %v4281, %v4282
      %v4284 = vadd.f32 %v3288, %v3304
      %v4285 = vadd.f32 %v4284, %v3320
      %v4286 = vadd.f32 %v4285, %v3336
      %v4287 = vadd.f32 %v4286, %v3352
      %v4288 = vadd.f32 %v4287, %v3368
      %v4289 = vadd.f32 %v4288, %v3384
      %v4290 = vadd.f32 %v4289, %v3400
      %v4291 = vrot.slane %v4290, 4
      %v4292 = vadd.f32 %v4290, %v4291
      %v4293 = vrot.slane %v4292, 2
      %v4294 = vadd.f32 %v4292, %v4293
      %v4295 = vrot.slane %v4294, 1
      %v4296 = vadd.f32 %v4294, %v4295
      %v4297 = vadd.f32 %v3289, %v3305
      %v4298 = vadd.f32 %v4297, %v3321
      %v4299 = vadd.f32 %v4298, %v3337
      %v4300 = vadd.f32 %v4299, %v3353
      %v4301 = vadd.f32 %v4300, %v3369
      %v4302 = vadd.f32 %v4301, %v3385
      %v4303 = vadd.f32 %v4302, %v3401
      %v4304 = vrot.slane %v4303, 4
      %v4305 = vadd.f32 %v4303, %v4304
      %v4306 = vrot.slane %v4305, 2
      %v4307 = vadd.f32 %v4305, %v4306
      %v4308 = vrot.slane %v4307, 1
      %v4309 = vadd.f32 %v4307, %v4308
      %v4310 = vadd.f32 %v3290, %v3306
      %v4311 = vadd.f32 %v4310, %v3322
      %v4312 = vadd.f32 %v4311, %v3338
      %v4313 = vadd.f32 %v4312, %v3354
      %v4314 = vadd.f32 %v4313, %v3370
      %v4315 = vadd.f32 %v4314, %v3386
      %v4316 = vadd.f32 %v4315, %v3402
      %v4317 = vrot.slane %v4316, 4
      %v4318 = vadd.f32 %v4316, %v4317
      %v4319 = vrot.slane %v4318, 2
      %v4320 = vadd.f32 %v4318, %v4319
      %v4321 = vrot.slane %v4320, 1
      %v4322 = vadd.f32 %v4320, %v4321
      %v4323 = vadd.f32 %v3291, %v3307
      %v4324 = vadd.f32 %v4323, %v3323
      %v4325 = vadd.f32 %v4324, %v3339
      %v4326 = vadd.f32 %v4325, %v3355
      %v4327 = vadd.f32 %v4326, %v3371
      %v4328 = vadd.f32 %v4327, %v3387
      %v4329 = vadd.f32 %v4328, %v3403
      %v4330 = vrot.slane %v4329, 4
      %v4331 = vadd.f32 %v4329, %v4330
      %v4332 = vrot.slane %v4331, 2
      %v4333 = vadd.f32 %v4331, %v4332
      %v4334 = vrot.slane %v4333, 1
      %v4335 = vadd.f32 %v4333, %v4334
      %v4336 = vadd.f32 %v3292, %v3308
      %v4337 = vadd.f32 %v4336, %v3324
      %v4338 = vadd.f32 %v4337, %v3340
      %v4339 = vadd.f32 %v4338, %v3356
      %v4340 = vadd.f32 %v4339, %v3372
      %v4341 = vadd.f32 %v4340, %v3388
      %v4342 = vadd.f32 %v4341, %v3404
      %v4343 = vrot.slane %v4342, 4
      %v4344 = vadd.f32 %v4342, %v4343
      %v4345 = vrot.slane %v4344, 2
      %v4346 = vadd.f32 %v4344, %v4345
      %v4347 = vrot.slane %v4346, 1
      %v4348 = vadd.f32 %v4346, %v4347
      %v4349 = vadd.f32 %v3293, %v3309
      %v4350 = vadd.f32 %v4349, %v3325
      %v4351 = vadd.f32 %v4350, %v3341
      %v4352 = vadd.f32 %v4351, %v3357
      %v4353 = vadd.f32 %v4352, %v3373
      %v4354 = vadd.f32 %v4353, %v3389
      %v4355 = vadd.f32 %v4354, %v3405
      %v4356 = vrot.slane %v4355, 4
      %v4357 = vadd.f32 %v4355, %v4356
      %v4358 = vrot.slane %v4357, 2
      %v4359 = vadd.f32 %v4357, %v4358
      %v4360 = vrot.slane %v4359, 1
      %v4361 = vadd.f32 %v4359, %v4360
      %v4362 = vadd.f32 %v3294, %v3310
      %v4363 = vadd.f32 %v4362, %v3326
      %v4364 = vadd.f32 %v4363, %v3342
      %v4365 = vadd.f32 %v4364, %v3358
      %v4366 = vadd.f32 %v4365, %v3374
      %v4367 = vadd.f32 %v4366, %v3390
      %v4368 = vadd.f32 %v4367, %v3406
      %v4369 = vrot.slane %v4368, 4
      %v4370 = vadd.f32 %v4368, %v4369
      %v4371 = vrot.slane %v4370, 2
      %v4372 = vadd.f32 %v4370, %v4371
      %v4373 = vrot.slane %v4372, 1
      %v4374 = vadd.f32 %v4372, %v4373
      %v4375 = vadd.f32 %v3295, %v3311
      %v4376 = vadd.f32 %v4375, %v3327
      %v4377 = vadd.f32 %v4376, %v3343
      %v4378 = vadd.f32 %v4377, %v3359
      %v4379 = vadd.f32 %v4378, %v3375
      %v4380 = vadd.f32 %v4379, %v3391
      %v4381 = vadd.f32 %v4380, %v3407
      %v4382 = vrot.slane %v4381, 4
      %v4383 = vadd.f32 %v4381, %v4382
      %v4384 = vrot.slane %v4383, 2
      %v4385 = vadd.f32 %v4383, %v4384
      %v4386 = vrot.slane %v4385, 1
      %v4387 = vadd.f32 %v4385, %v4386
      %v4388 = vadd.f32 %v3296, %v3312
      %v4389 = vadd.f32 %v4388, %v3328
      %v4390 = vadd.f32 %v4389, %v3344
      %v4391 = vadd.f32 %v4390, %v3360
      %v4392 = vadd.f32 %v4391, %v3376
      %v4393 = vadd.f32 %v4392, %v3392
      %v4394 = vadd.f32 %v4393, %v3408
      %v4395 = vrot.slane %v4394, 4
      %v4396 = vadd.f32 %v4394, %v4395
      %v4397 = vrot.slane %v4396, 2
      %v4398 = vadd.f32 %v4396, %v4397
      %v4399 = vrot.slane %v4398, 1
      %v4400 = vadd.f32 %v4398, %v4399
      %v4401 = vadd.f32 %v3409, %v3425
      %v4402 = vadd.f32 %v4401, %v3441
      %v4403 = vadd.f32 %v4402, %v3457
      %v4404 = vadd.f32 %v4403, %v3473
      %v4405 = vadd.f32 %v4404, %v3489
      %v4406 = vadd.f32 %v4405, %v3505
      %v4407 = vadd.f32 %v4406, %v3521
      %v4408 = vrot.slane %v4407, 4
      %v4409 = vadd.f32 %v4407, %v4408
      %v4410 = vrot.slane %v4409, 2
      %v4411 = vadd.f32 %v4409, %v4410
      %v4412 = vrot.slane %v4411, 1
      %v4413 = vadd.f32 %v4411, %v4412
      %v4414 = vadd.f32 %v3410, %v3426
      %v4415 = vadd.f32 %v4414, %v3442
      %v4416 = vadd.f32 %v4415, %v3458
      %v4417 = vadd.f32 %v4416, %v3474
      %v4418 = vadd.f32 %v4417, %v3490
      %v4419 = vadd.f32 %v4418, %v3506
      %v4420 = vadd.f32 %v4419, %v3522
      %v4421 = vrot.slane %v4420, 4
      %v4422 = vadd.f32 %v4420, %v4421
      %v4423 = vrot.slane %v4422, 2
      %v4424 = vadd.f32 %v4422, %v4423
      %v4425 = vrot.slane %v4424, 1
      %v4426 = vadd.f32 %v4424, %v4425
      %v4427 = vadd.f32 %v3411, %v3427
      %v4428 = vadd.f32 %v4427, %v3443
      %v4429 = vadd.f32 %v4428, %v3459
      %v4430 = vadd.f32 %v4429, %v3475
      %v4431 = vadd.f32 %v4430, %v3491
      %v4432 = vadd.f32 %v4431, %v3507
      %v4433 = vadd.f32 %v4432, %v3523
      %v4434 = vrot.slane %v4433, 4
      %v4435 = vadd.f32 %v4433, %v4434
      %v4436 = vrot.slane %v4435, 2
      %v4437 = vadd.f32 %v4435, %v4436
      %v4438 = vrot.slane %v4437, 1
      %v4439 = vadd.f32 %v4437, %v4438
      %v4440 = vadd.f32 %v3412, %v3428
      %v4441 = vadd.f32 %v4440, %v3444
      %v4442 = vadd.f32 %v4441, %v3460
      %v4443 = vadd.f32 %v4442, %v3476
      %v4444 = vadd.f32 %v4443, %v3492
      %v4445 = vadd.f32 %v4444, %v3508
      %v4446 = vadd.f32 %v4445, %v3524
      %v4447 = vrot.slane %v4446, 4
      %v4448 = vadd.f32 %v4446, %v4447
      %v4449 = vrot.slane %v4448, 2
      %v4450 = vadd.f32 %v4448, %v4449
      %v4451 = vrot.slane %v4450, 1
      %v4452 = vadd.f32 %v4450, %v4451
      %v4453 = vadd.f32 %v3413, %v3429
      %v4454 = vadd.f32 %v4453, %v3445
      %v4455 = vadd.f32 %v4454, %v3461
      %v4456 = vadd.f32 %v4455, %v3477
      %v4457 = vadd.f32 %v4456, %v3493
      %v4458 = vadd.f32 %v4457, %v3509
      %v4459 = vadd.f32 %v4458, %v3525
      %v4460 = vrot.slane %v4459, 4
      %v4461 = vadd.f32 %v4459, %v4460
      %v4462 = vrot.slane %v4461, 2
      %v4463 = vadd.f32 %v4461, %v4462
      %v4464 = vrot.slane %v4463, 1
      %v4465 = vadd.f32 %v4463, %v4464
      %v4466 = vadd.f32 %v3414, %v3430
      %v4467 = vadd.f32 %v4466, %v3446
      %v4468 = vadd.f32 %v4467, %v3462
      %v4469 = vadd.f32 %v4468, %v3478
      %v4470 = vadd.f32 %v4469, %v3494
      %v4471 = vadd.f32 %v4470, %v3510
      %v4472 = vadd.f32 %v4471, %v3526
      %v4473 = vrot.slane %v4472, 4
      %v4474 = vadd.f32 %v4472, %v4473
      %v4475 = vrot.slane %v4474, 2
      %v4476 = vadd.f32 %v4474, %v4475
      %v4477 = vrot.slane %v4476, 1
      %v4478 = vadd.f32 %v4476, %v4477
      %v4479 = vadd.f32 %v3415, %v3431
      %v4480 = vadd.f32 %v4479, %v3447
      %v4481 = vadd.f32 %v4480, %v3463
      %v4482 = vadd.f32 %v4481, %v3479
      %v4483 = vadd.f32 %v4482, %v3495
      %v4484 = vadd.f32 %v4483, %v3511
      %v4485 = vadd.f32 %v4484, %v3527
      %v4486 = vrot.slane %v4485, 4
      %v4487 = vadd.f32 %v4485, %v4486
      %v4488 = vrot.slane %v4487, 2
      %v4489 = vadd.f32 %v4487, %v4488
      %v4490 = vrot.slane %v4489, 1
      %v4491 = vadd.f32 %v4489, %v4490
      %v4492 = vadd.f32 %v3416, %v3432
      %v4493 = vadd.f32 %v4492, %v3448
      %v4494 = vadd.f32 %v4493, %v3464
      %v4495 = vadd.f32 %v4494, %v3480
      %v4496 = vadd.f32 %v4495, %v3496
      %v4497 = vadd.f32 %v4496, %v3512
      %v4498 = vadd.f32 %v4497, %v3528
      %v4499 = vrot.slane %v4498, 4
      %v4500 = vadd.f32 %v4498, %v4499
      %v4501 = vrot.slane %v4500, 2
      %v4502 = vadd.f32 %v4500, %v4501
      %v4503 = vrot.slane %v4502, 1
      %v4504 = vadd.f32 %v4502, %v4503
      %v4505 = vadd.f32 %v3417, %v3433
      %v4506 = vadd.f32 %v4505, %v3449
      %v4507 = vadd.f32 %v4506, %v3465
      %v4508 = vadd.f32 %v4507, %v3481
      %v4509 = vadd.f32 %v4508, %v3497
      %v4510 = vadd.f32 %v4509, %v3513
      %v4511 = vadd.f32 %v4510, %v3529
      %v4512 = vrot.slane %v4511, 4
      %v4513 = vadd.f32 %v4511, %v4512
      %v4514 = vrot.slane %v4513, 2
      %v4515 = vadd.f32 %v4513, %v4514
      %v4516 = vrot.slane %v4515, 1
      %v4517 = vadd.f32 %v4515, %v4516
      %v4518 = vadd.f32 %v3418, %v3434
      %v4519 = vadd.f32 %v4518, %v3450
      %v4520 = vadd.f32 %v4519, %v3466
      %v4521 = vadd.f32 %v4520, %v3482
      %v4522 = vadd.f32 %v4521, %v3498
      %v4523 = vadd.f32 %v4522, %v3514
      %v4524 = vadd.f32 %v4523, %v3530
      %v4525 = vrot.slane %v4524, 4
      %v4526 = vadd.f32 %v4524, %v4525
      %v4527 = vrot.slane %v4526, 2
      %v4528 = vadd.f32 %v4526, %v4527
      %v4529 = vrot.slane %v4528, 1
      %v4530 = vadd.f32 %v4528, %v4529
      %v4531 = vadd.f32 %v3419, %v3435
      %v4532 = vadd.f32 %v4531, %v3451
      %v4533 = vadd.f32 %v4532, %v3467
      %v4534 = vadd.f32 %v4533, %v3483
      %v4535 = vadd.f32 %v4534, %v3499
      %v4536 = vadd.f32 %v4535, %v3515
      %v4537 = vadd.f32 %v4536, %v3531
      %v4538 = vrot.slane %v4537, 4
      %v4539 = vadd.f32 %v4537, %v4538
      %v4540 = vrot.slane %v4539, 2
      %v4541 = vadd.f32 %v4539, %v4540
      %v4542 = vrot.slane %v4541, 1
      %v4543 = vadd.f32 %v4541, %v4542
      %v4544 = vadd.f32 %v3420, %v3436
      %v4545 = vadd.f32 %v4544, %v3452
      %v4546 = vadd.f32 %v4545, %v3468
      %v4547 = vadd.f32 %v4546, %v3484
      %v4548 = vadd.f32 %v4547, %v3500
      %v4549 = vadd.f32 %v4548, %v3516
      %v4550 = vadd.f32 %v4549, %v3532
      %v4551 = vrot.slane %v4550, 4
      %v4552 = vadd.f32 %v4550, %v4551
      %v4553 = vrot.slane %v4552, 2
      %v4554 = vadd.f32 %v4552, %v4553
      %v4555 = vrot.slane %v4554, 1
      %v4556 = vadd.f32 %v4554, %v4555
      %v4557 = vadd.f32 %v3421, %v3437
      %v4558 = vadd.f32 %v4557, %v3453
      %v4559 = vadd.f32 %v4558, %v3469
      %v4560 = vadd.f32 %v4559, %v3485
      %v4561 = vadd.f32 %v4560, %v3501
      %v4562 = vadd.f32 %v4561, %v3517
      %v4563 = vadd.f32 %v4562, %v3533
      %v4564 = vrot.slane %v4563, 4
      %v4565 = vadd.f32 %v4563, %v4564
      %v4566 = vrot.slane %v4565, 2
      %v4567 = vadd.f32 %v4565, %v4566
      %v4568 = vrot.slane %v4567, 1
      %v4569 = vadd.f32 %v4567, %v4568
      %v4570 = vadd.f32 %v3422, %v3438
      %v4571 = vadd.f32 %v4570, %v3454
      %v4572 = vadd.f32 %v4571, %v3470
      %v4573 = vadd.f32 %v4572, %v3486
      %v4574 = vadd.f32 %v4573, %v3502
      %v4575 = vadd.f32 %v4574, %v3518
      %v4576 = vadd.f32 %v4575, %v3534
      %v4577 = vrot.slane %v4576, 4
      %v4578 = vadd.f32 %v4576, %v4577
      %v4579 = vrot.slane %v4578, 2
      %v4580 = vadd.f32 %v4578, %v4579
      %v4581 = vrot.slane %v4580, 1
      %v4582 = vadd.f32 %v4580, %v4581
      %v4583 = vadd.f32 %v3423, %v3439
      %v4584 = vadd.f32 %v4583, %v3455
      %v4585 = vadd.f32 %v4584, %v3471
      %v4586 = vadd.f32 %v4585, %v3487
      %v4587 = vadd.f32 %v4586, %v3503
      %v4588 = vadd.f32 %v4587, %v3519
      %v4589 = vadd.f32 %v4588, %v3535
      %v4590 = vrot.slane %v4589, 4
      %v4591 = vadd.f32 %v4589, %v4590
      %v4592 = vrot.slane %v4591, 2
      %v4593 = vadd.f32 %v4591, %v4592
      %v4594 = vrot.slane %v4593, 1
      %v4595 = vadd.f32 %v4593, %v4594
      %v4596 = vadd.f32 %v3424, %v3440
      %v4597 = vadd.f32 %v4596, %v3456
      %v4598 = vadd.f32 %v4597, %v3472
      %v4599 = vadd.f32 %v4598, %v3488
      %v4600 = vadd.f32 %v4599, %v3504
      %v4601 = vadd.f32 %v4600, %v3520
      %v4602 = vadd.f32 %v4601, %v3536
      %v4603 = vrot.slane %v4602, 4
      %v4604 = vadd.f32 %v4602, %v4603
      %v4605 = vrot.slane %v4604, 2
      %v4606 = vadd.f32 %v4604, %v4605
      %v4607 = vrot.slane %v4606, 1
      %v4608 = vadd.f32 %v4606, %v4607
      %v4609 = vadd.f32 %v3537, %v3553
      %v4610 = vadd.f32 %v4609, %v3569
      %v4611 = vadd.f32 %v4610, %v3585
      %v4612 = vadd.f32 %v4611, %v3601
      %v4613 = vadd.f32 %v4612, %v3617
      %v4614 = vadd.f32 %v4613, %v3633
      %v4615 = vadd.f32 %v4614, %v3649
      %v4616 = vrot.slane %v4615, 4
      %v4617 = vadd.f32 %v4615, %v4616
      %v4618 = vrot.slane %v4617, 2
      %v4619 = vadd.f32 %v4617, %v4618
      %v4620 = vrot.slane %v4619, 1
      %v4621 = vadd.f32 %v4619, %v4620
      %v4622 = vadd.f32 %v3538, %v3554
      %v4623 = vadd.f32 %v4622, %v3570
      %v4624 = vadd.f32 %v4623, %v3586
      %v4625 = vadd.f32 %v4624, %v3602
      %v4626 = vadd.f32 %v4625, %v3618
      %v4627 = vadd.f32 %v4626, %v3634
      %v4628 = vadd.f32 %v4627, %v3650
      %v4629 = vrot.slane %v4628, 4
      %v4630 = vadd.f32 %v4628, %v4629
      %v4631 = vrot.slane %v4630, 2
      %v4632 = vadd.f32 %v4630, %v4631
      %v4633 = vrot.slane %v4632, 1
      %v4634 = vadd.f32 %v4632, %v4633
      %v4635 = vadd.f32 %v3539, %v3555
      %v4636 = vadd.f32 %v4635, %v3571
      %v4637 = vadd.f32 %v4636, %v3587
      %v4638 = vadd.f32 %v4637, %v3603
      %v4639 = vadd.f32 %v4638, %v3619
      %v4640 = vadd.f32 %v4639, %v3635
      %v4641 = vadd.f32 %v4640, %v3651
      %v4642 = vrot.slane %v4641, 4
      %v4643 = vadd.f32 %v4641, %v4642
      %v4644 = vrot.slane %v4643, 2
      %v4645 = vadd.f32 %v4643, %v4644
      %v4646 = vrot.slane %v4645, 1
      %v4647 = vadd.f32 %v4645, %v4646
      %v4648 = vadd.f32 %v3540, %v3556
      %v4649 = vadd.f32 %v4648, %v3572
      %v4650 = vadd.f32 %v4649, %v3588
      %v4651 = vadd.f32 %v4650, %v3604
      %v4652 = vadd.f32 %v4651, %v3620
      %v4653 = vadd.f32 %v4652, %v3636
      %v4654 = vadd.f32 %v4653, %v3652
      %v4655 = vrot.slane %v4654, 4
      %v4656 = vadd.f32 %v4654, %v4655
      %v4657 = vrot.slane %v4656, 2
      %v4658 = vadd.f32 %v4656, %v4657
      %v4659 = vrot.slane %v4658, 1
      %v4660 = vadd.f32 %v4658, %v4659
      %v4661 = vadd.f32 %v3541, %v3557
      %v4662 = vadd.f32 %v4661, %v3573
      %v4663 = vadd.f32 %v4662, %v3589
      %v4664 = vadd.f32 %v4663, %v3605
      %v4665 = vadd.f32 %v4664, %v3621
      %v4666 = vadd.f32 %v4665, %v3637
      %v4667 = vadd.f32 %v4666, %v3653
      %v4668 = vrot.slane %v4667, 4
      %v4669 = vadd.f32 %v4667, %v4668
      %v4670 = vrot.slane %v4669, 2
      %v4671 = vadd.f32 %v4669, %v4670
      %v4672 = vrot.slane %v4671, 1
      %v4673 = vadd.f32 %v4671, %v4672
      %v4674 = vadd.f32 %v3542, %v3558
      %v4675 = vadd.f32 %v4674, %v3574
      %v4676 = vadd.f32 %v4675, %v3590
      %v4677 = vadd.f32 %v4676, %v3606
      %v4678 = vadd.f32 %v4677, %v3622
      %v4679 = vadd.f32 %v4678, %v3638
      %v4680 = vadd.f32 %v4679, %v3654
      %v4681 = vrot.slane %v4680, 4
      %v4682 = vadd.f32 %v4680, %v4681
      %v4683 = vrot.slane %v4682, 2
      %v4684 = vadd.f32 %v4682, %v4683
      %v4685 = vrot.slane %v4684, 1
      %v4686 = vadd.f32 %v4684, %v4685
      %v4687 = vadd.f32 %v3543, %v3559
      %v4688 = vadd.f32 %v4687, %v3575
      %v4689 = vadd.f32 %v4688, %v3591
      %v4690 = vadd.f32 %v4689, %v3607
      %v4691 = vadd.f32 %v4690, %v3623
      %v4692 = vadd.f32 %v4691, %v3639
      %v4693 = vadd.f32 %v4692, %v3655
      %v4694 = vrot.slane %v4693, 4
      %v4695 = vadd.f32 %v4693, %v4694
      %v4696 = vrot.slane %v4695, 2
      %v4697 = vadd.f32 %v4695, %v4696
      %v4698 = vrot.slane %v4697, 1
      %v4699 = vadd.f32 %v4697, %v4698
      %v4700 = vadd.f32 %v3544, %v3560
      %v4701 = vadd.f32 %v4700, %v3576
      %v4702 = vadd.f32 %v4701, %v3592
      %v4703 = vadd.f32 %v4702, %v3608
      %v4704 = vadd.f32 %v4703, %v3624
      %v4705 = vadd.f32 %v4704, %v3640
      %v4706 = vadd.f32 %v4705, %v3656
      %v4707 = vrot.slane %v4706, 4
      %v4708 = vadd.f32 %v4706, %v4707
      %v4709 = vrot.slane %v4708, 2
      %v4710 = vadd.f32 %v4708, %v4709
      %v4711 = vrot.slane %v4710, 1
      %v4712 = vadd.f32 %v4710, %v4711
      %v4713 = vadd.f32 %v3545, %v3561
      %v4714 = vadd.f32 %v4713, %v3577
      %v4715 = vadd.f32 %v4714, %v3593
      %v4716 = vadd.f32 %v4715, %v3609
      %v4717 = vadd.f32 %v4716, %v3625
      %v4718 = vadd.f32 %v4717, %v3641
      %v4719 = vadd.f32 %v4718, %v3657
      %v4720 = vrot.slane %v4719, 4
      %v4721 = vadd.f32 %v4719, %v4720
      %v4722 = vrot.slane %v4721, 2
      %v4723 = vadd.f32 %v4721, %v4722
      %v4724 = vrot.slane %v4723, 1
      %v4725 = vadd.f32 %v4723, %v4724
      %v4726 = vadd.f32 %v3546, %v3562
      %v4727 = vadd.f32 %v4726, %v3578
      %v4728 = vadd.f32 %v4727, %v3594
      %v4729 = vadd.f32 %v4728, %v3610
      %v4730 = vadd.f32 %v4729, %v3626
      %v4731 = vadd.f32 %v4730, %v3642
      %v4732 = vadd.f32 %v4731, %v3658
      %v4733 = vrot.slane %v4732, 4
      %v4734 = vadd.f32 %v4732, %v4733
      %v4735 = vrot.slane %v4734, 2
      %v4736 = vadd.f32 %v4734, %v4735
      %v4737 = vrot.slane %v4736, 1
      %v4738 = vadd.f32 %v4736, %v4737
      %v4739 = vadd.f32 %v3547, %v3563
      %v4740 = vadd.f32 %v4739, %v3579
      %v4741 = vadd.f32 %v4740, %v3595
      %v4742 = vadd.f32 %v4741, %v3611
      %v4743 = vadd.f32 %v4742, %v3627
      %v4744 = vadd.f32 %v4743, %v3643
      %v4745 = vadd.f32 %v4744, %v3659
      %v4746 = vrot.slane %v4745, 4
      %v4747 = vadd.f32 %v4745, %v4746
      %v4748 = vrot.slane %v4747, 2
      %v4749 = vadd.f32 %v4747, %v4748
      %v4750 = vrot.slane %v4749, 1
      %v4751 = vadd.f32 %v4749, %v4750
      %v4752 = vadd.f32 %v3548, %v3564
      %v4753 = vadd.f32 %v4752, %v3580
      %v4754 = vadd.f32 %v4753, %v3596
      %v4755 = vadd.f32 %v4754, %v3612
      %v4756 = vadd.f32 %v4755, %v3628
      %v4757 = vadd.f32 %v4756, %v3644
      %v4758 = vadd.f32 %v4757, %v3660
      %v4759 = vrot.slane %v4758, 4
      %v4760 = vadd.f32 %v4758, %v4759
      %v4761 = vrot.slane %v4760, 2
      %v4762 = vadd.f32 %v4760, %v4761
      %v4763 = vrot.slane %v4762, 1
      %v4764 = vadd.f32 %v4762, %v4763
      %v4765 = vadd.f32 %v3549, %v3565
      %v4766 = vadd.f32 %v4765, %v3581
      %v4767 = vadd.f32 %v4766, %v3597
      %v4768 = vadd.f32 %v4767, %v3613
      %v4769 = vadd.f32 %v4768, %v3629
      %v4770 = vadd.f32 %v4769, %v3645
      %v4771 = vadd.f32 %v4770, %v3661
      %v4772 = vrot.slane %v4771, 4
      %v4773 = vadd.f32 %v4771, %v4772
      %v4774 = vrot.slane %v4773, 2
      %v4775 = vadd.f32 %v4773, %v4774
      %v4776 = vrot.slane %v4775, 1
      %v4777 = vadd.f32 %v4775, %v4776
      %v4778 = vadd.f32 %v3550, %v3566
      %v4779 = vadd.f32 %v4778, %v3582
      %v4780 = vadd.f32 %v4779, %v3598
      %v4781 = vadd.f32 %v4780, %v3614
      %v4782 = vadd.f32 %v4781, %v3630
      %v4783 = vadd.f32 %v4782, %v3646
      %v4784 = vadd.f32 %v4783, %v3662
      %v4785 = vrot.slane %v4784, 4
      %v4786 = vadd.f32 %v4784, %v4785
      %v4787 = vrot.slane %v4786, 2
      %v4788 = vadd.f32 %v4786, %v4787
      %v4789 = vrot.slane %v4788, 1
      %v4790 = vadd.f32 %v4788, %v4789
      %v4791 = vadd.f32 %v3551, %v3567
      %v4792 = vadd.f32 %v4791, %v3583
      %v4793 = vadd.f32 %v4792, %v3599
      %v4794 = vadd.f32 %v4793, %v3615
      %v4795 = vadd.f32 %v4794, %v3631
      %v4796 = vadd.f32 %v4795, %v3647
      %v4797 = vadd.f32 %v4796, %v3663
      %v4798 = vrot.slane %v4797, 4
      %v4799 = vadd.f32 %v4797, %v4798
      %v4800 = vrot.slane %v4799, 2
      %v4801 = vadd.f32 %v4799, %v4800
      %v4802 = vrot.slane %v4801, 1
      %v4803 = vadd.f32 %v4801, %v4802
      %v4804 = vadd.f32 %v3552, %v3568
      %v4805 = vadd.f32 %v4804, %v3584
      %v4806 = vadd.f32 %v4805, %v3600
      %v4807 = vadd.f32 %v4806, %v3616
      %v4808 = vadd.f32 %v4807, %v3632
      %v4809 = vadd.f32 %v4808, %v3648
      %v4810 = vadd.f32 %v4809, %v3664
      %v4811 = vrot.slane %v4810, 4
      %v4812 = vadd.f32 %v4810, %v4811
      %v4813 = vrot.slane %v4812, 2
      %v4814 = vadd.f32 %v4812, %v4813
      %v4815 = vrot.slane %v4814, 1
      %v4816 = vadd.f32 %v4814, %v4815
      %v4817 = vadd.f32 %v3665, %v3681
      %v4818 = vadd.f32 %v4817, %v3697
      %v4819 = vadd.f32 %v4818, %v3713
      %v4820 = vadd.f32 %v4819, %v3729
      %v4821 = vadd.f32 %v4820, %v3745
      %v4822 = vadd.f32 %v4821, %v3761
      %v4823 = vadd.f32 %v4822, %v3777
      %v4824 = vrot.slane %v4823, 4
      %v4825 = vadd.f32 %v4823, %v4824
      %v4826 = vrot.slane %v4825, 2
      %v4827 = vadd.f32 %v4825, %v4826
      %v4828 = vrot.slane %v4827, 1
      %v4829 = vadd.f32 %v4827, %v4828
      %v4830 = vadd.f32 %v3666, %v3682
      %v4831 = vadd.f32 %v4830, %v3698
      %v4832 = vadd.f32 %v4831, %v3714
      %v4833 = vadd.f32 %v4832, %v3730
      %v4834 = vadd.f32 %v4833, %v3746
      %v4835 = vadd.f32 %v4834, %v3762
      %v4836 = vadd.f32 %v4835, %v3778
      %v4837 = vrot.slane %v4836, 4
      %v4838 = vadd.f32 %v4836, %v4837
      %v4839 = vrot.slane %v4838, 2
      %v4840 = vadd.f32 %v4838, %v4839
      %v4841 = vrot.slane %v4840, 1
      %v4842 = vadd.f32 %v4840, %v4841
      %v4843 = vadd.f32 %v3667, %v3683
      %v4844 = vadd.f32 %v4843, %v3699
      %v4845 = vadd.f32 %v4844, %v3715
      %v4846 = vadd.f32 %v4845, %v3731
      %v4847 = vadd.f32 %v4846, %v3747
      %v4848 = vadd.f32 %v4847, %v3763
      %v4849 = vadd.f32 %v4848, %v3779
      %v4850 = vrot.slane %v4849, 4
      %v4851 = vadd.f32 %v4849, %v4850
      %v4852 = vrot.slane %v4851, 2
      %v4853 = vadd.f32 %v4851, %v4852
      %v4854 = vrot.slane %v4853, 1
      %v4855 = vadd.f32 %v4853, %v4854
      %v4856 = vadd.f32 %v3668, %v3684
      %v4857 = vadd.f32 %v4856, %v3700
      %v4858 = vadd.f32 %v4857, %v3716
      %v4859 = vadd.f32 %v4858, %v3732
      %v4860 = vadd.f32 %v4859, %v3748
      %v4861 = vadd.f32 %v4860, %v3764
      %v4862 = vadd.f32 %v4861, %v3780
      %v4863 = vrot.slane %v4862, 4
      %v4864 = vadd.f32 %v4862, %v4863
      %v4865 = vrot.slane %v4864, 2
      %v4866 = vadd.f32 %v4864, %v4865
      %v4867 = vrot.slane %v4866, 1
      %v4868 = vadd.f32 %v4866, %v4867
      %v4869 = vadd.f32 %v3669, %v3685
      %v4870 = vadd.f32 %v4869, %v3701
      %v4871 = vadd.f32 %v4870, %v3717
      %v4872 = vadd.f32 %v4871, %v3733
      %v4873 = vadd.f32 %v4872, %v3749
      %v4874 = vadd.f32 %v4873, %v3765
      %v4875 = vadd.f32 %v4874, %v3781
      %v4876 = vrot.slane %v4875, 4
      %v4877 = vadd.f32 %v4875, %v4876
      %v4878 = vrot.slane %v4877, 2
      %v4879 = vadd.f32 %v4877, %v4878
      %v4880 = vrot.slane %v4879, 1
      %v4881 = vadd.f32 %v4879, %v4880
      %v4882 = vadd.f32 %v3670, %v3686
      %v4883 = vadd.f32 %v4882, %v3702
      %v4884 = vadd.f32 %v4883, %v3718
      %v4885 = vadd.f32 %v4884, %v3734
      %v4886 = vadd.f32 %v4885, %v3750
      %v4887 = vadd.f32 %v4886, %v3766
      %v4888 = vadd.f32 %v4887, %v3782
      %v4889 = vrot.slane %v4888, 4
      %v4890 = vadd.f32 %v4888, %v4889
      %v4891 = vrot.slane %v4890, 2
      %v4892 = vadd.f32 %v4890, %v4891
      %v4893 = vrot.slane %v4892, 1
      %v4894 = vadd.f32 %v4892, %v4893
      %v4895 = vadd.f32 %v3671, %v3687
      %v4896 = vadd.f32 %v4895, %v3703
      %v4897 = vadd.f32 %v4896, %v3719
      %v4898 = vadd.f32 %v4897, %v3735
      %v4899 = vadd.f32 %v4898, %v3751
      %v4900 = vadd.f32 %v4899, %v3767
      %v4901 = vadd.f32 %v4900, %v3783
      %v4902 = vrot.slane %v4901, 4
      %v4903 = vadd.f32 %v4901, %v4902
      %v4904 = vrot.slane %v4903, 2
      %v4905 = vadd.f32 %v4903, %v4904
      %v4906 = vrot.slane %v4905, 1
      %v4907 = vadd.f32 %v4905, %v4906
      %v4908 = vadd.f32 %v3672, %v3688
      %v4909 = vadd.f32 %v4908, %v3704
      %v4910 = vadd.f32 %v4909, %v3720
      %v4911 = vadd.f32 %v4910, %v3736
      %v4912 = vadd.f32 %v4911, %v3752
      %v4913 = vadd.f32 %v4912, %v3768
      %v4914 = vadd.f32 %v4913, %v3784
      %v4915 = vrot.slane %v4914, 4
      %v4916 = vadd.f32 %v4914, %v4915
      %v4917 = vrot.slane %v4916, 2
      %v4918 = vadd.f32 %v4916, %v4917
      %v4919 = vrot.slane %v4918, 1
      %v4920 = vadd.f32 %v4918, %v4919
      %v4921 = vadd.f32 %v3673, %v3689
      %v4922 = vadd.f32 %v4921, %v3705
      %v4923 = vadd.f32 %v4922, %v3721
      %v4924 = vadd.f32 %v4923, %v3737
      %v4925 = vadd.f32 %v4924, %v3753
      %v4926 = vadd.f32 %v4925, %v3769
      %v4927 = vadd.f32 %v4926, %v3785
      %v4928 = vrot.slane %v4927, 4
      %v4929 = vadd.f32 %v4927, %v4928
      %v4930 = vrot.slane %v4929, 2
      %v4931 = vadd.f32 %v4929, %v4930
      %v4932 = vrot.slane %v4931, 1
      %v4933 = vadd.f32 %v4931, %v4932
      %v4934 = vadd.f32 %v3674, %v3690
      %v4935 = vadd.f32 %v4934, %v3706
      %v4936 = vadd.f32 %v4935, %v3722
      %v4937 = vadd.f32 %v4936, %v3738
      %v4938 = vadd.f32 %v4937, %v3754
      %v4939 = vadd.f32 %v4938, %v3770
      %v4940 = vadd.f32 %v4939, %v3786
      %v4941 = vrot.slane %v4940, 4
      %v4942 = vadd.f32 %v4940, %v4941
      %v4943 = vrot.slane %v4942, 2
      %v4944 = vadd.f32 %v4942, %v4943
      %v4945 = vrot.slane %v4944, 1
      %v4946 = vadd.f32 %v4944, %v4945
      %v4947 = vadd.f32 %v3675, %v3691
      %v4948 = vadd.f32 %v4947, %v3707
      %v4949 = vadd.f32 %v4948, %v3723
      %v4950 = vadd.f32 %v4949, %v3739
      %v4951 = vadd.f32 %v4950, %v3755
      %v4952 = vadd.f32 %v4951, %v3771
      %v4953 = vadd.f32 %v4952, %v3787
      %v4954 = vrot.slane %v4953, 4
      %v4955 = vadd.f32 %v4953, %v4954
      %v4956 = vrot.slane %v4955, 2
      %v4957 = vadd.f32 %v4955, %v4956
      %v4958 = vrot.slane %v4957, 1
      %v4959 = vadd.f32 %v4957, %v4958
      %v4960 = vadd.f32 %v3676, %v3692
      %v4961 = vadd.f32 %v4960, %v3708
      %v4962 = vadd.f32 %v4961, %v3724
      %v4963 = vadd.f32 %v4962, %v3740
      %v4964 = vadd.f32 %v4963, %v3756
      %v4965 = vadd.f32 %v4964, %v3772
      %v4966 = vadd.f32 %v4965, %v3788
      %v4967 = vrot.slane %v4966, 4
      %v4968 = vadd.f32 %v4966, %v4967
      %v4969 = vrot.slane %v4968, 2
      %v4970 = vadd.f32 %v4968, %v4969
      %v4971 = vrot.slane %v4970, 1
      %v4972 = vadd.f32 %v4970, %v4971
      %v4973 = vadd.f32 %v3677, %v3693
      %v4974 = vadd.f32 %v4973, %v3709
      %v4975 = vadd.f32 %v4974, %v3725
      %v4976 = vadd.f32 %v4975, %v3741
      %v4977 = vadd.f32 %v4976, %v3757
      %v4978 = vadd.f32 %v4977, %v3773
      %v4979 = vadd.f32 %v4978, %v3789
      %v4980 = vrot.slane %v4979, 4
      %v4981 = vadd.f32 %v4979, %v4980
      %v4982 = vrot.slane %v4981, 2
      %v4983 = vadd.f32 %v4981, %v4982
      %v4984 = vrot.slane %v4983, 1
      %v4985 = vadd.f32 %v4983, %v4984
      %v4986 = vadd.f32 %v3678, %v3694
      %v4987 = vadd.f32 %v4986, %v3710
      %v4988 = vadd.f32 %v4987, %v3726
      %v4989 = vadd.f32 %v4988, %v3742
      %v4990 = vadd.f32 %v4989, %v3758
      %v4991 = vadd.f32 %v4990, %v3774
      %v4992 = vadd.f32 %v4991, %v3790
      %v4993 = vrot.slane %v4992, 4
      %v4994 = vadd.f32 %v4992, %v4993
      %v4995 = vrot.slane %v4994, 2
      %v4996 = vadd.f32 %v4994, %v4995
      %v4997 = vrot.slane %v4996, 1
      %v4998 = vadd.f32 %v4996, %v4997
      %v4999 = vadd.f32 %v3679, %v3695
      %v5000 = vadd.f32 %v4999, %v3711
      %v5001 = vadd.f32 %v5000, %v3727
      %v5002 = vadd.f32 %v5001, %v3743
      %v5003 = vadd.f32 %v5002, %v3759
      %v5004 = vadd.f32 %v5003, %v3775
      %v5005 = vadd.f32 %v5004, %v3791
      %v5006 = vrot.slane %v5005, 4
      %v5007 = vadd.f32 %v5005, %v5006
      %v5008 = vrot.slane %v5007, 2
      %v5009 = vadd.f32 %v5007, %v5008
      %v5010 = vrot.slane %v5009, 1
      %v5011 = vadd.f32 %v5009, %v5010
      %v5012 = vadd.f32 %v3680, %v3696
      %v5013 = vadd.f32 %v5012, %v3712
      %v5014 = vadd.f32 %v5013, %v3728
      %v5015 = vadd.f32 %v5014, %v3744
      %v5016 = vadd.f32 %v5015, %v3760
      %v5017 = vadd.f32 %v5016, %v3776
      %v5018 = vadd.f32 %v5017, %v3792
      %v5019 = vrot.slane %v5018, 4
      %v5020 = vadd.f32 %v5018, %v5019
      %v5021 = vrot.slane %v5020, 2
      %v5022 = vadd.f32 %v5020, %v5021
      %v5023 = vrot.slane %v5022, 1
      %v5024 = vadd.f32 %v5022, %v5023
      %v5025 = vadd.f32 %v3793, %v3809
      %v5026 = vadd.f32 %v5025, %v3825
      %v5027 = vadd.f32 %v5026, %v3841
      %v5028 = vadd.f32 %v5027, %v3857
      %v5029 = vadd.f32 %v5028, %v3873
      %v5030 = vadd.f32 %v5029, %v3889
      %v5031 = vadd.f32 %v5030, %v3905
      %v5032 = vrot.slane %v5031, 4
      %v5033 = vadd.f32 %v5031, %v5032
      %v5034 = vrot.slane %v5033, 2
      %v5035 = vadd.f32 %v5033, %v5034
      %v5036 = vrot.slane %v5035, 1
      %v5037 = vadd.f32 %v5035, %v5036
      %v5038 = vadd.f32 %v3794, %v3810
      %v5039 = vadd.f32 %v5038, %v3826
      %v5040 = vadd.f32 %v5039, %v3842
      %v5041 = vadd.f32 %v5040, %v3858
      %v5042 = vadd.f32 %v5041, %v3874
      %v5043 = vadd.f32 %v5042, %v3890
      %v5044 = vadd.f32 %v5043, %v3906
      %v5045 = vrot.slane %v5044, 4
      %v5046 = vadd.f32 %v5044, %v5045
      %v5047 = vrot.slane %v5046, 2
      %v5048 = vadd.f32 %v5046, %v5047
      %v5049 = vrot.slane %v5048, 1
      %v5050 = vadd.f32 %v5048, %v5049
      %v5051 = vadd.f32 %v3795, %v3811
      %v5052 = vadd.f32 %v5051, %v3827
      %v5053 = vadd.f32 %v5052, %v3843
      %v5054 = vadd.f32 %v5053, %v3859
      %v5055 = vadd.f32 %v5054, %v3875
      %v5056 = vadd.f32 %v5055, %v3891
      %v5057 = vadd.f32 %v5056, %v3907
      %v5058 = vrot.slane %v5057, 4
      %v5059 = vadd.f32 %v5057, %v5058
      %v5060 = vrot.slane %v5059, 2
      %v5061 = vadd.f32 %v5059, %v5060
      %v5062 = vrot.slane %v5061, 1
      %v5063 = vadd.f32 %v5061, %v5062
      %v5064 = vadd.f32 %v3796, %v3812
      %v5065 = vadd.f32 %v5064, %v3828
      %v5066 = vadd.f32 %v5065, %v3844
      %v5067 = vadd.f32 %v5066, %v3860
      %v5068 = vadd.f32 %v5067, %v3876
      %v5069 = vadd.f32 %v5068, %v3892
      %v5070 = vadd.f32 %v5069, %v3908
      %v5071 = vrot.slane %v5070, 4
      %v5072 = vadd.f32 %v5070, %v5071
      %v5073 = vrot.slane %v5072, 2
      %v5074 = vadd.f32 %v5072, %v5073
      %v5075 = vrot.slane %v5074, 1
      %v5076 = vadd.f32 %v5074, %v5075
      %v5077 = vadd.f32 %v3797, %v3813
      %v5078 = vadd.f32 %v5077, %v3829
      %v5079 = vadd.f32 %v5078, %v3845
      %v5080 = vadd.f32 %v5079, %v3861
      %v5081 = vadd.f32 %v5080, %v3877
      %v5082 = vadd.f32 %v5081, %v3893
      %v5083 = vadd.f32 %v5082, %v3909
      %v5084 = vrot.slane %v5083, 4
      %v5085 = vadd.f32 %v5083, %v5084
      %v5086 = vrot.slane %v5085, 2
      %v5087 = vadd.f32 %v5085, %v5086
      %v5088 = vrot.slane %v5087, 1
      %v5089 = vadd.f32 %v5087, %v5088
      %v5090 = vadd.f32 %v3798, %v3814
      %v5091 = vadd.f32 %v5090, %v3830
      %v5092 = vadd.f32 %v5091, %v3846
      %v5093 = vadd.f32 %v5092, %v3862
      %v5094 = vadd.f32 %v5093, %v3878
      %v5095 = vadd.f32 %v5094, %v3894
      %v5096 = vadd.f32 %v5095, %v3910
      %v5097 = vrot.slane %v5096, 4
      %v5098 = vadd.f32 %v5096, %v5097
      %v5099 = vrot.slane %v5098, 2
      %v5100 = vadd.f32 %v5098, %v5099
      %v5101 = vrot.slane %v5100, 1
      %v5102 = vadd.f32 %v5100, %v5101
      %v5103 = vadd.f32 %v3799, %v3815
      %v5104 = vadd.f32 %v5103, %v3831
      %v5105 = vadd.f32 %v5104, %v3847
      %v5106 = vadd.f32 %v5105, %v3863
      %v5107 = vadd.f32 %v5106, %v3879
      %v5108 = vadd.f32 %v5107, %v3895
      %v5109 = vadd.f32 %v5108, %v3911
      %v5110 = vrot.slane %v5109, 4
      %v5111 = vadd.f32 %v5109, %v5110
      %v5112 = vrot.slane %v5111, 2
      %v5113 = vadd.f32 %v5111, %v5112
      %v5114 = vrot.slane %v5113, 1
      %v5115 = vadd.f32 %v5113, %v5114
      %v5116 = vadd.f32 %v3800, %v3816
      %v5117 = vadd.f32 %v5116, %v3832
      %v5118 = vadd.f32 %v5117, %v3848
      %v5119 = vadd.f32 %v5118, %v3864
      %v5120 = vadd.f32 %v5119, %v3880
      %v5121 = vadd.f32 %v5120, %v3896
      %v5122 = vadd.f32 %v5121, %v3912
      %v5123 = vrot.slane %v5122, 4
      %v5124 = vadd.f32 %v5122, %v5123
      %v5125 = vrot.slane %v5124, 2
      %v5126 = vadd.f32 %v5124, %v5125
      %v5127 = vrot.slane %v5126, 1
      %v5128 = vadd.f32 %v5126, %v5127
      %v5129 = vadd.f32 %v3801, %v3817
      %v5130 = vadd.f32 %v5129, %v3833
      %v5131 = vadd.f32 %v5130, %v3849
      %v5132 = vadd.f32 %v5131, %v3865
      %v5133 = vadd.f32 %v5132, %v3881
      %v5134 = vadd.f32 %v5133, %v3897
      %v5135 = vadd.f32 %v5134, %v3913
      %v5136 = vrot.slane %v5135, 4
      %v5137 = vadd.f32 %v5135, %v5136
      %v5138 = vrot.slane %v5137, 2
      %v5139 = vadd.f32 %v5137, %v5138
      %v5140 = vrot.slane %v5139, 1
      %v5141 = vadd.f32 %v5139, %v5140
      %v5142 = vadd.f32 %v3802, %v3818
      %v5143 = vadd.f32 %v5142, %v3834
      %v5144 = vadd.f32 %v5143, %v3850
      %v5145 = vadd.f32 %v5144, %v3866
      %v5146 = vadd.f32 %v5145, %v3882
      %v5147 = vadd.f32 %v5146, %v3898
      %v5148 = vadd.f32 %v5147, %v3914
      %v5149 = vrot.slane %v5148, 4
      %v5150 = vadd.f32 %v5148, %v5149
      %v5151 = vrot.slane %v5150, 2
      %v5152 = vadd.f32 %v5150, %v5151
      %v5153 = vrot.slane %v5152, 1
      %v5154 = vadd.f32 %v5152, %v5153
      %v5155 = vadd.f32 %v3803, %v3819
      %v5156 = vadd.f32 %v5155, %v3835
      %v5157 = vadd.f32 %v5156, %v3851
      %v5158 = vadd.f32 %v5157, %v3867
      %v5159 = vadd.f32 %v5158, %v3883
      %v5160 = vadd.f32 %v5159, %v3899
      %v5161 = vadd.f32 %v5160, %v3915
      %v5162 = vrot.slane %v5161, 4
      %v5163 = vadd.f32 %v5161, %v5162
      %v5164 = vrot.slane %v5163, 2
      %v5165 = vadd.f32 %v5163, %v5164
      %v5166 = vrot.slane %v5165, 1
      %v5167 = vadd.f32 %v5165, %v5166
      %v5168 = vadd.f32 %v3804, %v3820
      %v5169 = vadd.f32 %v5168, %v3836
      %v5170 = vadd.f32 %v5169, %v3852
      %v5171 = vadd.f32 %v5170, %v3868
      %v5172 = vadd.f32 %v5171, %v3884
      %v5173 = vadd.f32 %v5172, %v3900
      %v5174 = vadd.f32 %v5173, %v3916
      %v5175 = vrot.slane %v5174, 4
      %v5176 = vadd.f32 %v5174, %v5175
      %v5177 = vrot.slane %v5176, 2
      %v5178 = vadd.f32 %v5176, %v5177
      %v5179 = vrot.slane %v5178, 1
      %v5180 = vadd.f32 %v5178, %v5179
      %v5181 = vadd.f32 %v3805, %v3821
      %v5182 = vadd.f32 %v5181, %v3837
      %v5183 = vadd.f32 %v5182, %v3853
      %v5184 = vadd.f32 %v5183, %v3869
      %v5185 = vadd.f32 %v5184, %v3885
      %v5186 = vadd.f32 %v5185, %v3901
      %v5187 = vadd.f32 %v5186, %v3917
      %v5188 = vrot.slane %v5187, 4
      %v5189 = vadd.f32 %v5187, %v5188
      %v5190 = vrot.slane %v5189, 2
      %v5191 = vadd.f32 %v5189, %v5190
      %v5192 = vrot.slane %v5191, 1
      %v5193 = vadd.f32 %v5191, %v5192
      %v5194 = vadd.f32 %v3806, %v3822
      %v5195 = vadd.f32 %v5194, %v3838
      %v5196 = vadd.f32 %v5195, %v3854
      %v5197 = vadd.f32 %v5196, %v3870
      %v5198 = vadd.f32 %v5197, %v3886
      %v5199 = vadd.f32 %v5198, %v3902
      %v5200 = vadd.f32 %v5199, %v3918
      %v5201 = vrot.slane %v5200, 4
      %v5202 = vadd.f32 %v5200, %v5201
      %v5203 = vrot.slane %v5202, 2
      %v5204 = vadd.f32 %v5202, %v5203
      %v5205 = vrot.slane %v5204, 1
      %v5206 = vadd.f32 %v5204, %v5205
      %v5207 = vadd.f32 %v3807, %v3823
      %v5208 = vadd.f32 %v5207, %v3839
      %v5209 = vadd.f32 %v5208, %v3855
      %v5210 = vadd.f32 %v5209, %v3871
      %v5211 = vadd.f32 %v5210, %v3887
      %v5212 = vadd.f32 %v5211, %v3903
      %v5213 = vadd.f32 %v5212, %v3919
      %v5214 = vrot.slane %v5213, 4
      %v5215 = vadd.f32 %v5213, %v5214
      %v5216 = vrot.slane %v5215, 2
      %v5217 = vadd.f32 %v5215, %v5216
      %v5218 = vrot.slane %v5217, 1
      %v5219 = vadd.f32 %v5217, %v5218
      %v5220 = vadd.f32 %v3808, %v3824
      %v5221 = vadd.f32 %v5220, %v3840
      %v5222 = vadd.f32 %v5221, %v3856
      %v5223 = vadd.f32 %v5222, %v3872
      %v5224 = vadd.f32 %v5223, %v3888
      %v5225 = vadd.f32 %v5224, %v3904
      %v5226 = vadd.f32 %v5225, %v3920
      %v5227 = vrot.slane %v5226, 4
      %v5228 = vadd.f32 %v5226, %v5227
      %v5229 = vrot.slane %v5228, 2
      %v5230 = vadd.f32 %v5228, %v5229
      %v5231 = vrot.slane %v5230, 1
      %v5232 = vadd.f32 %v5230, %v5231
      %v5233 = vadd.f32 %v3921, %v3937
      %v5234 = vadd.f32 %v5233, %v3953
      %v5235 = vadd.f32 %v5234, %v3969
      %v5236 = vadd.f32 %v5235, %v3985
      %v5237 = vadd.f32 %v5236, %v4001
      %v5238 = vadd.f32 %v5237, %v4017
      %v5239 = vadd.f32 %v5238, %v4033
      %v5240 = vrot.slane %v5239, 4
      %v5241 = vadd.f32 %v5239, %v5240
      %v5242 = vrot.slane %v5241, 2
      %v5243 = vadd.f32 %v5241, %v5242
      %v5244 = vrot.slane %v5243, 1
      %v5245 = vadd.f32 %v5243, %v5244
      %v5246 = vadd.f32 %v3922, %v3938
      %v5247 = vadd.f32 %v5246, %v3954
      %v5248 = vadd.f32 %v5247, %v3970
      %v5249 = vadd.f32 %v5248, %v3986
      %v5250 = vadd.f32 %v5249, %v4002
      %v5251 = vadd.f32 %v5250, %v4018
      %v5252 = vadd.f32 %v5251, %v4034
      %v5253 = vrot.slane %v5252, 4
      %v5254 = vadd.f32 %v5252, %v5253
      %v5255 = vrot.slane %v5254, 2
      %v5256 = vadd.f32 %v5254, %v5255
      %v5257 = vrot.slane %v5256, 1
      %v5258 = vadd.f32 %v5256, %v5257
      %v5259 = vadd.f32 %v3923, %v3939
      %v5260 = vadd.f32 %v5259, %v3955
      %v5261 = vadd.f32 %v5260, %v3971
      %v5262 = vadd.f32 %v5261, %v3987
      %v5263 = vadd.f32 %v5262, %v4003
      %v5264 = vadd.f32 %v5263, %v4019
      %v5265 = vadd.f32 %v5264, %v4035
      %v5266 = vrot.slane %v5265, 4
      %v5267 = vadd.f32 %v5265, %v5266
      %v5268 = vrot.slane %v5267, 2
      %v5269 = vadd.f32 %v5267, %v5268
      %v5270 = vrot.slane %v5269, 1
      %v5271 = vadd.f32 %v5269, %v5270
      %v5272 = vadd.f32 %v3924, %v3940
      %v5273 = vadd.f32 %v5272, %v3956
      %v5274 = vadd.f32 %v5273, %v3972
      %v5275 = vadd.f32 %v5274, %v3988
      %v5276 = vadd.f32 %v5275, %v4004
      %v5277 = vadd.f32 %v5276, %v4020
      %v5278 = vadd.f32 %v5277, %v4036
      %v5279 = vrot.slane %v5278, 4
      %v5280 = vadd.f32 %v5278, %v5279
      %v5281 = vrot.slane %v5280, 2
      %v5282 = vadd.f32 %v5280, %v5281
      %v5283 = vrot.slane %v5282, 1
      %v5284 = vadd.f32 %v5282, %v5283
      %v5285 = vadd.f32 %v3925, %v3941
      %v5286 = vadd.f32 %v5285, %v3957
      %v5287 = vadd.f32 %v5286, %v3973
      %v5288 = vadd.f32 %v5287, %v3989
      %v5289 = vadd.f32 %v5288, %v4005
      %v5290 = vadd.f32 %v5289, %v4021
      %v5291 = vadd.f32 %v5290, %v4037
      %v5292 = vrot.slane %v5291, 4
      %v5293 = vadd.f32 %v5291, %v5292
      %v5294 = vrot.slane %v5293, 2
      %v5295 = vadd.f32 %v5293, %v5294
      %v5296 = vrot.slane %v5295, 1
      %v5297 = vadd.f32 %v5295, %v5296
      %v5298 = vadd.f32 %v3926, %v3942
      %v5299 = vadd.f32 %v5298, %v3958
      %v5300 = vadd.f32 %v5299, %v3974
      %v5301 = vadd.f32 %v5300, %v3990
      %v5302 = vadd.f32 %v5301, %v4006
      %v5303 = vadd.f32 %v5302, %v4022
      %v5304 = vadd.f32 %v5303, %v4038
      %v5305 = vrot.slane %v5304, 4
      %v5306 = vadd.f32 %v5304, %v5305
      %v5307 = vrot.slane %v5306, 2
      %v5308 = vadd.f32 %v5306, %v5307
      %v5309 = vrot.slane %v5308, 1
      %v5310 = vadd.f32 %v5308, %v5309
      %v5311 = vadd.f32 %v3927, %v3943
      %v5312 = vadd.f32 %v5311, %v3959
      %v5313 = vadd.f32 %v5312, %v3975
      %v5314 = vadd.f32 %v5313, %v3991
      %v5315 = vadd.f32 %v5314, %v4007
      %v5316 = vadd.f32 %v5315, %v4023
      %v5317 = vadd.f32 %v5316, %v4039
      %v5318 = vrot.slane %v5317, 4
      %v5319 = vadd.f32 %v5317, %v5318
      %v5320 = vrot.slane %v5319, 2
      %v5321 = vadd.f32 %v5319, %v5320
      %v5322 = vrot.slane %v5321, 1
      %v5323 = vadd.f32 %v5321, %v5322
      %v5324 = vadd.f32 %v3928, %v3944
      %v5325 = vadd.f32 %v5324, %v3960
      %v5326 = vadd.f32 %v5325, %v3976
      %v5327 = vadd.f32 %v5326, %v3992
      %v5328 = vadd.f32 %v5327, %v4008
      %v5329 = vadd.f32 %v5328, %v4024
      %v5330 = vadd.f32 %v5329, %v4040
      %v5331 = vrot.slane %v5330, 4
      %v5332 = vadd.f32 %v5330, %v5331
      %v5333 = vrot.slane %v5332, 2
      %v5334 = vadd.f32 %v5332, %v5333
      %v5335 = vrot.slane %v5334, 1
      %v5336 = vadd.f32 %v5334, %v5335
      %v5337 = vadd.f32 %v3929, %v3945
      %v5338 = vadd.f32 %v5337, %v3961
      %v5339 = vadd.f32 %v5338, %v3977
      %v5340 = vadd.f32 %v5339, %v3993
      %v5341 = vadd.f32 %v5340, %v4009
      %v5342 = vadd.f32 %v5341, %v4025
      %v5343 = vadd.f32 %v5342, %v4041
      %v5344 = vrot.slane %v5343, 4
      %v5345 = vadd.f32 %v5343, %v5344
      %v5346 = vrot.slane %v5345, 2
      %v5347 = vadd.f32 %v5345, %v5346
      %v5348 = vrot.slane %v5347, 1
      %v5349 = vadd.f32 %v5347, %v5348
      %v5350 = vadd.f32 %v3930, %v3946
      %v5351 = vadd.f32 %v5350, %v3962
      %v5352 = vadd.f32 %v5351, %v3978
      %v5353 = vadd.f32 %v5352, %v3994
      %v5354 = vadd.f32 %v5353, %v4010
      %v5355 = vadd.f32 %v5354, %v4026
      %v5356 = vadd.f32 %v5355, %v4042
      %v5357 = vrot.slane %v5356, 4
      %v5358 = vadd.f32 %v5356, %v5357
      %v5359 = vrot.slane %v5358, 2
      %v5360 = vadd.f32 %v5358, %v5359
      %v5361 = vrot.slane %v5360, 1
      %v5362 = vadd.f32 %v5360, %v5361
      %v5363 = vadd.f32 %v3931, %v3947
      %v5364 = vadd.f32 %v5363, %v3963
      %v5365 = vadd.f32 %v5364, %v3979
      %v5366 = vadd.f32 %v5365, %v3995
      %v5367 = vadd.f32 %v5366, %v4011
      %v5368 = vadd.f32 %v5367, %v4027
      %v5369 = vadd.f32 %v5368, %v4043
      %v5370 = vrot.slane %v5369, 4
      %v5371 = vadd.f32 %v5369, %v5370
      %v5372 = vrot.slane %v5371, 2
      %v5373 = vadd.f32 %v5371, %v5372
      %v5374 = vrot.slane %v5373, 1
      %v5375 = vadd.f32 %v5373, %v5374
      %v5376 = vadd.f32 %v3932, %v3948
      %v5377 = vadd.f32 %v5376, %v3964
      %v5378 = vadd.f32 %v5377, %v3980
      %v5379 = vadd.f32 %v5378, %v3996
      %v5380 = vadd.f32 %v5379, %v4012
      %v5381 = vadd.f32 %v5380, %v4028
      %v5382 = vadd.f32 %v5381, %v4044
      %v5383 = vrot.slane %v5382, 4
      %v5384 = vadd.f32 %v5382, %v5383
      %v5385 = vrot.slane %v5384, 2
      %v5386 = vadd.f32 %v5384, %v5385
      %v5387 = vrot.slane %v5386, 1
      %v5388 = vadd.f32 %v5386, %v5387
      %v5389 = vadd.f32 %v3933, %v3949
      %v5390 = vadd.f32 %v5389, %v3965
      %v5391 = vadd.f32 %v5390, %v3981
      %v5392 = vadd.f32 %v5391, %v3997
      %v5393 = vadd.f32 %v5392, %v4013
      %v5394 = vadd.f32 %v5393, %v4029
      %v5395 = vadd.f32 %v5394, %v4045
      %v5396 = vrot.slane %v5395, 4
      %v5397 = vadd.f32 %v5395, %v5396
      %v5398 = vrot.slane %v5397, 2
      %v5399 = vadd.f32 %v5397, %v5398
      %v5400 = vrot.slane %v5399, 1
      %v5401 = vadd.f32 %v5399, %v5400
      %v5402 = vadd.f32 %v3934, %v3950
      %v5403 = vadd.f32 %v5402, %v3966
      %v5404 = vadd.f32 %v5403, %v3982
      %v5405 = vadd.f32 %v5404, %v3998
      %v5406 = vadd.f32 %v5405, %v4014
      %v5407 = vadd.f32 %v5406, %v4030
      %v5408 = vadd.f32 %v5407, %v4046
      %v5409 = vrot.slane %v5408, 4
      %v5410 = vadd.f32 %v5408, %v5409
      %v5411 = vrot.slane %v5410, 2
      %v5412 = vadd.f32 %v5410, %v5411
      %v5413 = vrot.slane %v5412, 1
      %v5414 = vadd.f32 %v5412, %v5413
      %v5415 = vadd.f32 %v3935, %v3951
      %v5416 = vadd.f32 %v5415, %v3967
      %v5417 = vadd.f32 %v5416, %v3983
      %v5418 = vadd.f32 %v5417, %v3999
      %v5419 = vadd.f32 %v5418, %v4015
      %v5420 = vadd.f32 %v5419, %v4031
      %v5421 = vadd.f32 %v5420, %v4047
      %v5422 = vrot.slane %v5421, 4
      %v5423 = vadd.f32 %v5421, %v5422
      %v5424 = vrot.slane %v5423, 2
      %v5425 = vadd.f32 %v5423, %v5424
      %v5426 = vrot.slane %v5425, 1
      %v5427 = vadd.f32 %v5425, %v5426
      %v5428 = vadd.f32 %v3936, %v3952
      %v5429 = vadd.f32 %v5428, %v3968
      %v5430 = vadd.f32 %v5429, %v3984
      %v5431 = vadd.f32 %v5430, %v4000
      %v5432 = vadd.f32 %v5431, %v4016
      %v5433 = vadd.f32 %v5432, %v4032
      %v5434 = vadd.f32 %v5433, %v4048
      %v5435 = vrot.slane %v5434, 4
      %v5436 = vadd.f32 %v5434, %v5435
      %v5437 = vrot.slane %v5436, 2
      %v5438 = vadd.f32 %v5436, %v5437
      %v5439 = vrot.slane %v5438, 1
      %v5440 = vadd.f32 %v5438, %v5439
      %v5441 = vadd.f32 %v4049, %v4065
      %v5442 = vadd.f32 %v5441, %v4081
      %v5443 = vadd.f32 %v5442, %v4097
      %v5444 = vadd.f32 %v5443, %v4113
      %v5445 = vadd.f32 %v5444, %v4129
      %v5446 = vadd.f32 %v5445, %v4145
      %v5447 = vadd.f32 %v5446, %v4161
      %v5448 = vrot.slane %v5447, 4
      %v5449 = vadd.f32 %v5447, %v5448
      %v5450 = vrot.slane %v5449, 2
      %v5451 = vadd.f32 %v5449, %v5450
      %v5452 = vrot.slane %v5451, 1
      %v5453 = vadd.f32 %v5451, %v5452
      %v5454 = vadd.f32 %v4050, %v4066
      %v5455 = vadd.f32 %v5454, %v4082
      %v5456 = vadd.f32 %v5455, %v4098
      %v5457 = vadd.f32 %v5456, %v4114
      %v5458 = vadd.f32 %v5457, %v4130
      %v5459 = vadd.f32 %v5458, %v4146
      %v5460 = vadd.f32 %v5459, %v4162
      %v5461 = vrot.slane %v5460, 4
      %v5462 = vadd.f32 %v5460, %v5461
      %v5463 = vrot.slane %v5462, 2
      %v5464 = vadd.f32 %v5462, %v5463
      %v5465 = vrot.slane %v5464, 1
      %v5466 = vadd.f32 %v5464, %v5465
      %v5467 = vadd.f32 %v4051, %v4067
      %v5468 = vadd.f32 %v5467, %v4083
      %v5469 = vadd.f32 %v5468, %v4099
      %v5470 = vadd.f32 %v5469, %v4115
      %v5471 = vadd.f32 %v5470, %v4131
      %v5472 = vadd.f32 %v5471, %v4147
      %v5473 = vadd.f32 %v5472, %v4163
      %v5474 = vrot.slane %v5473, 4
      %v5475 = vadd.f32 %v5473, %v5474
      %v5476 = vrot.slane %v5475, 2
      %v5477 = vadd.f32 %v5475, %v5476
      %v5478 = vrot.slane %v5477, 1
      %v5479 = vadd.f32 %v5477, %v5478
      %v5480 = vadd.f32 %v4052, %v4068
      %v5481 = vadd.f32 %v5480, %v4084
      %v5482 = vadd.f32 %v5481, %v4100
      %v5483 = vadd.f32 %v5482, %v4116
      %v5484 = vadd.f32 %v5483, %v4132
      %v5485 = vadd.f32 %v5484, %v4148
      %v5486 = vadd.f32 %v5485, %v4164
      %v5487 = vrot.slane %v5486, 4
      %v5488 = vadd.f32 %v5486, %v5487
      %v5489 = vrot.slane %v5488, 2
      %v5490 = vadd.f32 %v5488, %v5489
      %v5491 = vrot.slane %v5490, 1
      %v5492 = vadd.f32 %v5490, %v5491
      %v5493 = vadd.f32 %v4053, %v4069
      %v5494 = vadd.f32 %v5493, %v4085
      %v5495 = vadd.f32 %v5494, %v4101
      %v5496 = vadd.f32 %v5495, %v4117
      %v5497 = vadd.f32 %v5496, %v4133
      %v5498 = vadd.f32 %v5497, %v4149
      %v5499 = vadd.f32 %v5498, %v4165
      %v5500 = vrot.slane %v5499, 4
      %v5501 = vadd.f32 %v5499, %v5500
      %v5502 = vrot.slane %v5501, 2
      %v5503 = vadd.f32 %v5501, %v5502
      %v5504 = vrot.slane %v5503, 1
      %v5505 = vadd.f32 %v5503, %v5504
      %v5506 = vadd.f32 %v4054, %v4070
      %v5507 = vadd.f32 %v5506, %v4086
      %v5508 = vadd.f32 %v5507, %v4102
      %v5509 = vadd.f32 %v5508, %v4118
      %v5510 = vadd.f32 %v5509, %v4134
      %v5511 = vadd.f32 %v5510, %v4150
      %v5512 = vadd.f32 %v5511, %v4166
      %v5513 = vrot.slane %v5512, 4
      %v5514 = vadd.f32 %v5512, %v5513
      %v5515 = vrot.slane %v5514, 2
      %v5516 = vadd.f32 %v5514, %v5515
      %v5517 = vrot.slane %v5516, 1
      %v5518 = vadd.f32 %v5516, %v5517
      %v5519 = vadd.f32 %v4055, %v4071
      %v5520 = vadd.f32 %v5519, %v4087
      %v5521 = vadd.f32 %v5520, %v4103
      %v5522 = vadd.f32 %v5521, %v4119
      %v5523 = vadd.f32 %v5522, %v4135
      %v5524 = vadd.f32 %v5523, %v4151
      %v5525 = vadd.f32 %v5524, %v4167
      %v5526 = vrot.slane %v5525, 4
      %v5527 = vadd.f32 %v5525, %v5526
      %v5528 = vrot.slane %v5527, 2
      %v5529 = vadd.f32 %v5527, %v5528
      %v5530 = vrot.slane %v5529, 1
      %v5531 = vadd.f32 %v5529, %v5530
      %v5532 = vadd.f32 %v4056, %v4072
      %v5533 = vadd.f32 %v5532, %v4088
      %v5534 = vadd.f32 %v5533, %v4104
      %v5535 = vadd.f32 %v5534, %v4120
      %v5536 = vadd.f32 %v5535, %v4136
      %v5537 = vadd.f32 %v5536, %v4152
      %v5538 = vadd.f32 %v5537, %v4168
      %v5539 = vrot.slane %v5538, 4
      %v5540 = vadd.f32 %v5538, %v5539
      %v5541 = vrot.slane %v5540, 2
      %v5542 = vadd.f32 %v5540, %v5541
      %v5543 = vrot.slane %v5542, 1
      %v5544 = vadd.f32 %v5542, %v5543
      %v5545 = vadd.f32 %v4057, %v4073
      %v5546 = vadd.f32 %v5545, %v4089
      %v5547 = vadd.f32 %v5546, %v4105
      %v5548 = vadd.f32 %v5547, %v4121
      %v5549 = vadd.f32 %v5548, %v4137
      %v5550 = vadd.f32 %v5549, %v4153
      %v5551 = vadd.f32 %v5550, %v4169
      %v5552 = vrot.slane %v5551, 4
      %v5553 = vadd.f32 %v5551, %v5552
      %v5554 = vrot.slane %v5553, 2
      %v5555 = vadd.f32 %v5553, %v5554
      %v5556 = vrot.slane %v5555, 1
      %v5557 = vadd.f32 %v5555, %v5556
      %v5558 = vadd.f32 %v4058, %v4074
      %v5559 = vadd.f32 %v5558, %v4090
      %v5560 = vadd.f32 %v5559, %v4106
      %v5561 = vadd.f32 %v5560, %v4122
      %v5562 = vadd.f32 %v5561, %v4138
      %v5563 = vadd.f32 %v5562, %v4154
      %v5564 = vadd.f32 %v5563, %v4170
      %v5565 = vrot.slane %v5564, 4
      %v5566 = vadd.f32 %v5564, %v5565
      %v5567 = vrot.slane %v5566, 2
      %v5568 = vadd.f32 %v5566, %v5567
      %v5569 = vrot.slane %v5568, 1
      %v5570 = vadd.f32 %v5568, %v5569
      %v5571 = vadd.f32 %v4059, %v4075
      %v5572 = vadd.f32 %v5571, %v4091
      %v5573 = vadd.f32 %v5572, %v4107
      %v5574 = vadd.f32 %v5573, %v4123
      %v5575 = vadd.f32 %v5574, %v4139
      %v5576 = vadd.f32 %v5575, %v4155
      %v5577 = vadd.f32 %v5576, %v4171
      %v5578 = vrot.slane %v5577, 4
      %v5579 = vadd.f32 %v5577, %v5578
      %v5580 = vrot.slane %v5579, 2
      %v5581 = vadd.f32 %v5579, %v5580
      %v5582 = vrot.slane %v5581, 1
      %v5583 = vadd.f32 %v5581, %v5582
      %v5584 = vadd.f32 %v4060, %v4076
      %v5585 = vadd.f32 %v5584, %v4092
      %v5586 = vadd.f32 %v5585, %v4108
      %v5587 = vadd.f32 %v5586, %v4124
      %v5588 = vadd.f32 %v5587, %v4140
      %v5589 = vadd.f32 %v5588, %v4156
      %v5590 = vadd.f32 %v5589, %v4172
      %v5591 = vrot.slane %v5590, 4
      %v5592 = vadd.f32 %v5590, %v5591
      %v5593 = vrot.slane %v5592, 2
      %v5594 = vadd.f32 %v5592, %v5593
      %v5595 = vrot.slane %v5594, 1
      %v5596 = vadd.f32 %v5594, %v5595
      %v5597 = vadd.f32 %v4061, %v4077
      %v5598 = vadd.f32 %v5597, %v4093
      %v5599 = vadd.f32 %v5598, %v4109
      %v5600 = vadd.f32 %v5599, %v4125
      %v5601 = vadd.f32 %v5600, %v4141
      %v5602 = vadd.f32 %v5601, %v4157
      %v5603 = vadd.f32 %v5602, %v4173
      %v5604 = vrot.slane %v5603, 4
      %v5605 = vadd.f32 %v5603, %v5604
      %v5606 = vrot.slane %v5605, 2
      %v5607 = vadd.f32 %v5605, %v5606
      %v5608 = vrot.slane %v5607, 1
      %v5609 = vadd.f32 %v5607, %v5608
      %v5610 = vadd.f32 %v4062, %v4078
      %v5611 = vadd.f32 %v5610, %v4094
      %v5612 = vadd.f32 %v5611, %v4110
      %v5613 = vadd.f32 %v5612, %v4126
      %v5614 = vadd.f32 %v5613, %v4142
      %v5615 = vadd.f32 %v5614, %v4158
      %v5616 = vadd.f32 %v5615, %v4174
      %v5617 = vrot.slane %v5616, 4
      %v5618 = vadd.f32 %v5616, %v5617
      %v5619 = vrot.slane %v5618, 2
      %v5620 = vadd.f32 %v5618, %v5619
      %v5621 = vrot.slane %v5620, 1
      %v5622 = vadd.f32 %v5620, %v5621
      %v5623 = vadd.f32 %v4063, %v4079
      %v5624 = vadd.f32 %v5623, %v4095
      %v5625 = vadd.f32 %v5624, %v4111
      %v5626 = vadd.f32 %v5625, %v4127
      %v5627 = vadd.f32 %v5626, %v4143
      %v5628 = vadd.f32 %v5627, %v4159
      %v5629 = vadd.f32 %v5628, %v4175
      %v5630 = vrot.slane %v5629, 4
      %v5631 = vadd.f32 %v5629, %v5630
      %v5632 = vrot.slane %v5631, 2
      %v5633 = vadd.f32 %v5631, %v5632
      %v5634 = vrot.slane %v5633, 1
      %v5635 = vadd.f32 %v5633, %v5634
      %v5636 = vadd.f32 %v4064, %v4080
      %v5637 = vadd.f32 %v5636, %v4096
      %v5638 = vadd.f32 %v5637, %v4112
      %v5639 = vadd.f32 %v5638, %v4128
      %v5640 = vadd.f32 %v5639, %v4144
      %v5641 = vadd.f32 %v5640, %v4160
      %v5642 = vadd.f32 %v5641, %v4176
      %v5643 = vrot.slane %v5642, 4
      %v5644 = vadd.f32 %v5642, %v5643
      %v5645 = vrot.slane %v5644, 2
      %v5646 = vadd.f32 %v5644, %v5645
      %v5647 = vrot.slane %v5646, 1
      %v5648 = vadd.f32 %v5646, %v5647
      %vm5761 = vcmask 1041409
      %v5762 = vsel %vm5761, %v4413, %v4205
      %vm5763 = vcmask 1042434
      %v5764 = vsel %vm5763, %v4621, %v5762
      %vm5765 = vcmask 1043459
      %v5766 = vsel %vm5765, %v4829, %v5764
      %vm5767 = vcmask 1044484
      %v5768 = vsel %vm5767, %v5037, %v5766
      %vm5769 = vcmask 1045509
      %v5770 = vsel %vm5769, %v5245, %v5768
      %vm5771 = vcmask 1046534
      %v5772 = vsel %vm5771, %v5453, %v5770
      %v5773 = vsel %vm5761, %v4426, %v4218
      %v5774 = vsel %vm5763, %v4634, %v5773
      %v5775 = vsel %vm5765, %v4842, %v5774
      %v5776 = vsel %vm5767, %v5050, %v5775
      %v5777 = vsel %vm5769, %v5258, %v5776
      %v5778 = vsel %vm5771, %v5466, %v5777
      %v5779 = vsel %vm5761, %v4439, %v4231
      %v5780 = vsel %vm5763, %v4647, %v5779
      %v5781 = vsel %vm5765, %v4855, %v5780
      %v5782 = vsel %vm5767, %v5063, %v5781
      %v5783 = vsel %vm5769, %v5271, %v5782
      %v5784 = vsel %vm5771, %v5479, %v5783
      %v5785 = vsel %vm5761, %v4452, %v4244
      %v5786 = vsel %vm5763, %v4660, %v5785
      %v5787 = vsel %vm5765, %v4868, %v5786
      %v5788 = vsel %vm5767, %v5076, %v5787
      %v5789 = vsel %vm5769, %v5284, %v5788
      %v5790 = vsel %vm5771, %v5492, %v5789
      %v5791 = vsel %vm5761, %v4465, %v4257
      %v5792 = vsel %vm5763, %v4673, %v5791
      %v5793 = vsel %vm5765, %v4881, %v5792
      %v5794 = vsel %vm5767, %v5089, %v5793
      %v5795 = vsel %vm5769, %v5297, %v5794
      %v5796 = vsel %vm5771, %v5505, %v5795
      %v5797 = vsel %vm5761, %v4478, %v4270
      %v5798 = vsel %vm5763, %v4686, %v5797
      %v5799 = vsel %vm5765, %v4894, %v5798
      %v5800 = vsel %vm5767, %v5102, %v5799
      %v5801 = vsel %vm5769, %v5310, %v5800
      %v5802 = vsel %vm5771, %v5518, %v5801
      %v5803 = vsel %vm5761, %v4491, %v4283
      %v5804 = vsel %vm5763, %v4699, %v5803
      %v5805 = vsel %vm5765, %v4907, %v5804
      %v5806 = vsel %vm5767, %v5115, %v5805
      %v5807 = vsel %vm5769, %v5323, %v5806
      %v5808 = vsel %vm5771, %v5531, %v5807
      %v5809 = vsel %vm5761, %v4504, %v4296
      %v5810 = vsel %vm5763, %v4712, %v5809
      %v5811 = vsel %vm5765, %v4920, %v5810
      %v5812 = vsel %vm5767, %v5128, %v5811
      %v5813 = vsel %vm5769, %v5336, %v5812
      %v5814 = vsel %vm5771, %v5544, %v5813
      %v5815 = vsel %vm5761, %v4517, %v4309
      %v5816 = vsel %vm5763, %v4725, %v5815
      %v5817 = vsel %vm5765, %v4933, %v5816
      %v5818 = vsel %vm5767, %v5141, %v5817
      %v5819 = vsel %vm5769, %v5349, %v5818
      %v5820 = vsel %vm5771, %v5557, %v5819
      %v5821 = vsel %vm5761, %v4530, %v4322
      %v5822 = vsel %vm5763, %v4738, %v5821
      %v5823 = vsel %vm5765, %v4946, %v5822
      %v5824 = vsel %vm5767, %v5154, %v5823
      %v5825 = vsel %vm5769, %v5362, %v5824
      %v5826 = vsel %vm5771, %v5570, %v5825
      %v5827 = vsel %vm5761, %v4543, %v4335
      %v5828 = vsel %vm5763, %v4751, %v5827
      %v5829 = vsel %vm5765, %v4959, %v5828
      %v5830 = vsel %vm5767, %v5167, %v5829
      %v5831 = vsel %vm5769, %v5375, %v5830
      %v5832 = vsel %vm5771, %v5583, %v5831
      %v5833 = vsel %vm5761, %v4556, %v4348
      %v5834 = vsel %vm5763, %v4764, %v5833
      %v5835 = vsel %vm5765, %v4972, %v5834
      %v5836 = vsel %vm5767, %v5180, %v5835
      %v5837 = vsel %vm5769, %v5388, %v5836
      %v5838 = vsel %vm5771, %v5596, %v5837
      %v5839 = vsel %vm5761, %v4569, %v4361
      %v5840 = vsel %vm5763, %v4777, %v5839
      %v5841 = vsel %vm5765, %v4985, %v5840
      %v5842 = vsel %vm5767, %v5193, %v5841
      %v5843 = vsel %vm5769, %v5401, %v5842
      %v5844 = vsel %vm5771, %v5609, %v5843
      %v5845 = vsel %vm5761, %v4582, %v4374
      %v5846 = vsel %vm5763, %v4790, %v5845
      %v5847 = vsel %vm5765, %v4998, %v5846
      %v5848 = vsel %vm5767, %v5206, %v5847
      %v5849 = vsel %vm5769, %v5414, %v5848
      %v5850 = vsel %vm5771, %v5622, %v5849
      %v5851 = vsel %vm5761, %v4595, %v4387
      %v5852 = vsel %vm5763, %v4803, %v5851
      %v5853 = vsel %vm5765, %v5011, %v5852
      %v5854 = vsel %vm5767, %v5219, %v5853
      %v5855 = vsel %vm5769, %v5427, %v5854
      %v5856 = vsel %vm5771, %v5635, %v5855
      %v5857 = vsel %vm5761, %v4608, %v4400
      %v5858 = vsel %vm5763, %v4816, %v5857
      %v5859 = vsel %vm5765, %v5024, %v5858
      %v5860 = vsel %vm5767, %v5232, %v5859
      %v5861 = vsel %vm5769, %v5440, %v5860
      %v5862 = vsel %vm5771, %v5648, %v5861
      %v5879 = vadd.f32 %v4177, %v5772
      %v5880 = vadd.f32 %v4178, %v5778
      %v5881 = vadd.f32 %v4179, %v5784
      %v5882 = vadd.f32 %v4180, %v5790
      %v5883 = vadd.f32 %v4181, %v5796
      %v5884 = vadd.f32 %v4182, %v5802
      %v5885 = vadd.f32 %v4183, %v5808
      %v5886 = vadd.f32 %v4184, %v5814
      %v5887 = vadd.f32 %v4185, %v5820
      %v5888 = vadd.f32 %v4186, %v5826
      %v5889 = vadd.f32 %v4187, %v5832
      %v5890 = vadd.f32 %v4188, %v5838
      %v5891 = vadd.f32 %v4189, %v5844
      %v5892 = vadd.f32 %v4190, %v5850
      %v5893 = vadd.f32 %v4191, %v5856
      %v5894 = vadd.f32 %v4192, %v5862
      %5895 = vst [vmem:[#allocation2] sm:$0x7f] %v5879
      %5896 = vst [vmem:[#allocation2 + $0x8] sm:$0x7f] %v5880
      %5897 = vst [vmem:[#allocation2 + $0x10] sm:$0x7f] %v5881
      %5898 = vst [vmem:[#allocation2 + $0x18] sm:$0x7f] %v5882
      %5899 = vst [vmem:[#allocation2 + $0x20] sm:$0x7f] %v5883
      %5900 = vst [vmem:[#allocation2 + $0x28] sm:$0x7f] %v5884
      %5901 = vst [vmem:[#allocation2 + $0x30] sm:$0x7f] %v5885
      %5902 = vst [vmem:[#allocation2 + $0x38] sm:$0x7f] %v5886
      %5903 = vst [vmem:[#allocation2 + $0x40] sm:$0x7f] %v5887
      %5904 = vst [vmem:[#allocation2 + $0x48] sm:$0x7f] %v5888
      %5905 = vst [vmem:[#allocation2 + $0x50] sm:$0x7f] %v5889
      %5906 = vst [vmem:[#allocation2 + $0x58] sm:$0x7f] %v5890
      %5907 = vst [vmem:[#allocation2 + $0x60] sm:$0x7f] %v5891
      %5908 = vst [vmem:[#allocation2 + $0x68] sm:$0x7f] %v5892
      %5909 = vst [vmem:[#allocation2 + $0x70] sm:$0x7f] %v5893
      %5910 = vst [vmem:[#allocation2 + $0x78] sm:$0x7f] %v5894
      // Predicated region
      $region37: #{tpu_custom_call.1} parent=31 // pred_check
        %p5911 = pneg %p200
      $region38: #{tpu_custom_call.1} parent=31 // pred_check_branch
        %5913 = sbr.rel (%p5911) target = $region40
      $region39: #{tpu_custom_call.1} parent=31 // pred_region
        %v5914 = vld [vmem:[#allocation2] sm:$0x7f]
        %v5915 = vld [vmem:[#allocation2 + $0x8] sm:$0x7f]
        %v5916 = vld [vmem:[#allocation2 + $0x10] sm:$0x7f]
        %v5917 = vld [vmem:[#allocation2 + $0x18] sm:$0x7f]
        %v5918 = vld [vmem:[#allocation2 + $0x20] sm:$0x7f]
        %v5919 = vld [vmem:[#allocation2 + $0x28] sm:$0x7f]
        %v5920 = vld [vmem:[#allocation2 + $0x30] sm:$0x7f]
        %v5921 = vld [vmem:[#allocation2 + $0x38] sm:$0x7f]
        %v5922 = vld [vmem:[#allocation2 + $0x40] sm:$0x7f]
        %v5923 = vld [vmem:[#allocation2 + $0x48] sm:$0x7f]
        %v5924 = vld [vmem:[#allocation2 + $0x50] sm:$0x7f]
        %v5925 = vld [vmem:[#allocation2 + $0x58] sm:$0x7f]
        %v5926 = vld [vmem:[#allocation2 + $0x60] sm:$0x7f]
        %v5927 = vld [vmem:[#allocation2 + $0x68] sm:$0x7f]
        %v5928 = vld [vmem:[#allocation2 + $0x70] sm:$0x7f]
        %v5929 = vld [vmem:[#allocation2 + $0x78] sm:$0x7f]
        %v5930 = vmul.f32 %v5914, 0.015625
        %v5931 = vmul.f32 %v5915, 0.015625
        %v5932 = vmul.f32 %v5916, 0.015625
        %v5933 = vmul.f32 %v5917, 0.015625
        %v5934 = vmul.f32 %v5918, 0.015625
        %v5935 = vmul.f32 %v5919, 0.015625
        %v5936 = vmul.f32 %v5920, 0.015625
        %v5937 = vmul.f32 %v5921, 0.015625
        %v5938 = vmul.f32 %v5922, 0.015625
        %v5939 = vmul.f32 %v5923, 0.015625
        %v5940 = vmul.f32 %v5924, 0.015625
        %v5941 = vmul.f32 %v5925, 0.015625
        %v5942 = vmul.f32 %v5926, 0.015625
        %v5943 = vmul.f32 %v5927, 0.015625
        %v5944 = vmul.f32 %v5928, 0.015625
        %v5945 = vmul.f32 %v5929, 0.015625
        %5946 = vst [vmem:[%s198] sm:$0x7f] %v5930
        %5947 = vst [vmem:[%s198 + $0x8] sm:$0x7f] %v5931
        %5948 = vst [vmem:[%s198 + $0x10] sm:$0x7f] %v5932
        %5949 = vst [vmem:[%s198 + $0x18] sm:$0x7f] %v5933
        %5950 = vst [vmem:[%s198 + $0x20] sm:$0x7f] %v5934
        %5951 = vst [vmem:[%s198 + $0x28] sm:$0x7f] %v5935
        %5952 = vst [vmem:[%s198 + $0x30] sm:$0x7f] %v5936
        %5953 = vst [vmem:[%s198 + $0x38] sm:$0x7f] %v5937
        %5954 = vst [vmem:[%s198 + $0x40] sm:$0x7f] %v5938
        %5955 = vst [vmem:[%s198 + $0x48] sm:$0x7f] %v5939
        %5956 = vst [vmem:[%s198 + $0x50] sm:$0x7f] %v5940
        %5957 = vst [vmem:[%s198 + $0x58] sm:$0x7f] %v5941
        %5958 = vst [vmem:[%s198 + $0x60] sm:$0x7f] %v5942
        %5959 = vst [vmem:[%s198 + $0x68] sm:$0x7f] %v5943
        %5960 = vst [vmem:[%s198 + $0x70] sm:$0x7f] %v5944
        %5961 = vst [vmem:[%s198 + $0x78] sm:$0x7f] %v5945
      $region40: #{tpu_custom_call.1} parent=31 // pred_fallthru
        _
      %p5962 = scmp.lt.s32.totalorder %s18, 1
      %s5963 = scalar_select %p5962, %s18, 1
      %s5964 = smul.addr %s5963, 16
      %s5965 = smul.addr %s5964, 8
      %s5966 = scalar_lea.vmem %s3, %s5965
      // Predicated region
      $region41: #{tpu_custom_call.1} parent=31 // pred_check
        %p5967 = pneg %p114
      $region42: #{tpu_custom_call.1} parent=31 // pred_check_branch
        %5969 = sbr.rel (%p5967) target = $region44
      $region43: #{tpu_custom_call.1} parent=31 // pred_region
        _
      $region44: #{tpu_custom_call.1} parent=31 // pred_fallthru
        _
    $region32: #{tpu_custom_call.1} parent=5 // pred_fallthru
      _
    %p5970 = scmp.le.s32.totalorder 2, %s9
    // Predicated region
    $region45: #{tpu_custom_call.1} parent=5 // pred_check
      %p5971 = pneg %p5970
    $region46: #{tpu_custom_call.1} parent=5 // pred_check_branch
      %5973 = sbr.rel (%p5971) target = $region48
    $region47: #{tpu_custom_call.1} parent=5 // pred_region
      %s5974 = ssub.s32 %s9, 2
      // Predicated region
      $region49: #{tpu_custom_call.1} parent=47 // pred_check
        %p5975 = pneg %p120
      $region50: #{tpu_custom_call.1} parent=47 // pred_check_branch
        %5977 = sbr.rel (%p5975) target = $region52
      $region51: #{tpu_custom_call.1} parent=47 // pred_region
        %p5978 = scmp.lt.s32.totalorder %s20, 1
        %s5979 = scalar_select %p5978, %s20, 1
        %s5980 = smul.addr %s5979, 16
        %s5981 = smul.addr %s5980, 8
        %s5982 = scalar_lea.vmem %s3, %s5981
      $region52: #{tpu_custom_call.1} parent=47 // pred_fallthru
        _
    $region48: #{tpu_custom_call.1} parent=5 // pred_fallthru
      _
  $region6: #{tpu_custom_call.1} parent=0 // loop_footer
    %s13 = sadd.s32 1, %s9
  $region7: #{tpu_custom_call.1} parent=0 // loop_footer_branch
    %8 = sbr.rel target = $region3
  $region8: #{tpu_custom_call.1} parent=0 // loop_exit
    _

</llo_original>
